<compile_context>
chip_gen: v7x
topology: tpu7x:2x2x1
jax: 0.10.0
libtpu: 0.0.40
codegen_flags: <defaults>
</compile_context>

<pallas_src>
import functools
import math

import jax
import jax.numpy as jnp
from jax.experimental import pallas as pl


LAYER_KEYS = ("wqkv", "bqkv", "wo", "bo", "ln1_g", "ln1_b",
              "w1", "b1", "w2", "b2", "ln2_g", "ln2_b")
N_LAYER_TENSORS = len(LAYER_KEYS)
BF16_WEIGHT_KEYS = ("wqkv", "wo", "w1", "w2")


# ------------------------------ fused kernel --------------------------------


def fused_csi_kernel(tok_ref, emb_ref, pe_ref, mask_ref, spread_ref, ones_ref,
                     *rest, B, S, D, H, N, V, eps, levels, use_quantizer):
    """Whole autoencoder forward, batch folded into the sublane dimension.

    tok_ref    : [B*S, 1]     int32 token ids (VMEM)
    emb_ref    : [V, D]       embedding table (f32)
    pe_ref     : [B*S, D]     positional encoding tiled per batch element (f32)
    mask_ref   : [B*S, H*B*S] 0 / -1e30 cross-batch attention mask (f32)
    spread_ref : [H*B*S, D]   0/1 head block-diagonal spread mask (f32)
    ones_ref   : [H*B*S, H*B*S] 0/1 per-head-block ones (softmax denom) (f32)
    rest       : 12 stacked encoder tensors, wc/bc/wd/bd, 12 stacked decoder
                 tensors, wout/bout, then the [B*S, V] output ref.
    """
    enc = rest[0:N_LAYER_TENSORS]
    wc_ref, bc_ref, wd_ref, bd_ref = rest[N_LAYER_TENSORS:N_LAYER_TENSORS + 4]
    dec = rest[N_LAYER_TENSORS + 4:2 * N_LAYER_TENSORS + 4]
    wout_ref, bout_ref = rest[2 * N_LAYER_TENSORS + 4:2 * N_LAYER_TENSORS + 6]
    o_ref = rest[2 * N_LAYER_TENSORS + 6]

    BS = B * S
    Dh = D // H
    scale = 1.0 / math.sqrt(Dh)
    bf = jnp.bfloat16
    f32 = jnp.float32

    pe = pe_ref[...]                      # (BS, D)
    amask = mask_ref[...]                 # (BS, H*BS)
    spread = spread_ref[...]              # (H*BS, D)
    ones_bd = ones_ref[...]               # (H*BS, H*BS)

    def add_ln(x, y, g, be):
        z = x + y
        mu = jnp.mean(z, axis=-1, keepdims=True)
        var = jnp.mean((z - mu) * (z - mu), axis=-1, keepdims=True)
        return (z - mu) * jax.lax.rsqrt(var + eps) * g + be

    def encoder_layer(x, refs, l):
        wqkv, bqkv = refs[0][l], refs[1][l]
        wo, bo = refs[2][l], refs[3][l]
        g1, be1 = refs[4][l], refs[5][l]
        w1, b1 = refs[6][l], refs[7][l]
        w2, b2 = refs[8][l], refs[9][l]
        g2, be2 = refs[10][l], refs[11][l]

        # fused QKV projection: one MXU pass, bf16 operands, f32 accumulate
        qkv = jnp.dot(x.astype(bf), wqkv, preferred_element_type=f32) + bqkv  # (BS, 3D)
        q = qkv[:, 0:D]
        k = qkv[:, D:2 * D]
        v = qkv[:, 2 * D:3 * D]

        # Block-diagonal K / V: head h occupies rows h*BS:(h+1)*BS and columns
        # h*Dh:(h+1)*Dh.  All heads' attention then runs as 3 lane-packed
        # matmuls instead of 3*H tiny 8-lane ones.
        k_bd = (jnp.concatenate([k] * H, axis=0) * spread).astype(bf)   # (H*BS, D)
        v_bd = (jnp.concatenate([v] * H, axis=0) * spread).astype(bf)   # (H*BS, D)

        # all-head scores: (BS, H*BS); cross-batch pairs masked with -1e30
        s = jax.lax.dot_general(q.astype(bf), k_bd, (((1,), (1,)), ((), ())),
                                preferred_element_type=f32) * scale + amask
        m = jnp.max(s, axis=-1, keepdims=True)          # global row max (valid for softmax)
        e = jnp.exp(s - m)                              # masked entries underflow to 0
        # per-head-block denominators broadcast across the block (f32 matmul)
        denom = jnp.dot(e, ones_bd, preferred_element_type=f32)
        p = e * pl.reciprocal(denom, approx=True)
        # AV for all heads; result already has heads concatenated along D
        out_all = jnp.dot(p.astype(bf), v_bd, preferred_element_type=f32)    # (BS, D)
        attn = jnp.dot(out_all.astype(bf), wo, preferred_element_type=f32) + bo

        h1 = add_ln(x, attn, g1, be1)                   # residual + post-LN 1 (f32)
        f = jnp.maximum(jnp.dot(h1.astype(bf), w1, preferred_element_type=f32) + b1, 0.0)
        f = jnp.dot(f.astype(bf), w2, preferred_element_type=f32) + b2
        return add_ln(h1, f, g2, be2)                   # residual + post-LN 2

    # ---- UeSideCompressor: embedding gather (one-hot MXU matmul) + PE ------
    ids = tok_ref[...]                                                  # (BS, 1) int32
    onehot = (jax.lax.broadcasted_iota(jnp.int32, (BS, V), 1) == ids).astype(f32)
    x = jnp.dot(onehot, emb_ref[...], preferred_element_type=f32)       # exact gather
    x = x * math.sqrt(D) + pe
    # TODO(synk): UeSideCompressor source not provided — key-padding mask for
    # pad_idx tokens inside attention is omitted (inputs here contain no pads).

    for l in range(N):
        x = encoder_layer(x, enc, l)

    codes = jnp.dot(x.astype(bf), wc_ref[...], preferred_element_type=f32) + bc_ref[...]
    if use_quantizer:
        sgm = jax.nn.sigmoid(codes)
        # TODO(synk): torch.round is round-half-to-even; this is round-half-up.
        codes = jnp.floor(sgm * (levels - 1) + 0.5) * (1.0 / (levels - 1))

    # ---- BsSideReconstructor ----------------------------------------------
    x = jnp.dot(codes.astype(bf), wd_ref[...], preferred_element_type=f32) + bd_ref[...] + pe
    for l in range(N):
        x = encoder_layer(x, dec, l)

    logits = jnp.dot(x.astype(bf), wout_ref[...], preferred_element_type=f32) + bout_ref[...]
    o_ref[...] = logits.astype(o_ref.dtype)


# --------------------------- model construction -----------------------------


def sinusoidal_pe(max_len, d_model):
    pos = jnp.arange(max_len, dtype=jnp.float32)[:, None]
    idx = jnp.arange(0, d_model, 2, dtype=jnp.float32)
    div = jnp.exp(-math.log(10000.0) * idx / d_model)
    pe = jnp.zeros((max_len, d_model), jnp.float32)
    pe = pe.at[:, 0::2].set(jnp.sin(pos * div))
    pe = pe.at[:, 1::2].set(jnp.cos(pos * div))
    return pe


def _dense_init(key, shape, scale=0.02):
    return jax.random.normal(key, shape, dtype=jnp.float32) * scale


def init_encoder_layer(key, d_model, d_ff):
    ks = jax.random.split(key, 6)
    wq = _dense_init(ks[0], (d_model, d_model))
    wk = _dense_init(ks[1], (d_model, d_model))
    wv = _dense_init(ks[2], (d_model, d_model))
    return {
        "wqkv": jnp.concatenate([wq, wk, wv], axis=1),       # [D, 3D] fused
        "bqkv": jnp.zeros((1, 3 * d_model), jnp.float32),
        "wo": _dense_init(ks[3], (d_model, d_model)),
        "bo": jnp.zeros((1, d_model), jnp.float32),
        "ln1_g": jnp.ones((1, d_model), jnp.float32),
        "ln1_b": jnp.zeros((1, d_model), jnp.float32),
        "w1": _dense_init(ks[4], (d_model, d_ff)),
        "b1": jnp.zeros((1, d_ff), jnp.float32),
        "w2": _dense_init(ks[5], (d_ff, d_model)),
        "b2": jnp.zeros((1, d_model), jnp.float32),
        "ln2_g": jnp.ones((1, d_model), jnp.float32),
        "ln2_b": jnp.zeros((1, d_model), jnp.float32),
    }


def init_params(key, cfg):
    d_model = cfg["d_model"]
    d_code = d_model // cfg["code_rate"]
    keys = jax.random.split(key, 2 * cfg["N"] + 5)
    emb = _dense_init(keys[0], (cfg["num_embeddings"], d_model), scale=1.0)
    emb = emb.at[cfg["pad_idx"]].set(0.0)   # padding_idx row zeroed like nn.Embedding
    enc_layers = [init_encoder_layer(keys[1 + i], d_model, cfg["d_ff"])
                  for i in range(cfg["N"])]
    dec_layers = [init_encoder_layer(keys[1 + cfg["N"] + i], d_model, cfg["d_ff"])
                  for i in range(cfg["N"])]
    return {
        "emb": emb,
        "enc_layers": enc_layers,
        "dec_layers": dec_layers,
        "wc": _dense_init(keys[-4], (d_model, d_code)),
        "bc": jnp.zeros((1, d_code), jnp.float32),
        "wd": _dense_init(keys[-3], (d_code, d_model)),
        "bd": jnp.zeros((1, d_model), jnp.float32),
        "wout": _dense_init(keys[-2], (d_model, cfg["num_embeddings"])),
        "bout": jnp.zeros((1, cfg["num_embeddings"]), jnp.float32),
    }


def stack_layers_cast(layers):
    """Stack per-layer tensors along a leading N axis; matmul weights -> bf16."""
    out = []
    for k in LAYER_KEYS:
        arr = jnp.stack([lyr[k] for lyr in layers], axis=0)
        if k in BF16_WEIGHT_KEYS:
            arr = arr.astype(jnp.bfloat16)
        out.append(arr)
    return out


# ------------------------------- forward pass --------------------------------


def csi_autoencoder_forward(params, x_tokens, cfg):
    B, S = x_tokens.shape
    D = cfg["d_model"]
    H = cfg["heads_num"]
    V = cfg["num_embeddings"]
    N = cfg["N"]
    Dh = D // H
    BS = B * S
    bf = jnp.bfloat16

    pe = sinusoidal_pe(cfg["max_len"], D)[:S]
    pe_bd = jnp.tile(pe, (B, 1))                                  # (BS, D)

    # cross-batch attention mask: query row r (batch r//S) may only attend to
    # key column c whose within-head index (c % BS) belongs to the same batch.
    row_batch = jnp.arange(BS, dtype=jnp.int32) // S
    col_batch = (jnp.arange(H * BS, dtype=jnp.int32) % BS) // S
    attn_mask = jnp.where(row_batch[:, None] == col_batch[None, :],
                          0.0, -1e30).astype(jnp.float32)         # (BS, H*BS)

    # head block-diagonal spread mask and per-head-block ones matrix
    r_head = jnp.arange(H * BS, dtype=jnp.int32) // BS
    d_head = jnp.arange(D, dtype=jnp.int32) // Dh
    spread = (r_head[:, None] == d_head[None, :]).astype(jnp.float32)     # (H*BS, D)
    ones_bd = (r_head[:, None] == r_head[None, :]).astype(jnp.float32)    # (H*BS, H*BS)

    enc = stack_layers_cast(params["enc_layers"])
    dec = stack_layers_cast(params["dec_layers"])

    inputs = ([x_tokens.reshape(BS, 1).astype(jnp.int32),
               params["emb"], pe_bd, attn_mask, spread, ones_bd]
              + enc
              + [params["wc"].astype(bf), params["bc"],
                 params["wd"].astype(bf), params["bd"]]
              + dec
              + [params["wout"].astype(bf), params["bout"]])

    kernel = functools.partial(
        fused_csi_kernel, B=B, S=S, D=D, H=H, N=N, V=V,
        eps=cfg["layer_norm_eps"], levels=2 ** cfg["quantization_bits"],
        use_quantizer=cfg["use_quantizer"])

    # Single ungridded invocation: everything (weights + activations) lives in
    # VMEM for the whole forward; no per-step pipelining overhead.
    out = pl.pallas_call(
        kernel,
        out_shape=jax.ShapeDtypeStruct((BS, V), jnp.float32),
    )(*inputs)
    # TODO(synk): for large B, reintroduce a blocked batch grid (Bt sequences
    # per step, dimension_semantics=("parallel",)) to use both v7x TensorCores.
    return out.reshape(B, S, V)


# ----------------------------- pure-JAX reference ----------------------------


def reference_forward(params, x_tokens, cfg):
    B, S = x_tokens.shape
    D = cfg["d_model"]
    H = cfg["heads_num"]
    Dh = D // H
    N = cfg["N"]
    eps = cfg["layer_norm_eps"]
    levels = 2 ** cfg["quantization_bits"]
    bf = jnp.bfloat16
    scale = 1.0 / math.sqrt(Dh)

    pe = sinusoidal_pe(cfg["max_len"], D)[:S]

    def mm(a, b):
        return jnp.dot(a.astype(bf), b.astype(bf), preferred_element_type=jnp.float32)

    def add_ln(x, y, g, be):
        z = x + y
        mu = jnp.mean(z, axis=-1, keepdims=True)
        var = jnp.mean((z - mu) ** 2, axis=-1, keepdims=True)
        return (z - mu) * jax.lax.rsqrt(var + eps) * g + be

    def layer(x, lyr):
        qkv = mm(x, lyr["wqkv"]) + lyr["bqkv"]
        q, k, v = qkv[:, :D], qkv[:, D:2 * D], qkv[:, 2 * D:]
        heads = []
        for h in range(H):
            lo = h * Dh
            qh, kh, vh = q[:, lo:lo + Dh], k[:, lo:lo + Dh], v[:, lo:lo + Dh]
            s = jnp.dot(qh.astype(bf), kh.astype(bf).T,
                        preferred_element_type=jnp.float32) * scale
            p = jax.nn.softmax(s, axis=-1)
            heads.append(mm(p, vh))
        attn = mm(jnp.concatenate(heads, axis=1), lyr["wo"]) + lyr["bo"]
        h1 = add_ln(x, attn, lyr["ln1_g"], lyr["ln1_b"])
        f = jnp.maximum(mm(h1, lyr["w1"]) + lyr["b1"], 0.0)
        f = mm(f, lyr["w2"]) + lyr["b2"]
        return add_ln(h1, f, lyr["ln2_g"], lyr["ln2_b"])

    outs = []
    for b in range(B):
        x = params["emb"][x_tokens[b]] * math.sqrt(D) + pe
        for lyr in params["enc_layers"]:
            x = layer(x, lyr)
        codes = mm(x, params["wc"]) + params["bc"]
        if cfg["use_quantizer"]:
            sgm = jax.nn.sigmoid(codes)
            codes = jnp.floor(sgm * (levels - 1) + 0.5) * (1.0 / (levels - 1))
        x = mm(codes, params["wd"]) + params["bd"] + pe
        for lyr in params["dec_layers"]:
            x = layer(x, lyr)
        outs.append(mm(x, params["wout"]) + params["bout"])
    return jnp.stack(outs, axis=0)


# ----------------------------------- main ------------------------------------


if __name__ == "__main__":
    cfg = dict(
        num_embeddings=16,
        max_len=16,
        pad_idx=0,
        d_model=32,
        N=2,
        d_ff=64,
        heads_num=4,
        dropout_rate=0.0,       # inference mode: dropout is identity
        layer_norm_eps=1e-5,
        code_rate=2,
        use_quantizer=True,
        quantization_bits=4,
    )

    key = jax.random.PRNGKey(0)
    pkey, xkey = jax.random.split(key)
    params = init_params(pkey, cfg)

    B, S = 2, 8
    # token-id input (num_embeddings vocab, avoid pad_idx=0)
    x = jax.random.randint(xkey, (B, S), 1, cfg["num_embeddings"], dtype=jnp.int32)

    fwd = jax.jit(functools.partial(csi_autoencoder_forward, cfg=cfg))
    out = jax.block_until_ready(fwd(params, x))

    assert out.shape == (B, S, cfg["num_embeddings"]), out.shape
    assert out.dtype == jnp.float32
    assert bool(jnp.all(jnp.isfinite(out)))

    ref = reference_forward(params, x, cfg)
    max_diff = float(jnp.max(jnp.abs(out - ref)))
    assert max_diff < 5e-2, f"kernel vs reference max |diff| = {max_diff}"

    print("KERNEL_OK")
</pallas_src>

<mosaic_0001>
module attributes {stable_mosaic.version = 11 : i64} {
  func.func @fused_csi_kernel(%arg0: memref<16x1xi32, #tpu.memory_space<vmem>>, %arg1: memref<16x32xf32, #tpu.memory_space<vmem>>, %arg2: memref<16x32xf32, #tpu.memory_space<vmem>>, %arg3: memref<16x64xf32, #tpu.memory_space<vmem>>, %arg4: memref<64x32xf32, #tpu.memory_space<vmem>>, %arg5: memref<64x64xf32, #tpu.memory_space<vmem>>, %arg6: memref<2x32x96xbf16, #tpu.memory_space<vmem>>, %arg7: memref<2x1x96xf32, #tpu.memory_space<vmem>>, %arg8: memref<2x32x32xbf16, #tpu.memory_space<vmem>>, %arg9: memref<2x1x32xf32, #tpu.memory_space<vmem>>, %arg10: memref<2x1x32xf32, #tpu.memory_space<vmem>>, %arg11: memref<2x1x32xf32, #tpu.memory_space<vmem>>, %arg12: memref<2x32x64xbf16, #tpu.memory_space<vmem>>, %arg13: memref<2x1x64xf32, #tpu.memory_space<vmem>>, %arg14: memref<2x64x32xbf16, #tpu.memory_space<vmem>>, %arg15: memref<2x1x32xf32, #tpu.memory_space<vmem>>, %arg16: memref<2x1x32xf32, #tpu.memory_space<vmem>>, %arg17: memref<2x1x32xf32, #tpu.memory_space<vmem>>, %arg18: memref<32x16xbf16, #tpu.memory_space<vmem>>, %arg19: memref<1x16xf32, #tpu.memory_space<vmem>>, %arg20: memref<16x32xbf16, #tpu.memory_space<vmem>>, %arg21: memref<1x32xf32, #tpu.memory_space<vmem>>, %arg22: memref<2x32x96xbf16, #tpu.memory_space<vmem>>, %arg23: memref<2x1x96xf32, #tpu.memory_space<vmem>>, %arg24: memref<2x32x32xbf16, #tpu.memory_space<vmem>>, %arg25: memref<2x1x32xf32, #tpu.memory_space<vmem>>, %arg26: memref<2x1x32xf32, #tpu.memory_space<vmem>>, %arg27: memref<2x1x32xf32, #tpu.memory_space<vmem>>, %arg28: memref<2x32x64xbf16, #tpu.memory_space<vmem>>, %arg29: memref<2x1x64xf32, #tpu.memory_space<vmem>>, %arg30: memref<2x64x32xbf16, #tpu.memory_space<vmem>>, %arg31: memref<2x1x32xf32, #tpu.memory_space<vmem>>, %arg32: memref<2x1x32xf32, #tpu.memory_space<vmem>>, %arg33: memref<2x1x32xf32, #tpu.memory_space<vmem>>, %arg34: memref<32x16xbf16, #tpu.memory_space<vmem>>, %arg35: memref<1x16xf32, #tpu.memory_space<vmem>>, %arg36: memref<16x16xf32, #tpu.memory_space<vmem>>) attributes {dimension_semantics = [], scalar_prefetch = 0 : i64, scratch_operands = 0 : i64, tpu.core_type = #tpu.core_type<tc>} {
    %c0 = arith.constant 0 : index
    %c0_0 = arith.constant 0 : index
    %0 = vector.load %arg2[%c0, %c0_0] : memref<16x32xf32, #tpu.memory_space<vmem>>, vector<16x32xf32>
    %c0_1 = arith.constant 0 : index
    %c0_2 = arith.constant 0 : index
    %1 = vector.load %arg3[%c0_1, %c0_2] : memref<16x64xf32, #tpu.memory_space<vmem>>, vector<16x64xf32>
    %c0_3 = arith.constant 0 : index
    %c0_4 = arith.constant 0 : index
    %2 = vector.load %arg4[%c0_3, %c0_4] : memref<64x32xf32, #tpu.memory_space<vmem>>, vector<64x32xf32>
    %c0_5 = arith.constant 0 : index
    %c0_6 = arith.constant 0 : index
    %3 = vector.load %arg5[%c0_5, %c0_6] : memref<64x64xf32, #tpu.memory_space<vmem>>, vector<64x64xf32>
    %c0_7 = arith.constant 0 : index
    %c0_8 = arith.constant 0 : index
    %4 = vector.load %arg0[%c0_7, %c0_8] : memref<16x1xi32, #tpu.memory_space<vmem>>, vector<16x1xi32>
    %5 = tpu.iota {dimensions = array<i32: 1>} : vector<16x16xi32>
    %6 = vector.broadcast %4 : vector<16x1xi32> to vector<16x16xi32>
    %7 = arith.cmpi eq, %5, %6 : vector<16x16xi32>
    %8 = arith.extui %7 : vector<16x16xi1> to vector<16x16xi32>
    %9 = arith.sitofp %8 : vector<16x16xi32> to vector<16x16xf32>
    %c0_9 = arith.constant 0 : index
    %c0_10 = arith.constant 0 : index
    %10 = vector.load %arg1[%c0_9, %c0_10] : memref<16x32xf32, #tpu.memory_space<vmem>>, vector<16x32xf32>
    %cst = arith.constant dense<0.000000e+00> : vector<16x32xf32>
    %11 = tpu.matmul %9, %10, %cst {dimension_numbers = #tpu.dot_dimension_numbers<[1], [0], [0], [1], [0, 0, 1, 1], [], []>} : vector<16x16xf32>, vector<16x32xf32>, vector<16x32xf32> -> vector<16x32xf32>
    %cst_11 = arith.constant 5.65685415 : f32
    %12 = vector.broadcast %cst_11 : f32 to vector<16x32xf32>
    %13 = arith.mulf %11, %12 : vector<16x32xf32>
    %14 = arith.addf %13, %0 : vector<16x32xf32>
    %c0_12 = arith.constant 0 : index
    %c0_13 = arith.constant 0 : index
    %c0_14 = arith.constant 0 : index
    %15 = vector.load %arg6[%c0_12, %c0_13, %c0_14] : memref<2x32x96xbf16, #tpu.memory_space<vmem>>, vector<1x32x96xbf16>
    %16 = vector.shape_cast %15 : vector<1x32x96xbf16> to vector<32x96xbf16>
    %c0_15 = arith.constant 0 : index
    %c0_16 = arith.constant 0 : index
    %c0_17 = arith.constant 0 : index
    %17 = vector.load %arg7[%c0_15, %c0_16, %c0_17] : memref<2x1x96xf32, #tpu.memory_space<vmem>>, vector<1x1x96xf32>
    %18 = vector.shape_cast %17 : vector<1x1x96xf32> to vector<1x96xf32>
    %c0_18 = arith.constant 0 : index
    %c0_19 = arith.constant 0 : index
    %c0_20 = arith.constant 0 : index
    %19 = vector.load %arg8[%c0_18, %c0_19, %c0_20] : memref<2x32x32xbf16, #tpu.memory_space<vmem>>, vector<1x32x32xbf16>
    %20 = vector.shape_cast %19 : vector<1x32x32xbf16> to vector<32x32xbf16>
    %c0_21 = arith.constant 0 : index
    %c0_22 = arith.constant 0 : index
    %c0_23 = arith.constant 0 : index
    %21 = vector.load %arg9[%c0_21, %c0_22, %c0_23] : memref<2x1x32xf32, #tpu.memory_space<vmem>>, vector<1x1x32xf32>
    %22 = vector.shape_cast %21 : vector<1x1x32xf32> to vector<1x32xf32>
    %c0_24 = arith.constant 0 : index
    %c0_25 = arith.constant 0 : index
    %c0_26 = arith.constant 0 : index
    %23 = vector.load %arg10[%c0_24, %c0_25, %c0_26] : memref<2x1x32xf32, #tpu.memory_space<vmem>>, vector<1x1x32xf32>
    %24 = vector.shape_cast %23 : vector<1x1x32xf32> to vector<1x32xf32>
    %c0_27 = arith.constant 0 : index
    %c0_28 = arith.constant 0 : index
    %c0_29 = arith.constant 0 : index
    %25 = vector.load %arg11[%c0_27, %c0_28, %c0_29] : memref<2x1x32xf32, #tpu.memory_space<vmem>>, vector<1x1x32xf32>
    %26 = vector.shape_cast %25 : vector<1x1x32xf32> to vector<1x32xf32>
    %c0_30 = arith.constant 0 : index
    %c0_31 = arith.constant 0 : index
    %c0_32 = arith.constant 0 : index
    %27 = vector.load %arg12[%c0_30, %c0_31, %c0_32] : memref<2x32x64xbf16, #tpu.memory_space<vmem>>, vector<1x32x64xbf16>
    %28 = vector.shape_cast %27 : vector<1x32x64xbf16> to vector<32x64xbf16>
    %c0_33 = arith.constant 0 : index
    %c0_34 = arith.constant 0 : index
    %c0_35 = arith.constant 0 : index
    %29 = vector.load %arg13[%c0_33, %c0_34, %c0_35] : memref<2x1x64xf32, #tpu.memory_space<vmem>>, vector<1x1x64xf32>
    %30 = vector.shape_cast %29 : vector<1x1x64xf32> to vector<1x64xf32>
    %c0_36 = arith.constant 0 : index
    %c0_37 = arith.constant 0 : index
    %c0_38 = arith.constant 0 : index
    %31 = vector.load %arg14[%c0_36, %c0_37, %c0_38] : memref<2x64x32xbf16, #tpu.memory_space<vmem>>, vector<1x64x32xbf16>
    %32 = vector.shape_cast %31 : vector<1x64x32xbf16> to vector<64x32xbf16>
    %c0_39 = arith.constant 0 : index
    %c0_40 = arith.constant 0 : index
    %c0_41 = arith.constant 0 : index
    %33 = vector.load %arg15[%c0_39, %c0_40, %c0_41] : memref<2x1x32xf32, #tpu.memory_space<vmem>>, vector<1x1x32xf32>
    %34 = vector.shape_cast %33 : vector<1x1x32xf32> to vector<1x32xf32>
    %c0_42 = arith.constant 0 : index
    %c0_43 = arith.constant 0 : index
    %c0_44 = arith.constant 0 : index
    %35 = vector.load %arg16[%c0_42, %c0_43, %c0_44] : memref<2x1x32xf32, #tpu.memory_space<vmem>>, vector<1x1x32xf32>
    %36 = vector.shape_cast %35 : vector<1x1x32xf32> to vector<1x32xf32>
    %c0_45 = arith.constant 0 : index
    %c0_46 = arith.constant 0 : index
    %c0_47 = arith.constant 0 : index
    %37 = vector.load %arg17[%c0_45, %c0_46, %c0_47] : memref<2x1x32xf32, #tpu.memory_space<vmem>>, vector<1x1x32xf32>
    %38 = vector.shape_cast %37 : vector<1x1x32xf32> to vector<1x32xf32>
    %39 = arith.truncf %14 : vector<16x32xf32> to vector<16x32xbf16>
    %cst_48 = arith.constant dense<0.000000e+00> : vector<16x96xf32>
    %40 = tpu.matmul %39, %16, %cst_48 {dimension_numbers = #tpu.dot_dimension_numbers<[1], [0], [0], [1], [0, 0, 1, 1], [], []>} : vector<16x32xbf16>, vector<32x96xbf16>, vector<16x96xf32> -> vector<16x96xf32>
    %41 = vector.broadcast %18 : vector<1x96xf32> to vector<16x96xf32>
    %42 = arith.addf %40, %41 : vector<16x96xf32>
    %43 = vector.extract_strided_slice %42 {offsets = [0, 0], sizes = [16, 32], strides = [1, 1]} : vector<16x96xf32> to vector<16x32xf32>
    %44 = vector.extract_strided_slice %42 {offsets = [0, 32], sizes = [16, 32], strides = [1, 1]} : vector<16x96xf32> to vector<16x32xf32>
    %45 = vector.extract_strided_slice %42 {offsets = [0, 64], sizes = [16, 32], strides = [1, 1]} : vector<16x96xf32> to vector<16x32xf32>
    %46 = tpu.concatenate %44, %44, %44, %44 in 0 : vector<16x32xf32>, vector<16x32xf32>, vector<16x32xf32>, vector<16x32xf32> -> vector<64x32xf32>
    %47 = arith.mulf %46, %2 : vector<64x32xf32>
    %48 = arith.truncf %47 : vector<64x32xf32> to vector<64x32xbf16>
    %49 = tpu.concatenate %45, %45, %45, %45 in 0 : vector<16x32xf32>, vector<16x32xf32>, vector<16x32xf32>, vector<16x32xf32> -> vector<64x32xf32>
    %50 = arith.mulf %49, %2 : vector<64x32xf32>
    %51 = arith.truncf %50 : vector<64x32xf32> to vector<64x32xbf16>
    %52 = arith.truncf %43 : vector<16x32xf32> to vector<16x32xbf16>
    %cst_49 = arith.constant dense<0.000000e+00> : vector<16x64xf32>
    %53 = tpu.matmul %52, %48, %cst_49 {dimension_numbers = #tpu.dot_dimension_numbers<[1], [1], [0], [0], [0, 0, 1, 0], [], []>} : vector<16x32xbf16>, vector<64x32xbf16>, vector<16x64xf32> -> vector<16x64xf32>
    %cst_50 = arith.constant 0.353553385 : f32
    %54 = vector.broadcast %cst_50 : f32 to vector<16x64xf32>
    %55 = arith.mulf %53, %54 : vector<16x64xf32>
    %56 = arith.addf %55, %1 : vector<16x64xf32>
    %cst_51 = arith.constant dense<0xFF800000> : vector<16xf32>
    %57 = vector.multi_reduction <maximumf>, %56, %cst_51 [1] : vector<16x64xf32> to vector<16xf32>
    %58 = vector.shape_cast %57 : vector<16xf32> to vector<16x1xf32>
    %59 = vector.broadcast %58 : vector<16x1xf32> to vector<16x64xf32>
    %60 = arith.subf %56, %59 : vector<16x64xf32>
    %61 = math.exp %60 : vector<16x64xf32>
    %cst_52 = arith.constant dense<0.000000e+00> : vector<16x64xf32>
    %62 = tpu.matmul %61, %3, %cst_52 {dimension_numbers = #tpu.dot_dimension_numbers<[1], [0], [0], [1], [0, 0, 1, 1], [], []>} : vector<16x64xf32>, vector<64x64xf32>, vector<16x64xf32> -> vector<16x64xf32>
    %63 = tpu.reciprocal %62 {approx = true} : vector<16x64xf32> -> vector<16x64xf32>
    %64 = arith.mulf %61, %63 : vector<16x64xf32>
    %65 = arith.truncf %64 : vector<16x64xf32> to vector<16x64xbf16>
    %cst_53 = arith.constant dense<0.000000e+00> : vector<16x32xf32>
    %66 = tpu.matmul %65, %51, %cst_53 {dimension_numbers = #tpu.dot_dimension_numbers<[1], [0], [0], [1], [0, 0, 1, 1], [], []>} : vector<16x64xbf16>, vector<64x32xbf16>, vector<16x32xf32> -> vector<16x32xf32>
    %67 = arith.truncf %66 : vector<16x32xf32> to vector<16x32xbf16>
    %cst_54 = arith.constant dense<0.000000e+00> : vector<16x32xf32>
    %68 = tpu.matmul %67, %20, %cst_54 {dimension_numbers = #tpu.dot_dimension_numbers<[1], [0], [0], [1], [0, 0, 1, 1], [], []>} : vector<16x32xbf16>, vector<32x32xbf16>, vector<16x32xf32> -> vector<16x32xf32>
    %69 = vector.broadcast %22 : vector<1x32xf32> to vector<16x32xf32>
    %70 = arith.addf %68, %69 : vector<16x32xf32>
    %71 = arith.addf %14, %70 : vector<16x32xf32>
    %cst_55 = arith.constant dense<0.000000e+00> : vector<16xf32>
    %72 = vector.multi_reduction <add>, %71, %cst_55 [1] : vector<16x32xf32> to vector<16xf32>
    %73 = vector.shape_cast %72 : vector<16xf32> to vector<16x1xf32>
    %cst_56 = arith.constant 3.200000e+01 : f32
    %74 = vector.broadcast %cst_56 : f32 to vector<16x1xf32>
    %75 = arith.divf %73, %74 : vector<16x1xf32>
    %76 = vector.broadcast %75 : vector<16x1xf32> to vector<16x32xf32>
    %77 = arith.subf %71, %76 : vector<16x32xf32>
    %78 = vector.broadcast %75 : vector<16x1xf32> to vector<16x32xf32>
    %79 = arith.subf %71, %78 : vector<16x32xf32>
    %80 = arith.mulf %77, %79 : vector<16x32xf32>
    %cst_57 = arith.constant dense<0.000000e+00> : vector<16xf32>
    %81 = vector.multi_reduction <add>, %80, %cst_57 [1] : vector<16x32xf32> to vector<16xf32>
    %82 = vector.shape_cast %81 : vector<16xf32> to vector<16x1xf32>
    %cst_58 = arith.constant 3.200000e+01 : f32
    %83 = vector.broadcast %cst_58 : f32 to vector<16x1xf32>
    %84 = arith.divf %82, %83 : vector<16x1xf32>
    %85 = vector.broadcast %75 : vector<16x1xf32> to vector<16x32xf32>
    %86 = arith.subf %71, %85 : vector<16x32xf32>
    %cst_59 = arith.constant 9.99999974E-6 : f32
    %87 = vector.broadcast %cst_59 : f32 to vector<16x1xf32>
    %88 = arith.addf %84, %87 : vector<16x1xf32>
    %89 = math.rsqrt %88 : vector<16x1xf32>
    %90 = vector.broadcast %89 : vector<16x1xf32> to vector<16x32xf32>
    %91 = arith.mulf %86, %90 : vector<16x32xf32>
    %92 = vector.broadcast %24 : vector<1x32xf32> to vector<16x32xf32>
    %93 = arith.mulf %91, %92 : vector<16x32xf32>
    %94 = vector.broadcast %26 : vector<1x32xf32> to vector<16x32xf32>
    %95 = arith.addf %93, %94 : vector<16x32xf32>
    %96 = arith.truncf %95 : vector<16x32xf32> to vector<16x32xbf16>
    %cst_60 = arith.constant dense<0.000000e+00> : vector<16x64xf32>
    %97 = tpu.matmul %96, %28, %cst_60 {dimension_numbers = #tpu.dot_dimension_numbers<[1], [0], [0], [1], [0, 0, 1, 1], [], []>} : vector<16x32xbf16>, vector<32x64xbf16>, vector<16x64xf32> -> vector<16x64xf32>
    %98 = vector.broadcast %30 : vector<1x64xf32> to vector<16x64xf32>
    %99 = arith.addf %97, %98 : vector<16x64xf32>
    %cst_61 = arith.constant 0.000000e+00 : f32
    %100 = vector.broadcast %cst_61 : f32 to vector<16x64xf32>
    %101 = arith.maximumf %99, %100 : vector<16x64xf32>
    %102 = arith.truncf %101 : vector<16x64xf32> to vector<16x64xbf16>
    %cst_62 = arith.constant dense<0.000000e+00> : vector<16x32xf32>
    %103 = tpu.matmul %102, %32, %cst_62 {dimension_numbers = #tpu.dot_dimension_numbers<[1], [0], [0], [1], [0, 0, 1, 1], [], []>} : vector<16x64xbf16>, vector<64x32xbf16>, vector<16x32xf32> -> vector<16x32xf32>
    %104 = vector.broadcast %34 : vector<1x32xf32> to vector<16x32xf32>
    %105 = arith.addf %103, %104 : vector<16x32xf32>
    %106 = arith.addf %95, %105 : vector<16x32xf32>
    %cst_63 = arith.constant dense<0.000000e+00> : vector<16xf32>
    %107 = vector.multi_reduction <add>, %106, %cst_63 [1] : vector<16x32xf32> to vector<16xf32>
    %108 = vector.shape_cast %107 : vector<16xf32> to vector<16x1xf32>
    %cst_64 = arith.constant 3.200000e+01 : f32
    %109 = vector.broadcast %cst_64 : f32 to vector<16x1xf32>
    %110 = arith.divf %108, %109 : vector<16x1xf32>
    %111 = vector.broadcast %110 : vector<16x1xf32> to vector<16x32xf32>
    %112 = arith.subf %106, %111 : vector<16x32xf32>
    %113 = vector.broadcast %110 : vector<16x1xf32> to vector<16x32xf32>
    %114 = arith.subf %106, %113 : vector<16x32xf32>
    %115 = arith.mulf %112, %114 : vector<16x32xf32>
    %cst_65 = arith.constant dense<0.000000e+00> : vector<16xf32>
    %116 = vector.multi_reduction <add>, %115, %cst_65 [1] : vector<16x32xf32> to vector<16xf32>
    %117 = vector.shape_cast %116 : vector<16xf32> to vector<16x1xf32>
    %cst_66 = arith.constant 3.200000e+01 : f32
    %118 = vector.broadcast %cst_66 : f32 to vector<16x1xf32>
    %119 = arith.divf %117, %118 : vector<16x1xf32>
    %120 = vector.broadcast %110 : vector<16x1xf32> to vector<16x32xf32>
    %121 = arith.subf %106, %120 : vector<16x32xf32>
    %cst_67 = arith.constant 9.99999974E-6 : f32
    %122 = vector.broadcast %cst_67 : f32 to vector<16x1xf32>
    %123 = arith.addf %119, %122 : vector<16x1xf32>
    %124 = math.rsqrt %123 : vector<16x1xf32>
    %125 = vector.broadcast %124 : vector<16x1xf32> to vector<16x32xf32>
    %126 = arith.mulf %121, %125 : vector<16x32xf32>
    %127 = vector.broadcast %36 : vector<1x32xf32> to vector<16x32xf32>
    %128 = arith.mulf %126, %127 : vector<16x32xf32>
    %129 = vector.broadcast %38 : vector<1x32xf32> to vector<16x32xf32>
    %130 = arith.addf %128, %129 : vector<16x32xf32>
    %c1 = arith.constant 1 : index
    %c0_68 = arith.constant 0 : index
    %c0_69 = arith.constant 0 : index
    %131 = vector.load %arg6[%c1, %c0_68, %c0_69] : memref<2x32x96xbf16, #tpu.memory_space<vmem>>, vector<1x32x96xbf16>
    %132 = vector.shape_cast %131 : vector<1x32x96xbf16> to vector<32x96xbf16>
    %c1_70 = arith.constant 1 : index
    %c0_71 = arith.constant 0 : index
    %c0_72 = arith.constant 0 : index
    %133 = vector.load %arg7[%c1_70, %c0_71, %c0_72] : memref<2x1x96xf32, #tpu.memory_space<vmem>>, vector<1x1x96xf32>
    %134 = vector.shape_cast %133 : vector<1x1x96xf32> to vector<1x96xf32>
    %c1_73 = arith.constant 1 : index
    %c0_74 = arith.constant 0 : index
    %c0_75 = arith.constant 0 : index
    %135 = vector.load %arg8[%c1_73, %c0_74, %c0_75] : memref<2x32x32xbf16, #tpu.memory_space<vmem>>, vector<1x32x32xbf16>
    %136 = vector.shape_cast %135 : vector<1x32x32xbf16> to vector<32x32xbf16>
    %c1_76 = arith.constant 1 : index
    %c0_77 = arith.constant 0 : index
    %c0_78 = arith.constant 0 : index
    %137 = vector.load %arg9[%c1_76, %c0_77, %c0_78] : memref<2x1x32xf32, #tpu.memory_space<vmem>>, vector<1x1x32xf32>
    %138 = vector.shape_cast %137 : vector<1x1x32xf32> to vector<1x32xf32>
    %c1_79 = arith.constant 1 : index
    %c0_80 = arith.constant 0 : index
    %c0_81 = arith.constant 0 : index
    %139 = vector.load %arg10[%c1_79, %c0_80, %c0_81] : memref<2x1x32xf32, #tpu.memory_space<vmem>>, vector<1x1x32xf32>
    %140 = vector.shape_cast %139 : vector<1x1x32xf32> to vector<1x32xf32>
    %c1_82 = arith.constant 1 : index
    %c0_83 = arith.constant 0 : index
    %c0_84 = arith.constant 0 : index
    %141 = vector.load %arg11[%c1_82, %c0_83, %c0_84] : memref<2x1x32xf32, #tpu.memory_space<vmem>>, vector<1x1x32xf32>
    %142 = vector.shape_cast %141 : vector<1x1x32xf32> to vector<1x32xf32>
    %c1_85 = arith.constant 1 : index
    %c0_86 = arith.constant 0 : index
    %c0_87 = arith.constant 0 : index
    %143 = vector.load %arg12[%c1_85, %c0_86, %c0_87] : memref<2x32x64xbf16, #tpu.memory_space<vmem>>, vector<1x32x64xbf16>
    %144 = vector.shape_cast %143 : vector<1x32x64xbf16> to vector<32x64xbf16>
    %c1_88 = arith.constant 1 : index
    %c0_89 = arith.constant 0 : index
    %c0_90 = arith.constant 0 : index
    %145 = vector.load %arg13[%c1_88, %c0_89, %c0_90] : memref<2x1x64xf32, #tpu.memory_space<vmem>>, vector<1x1x64xf32>
    %146 = vector.shape_cast %145 : vector<1x1x64xf32> to vector<1x64xf32>
    %c1_91 = arith.constant 1 : index
    %c0_92 = arith.constant 0 : index
    %c0_93 = arith.constant 0 : index
    %147 = vector.load %arg14[%c1_91, %c0_92, %c0_93] : memref<2x64x32xbf16, #tpu.memory_space<vmem>>, vector<1x64x32xbf16>
    %148 = vector.shape_cast %147 : vector<1x64x32xbf16> to vector<64x32xbf16>
    %c1_94 = arith.constant 1 : index
    %c0_95 = arith.constant 0 : index
    %c0_96 = arith.constant 0 : index
    %149 = vector.load %arg15[%c1_94, %c0_95, %c0_96] : memref<2x1x32xf32, #tpu.memory_space<vmem>>, vector<1x1x32xf32>
    %150 = vector.shape_cast %149 : vector<1x1x32xf32> to vector<1x32xf32>
    %c1_97 = arith.constant 1 : index
    %c0_98 = arith.constant 0 : index
    %c0_99 = arith.constant 0 : index
    %151 = vector.load %arg16[%c1_97, %c0_98, %c0_99] : memref<2x1x32xf32, #tpu.memory_space<vmem>>, vector<1x1x32xf32>
    %152 = vector.shape_cast %151 : vector<1x1x32xf32> to vector<1x32xf32>
    %c1_100 = arith.constant 1 : index
    %c0_101 = arith.constant 0 : index
    %c0_102 = arith.constant 0 : index
    %153 = vector.load %arg17[%c1_100, %c0_101, %c0_102] : memref<2x1x32xf32, #tpu.memory_space<vmem>>, vector<1x1x32xf32>
    %154 = vector.shape_cast %153 : vector<1x1x32xf32> to vector<1x32xf32>
    %155 = arith.truncf %130 : vector<16x32xf32> to vector<16x32xbf16>
    %cst_103 = arith.constant dense<0.000000e+00> : vector<16x96xf32>
    %156 = tpu.matmul %155, %132, %cst_103 {dimension_numbers = #tpu.dot_dimension_numbers<[1], [0], [0], [1], [0, 0, 1, 1], [], []>} : vector<16x32xbf16>, vector<32x96xbf16>, vector<16x96xf32> -> vector<16x96xf32>
    %157 = vector.broadcast %134 : vector<1x96xf32> to vector<16x96xf32>
    %158 = arith.addf %156, %157 : vector<16x96xf32>
    %159 = vector.extract_strided_slice %158 {offsets = [0, 0], sizes = [16, 32], strides = [1, 1]} : vector<16x96xf32> to vector<16x32xf32>
    %160 = vector.extract_strided_slice %158 {offsets = [0, 32], sizes = [16, 32], strides = [1, 1]} : vector<16x96xf32> to vector<16x32xf32>
    %161 = vector.extract_strided_slice %158 {offsets = [0, 64], sizes = [16, 32], strides = [1, 1]} : vector<16x96xf32> to vector<16x32xf32>
    %162 = tpu.concatenate %160, %160, %160, %160 in 0 : vector<16x32xf32>, vector<16x32xf32>, vector<16x32xf32>, vector<16x32xf32> -> vector<64x32xf32>
    %163 = arith.mulf %162, %2 : vector<64x32xf32>
    %164 = arith.truncf %163 : vector<64x32xf32> to vector<64x32xbf16>
    %165 = tpu.concatenate %161, %161, %161, %161 in 0 : vector<16x32xf32>, vector<16x32xf32>, vector<16x32xf32>, vector<16x32xf32> -> vector<64x32xf32>
    %166 = arith.mulf %165, %2 : vector<64x32xf32>
    %167 = arith.truncf %166 : vector<64x32xf32> to vector<64x32xbf16>
    %168 = arith.truncf %159 : vector<16x32xf32> to vector<16x32xbf16>
    %cst_104 = arith.constant dense<0.000000e+00> : vector<16x64xf32>
    %169 = tpu.matmul %168, %164, %cst_104 {dimension_numbers = #tpu.dot_dimension_numbers<[1], [1], [0], [0], [0, 0, 1, 0], [], []>} : vector<16x32xbf16>, vector<64x32xbf16>, vector<16x64xf32> -> vector<16x64xf32>
    %cst_105 = arith.constant 0.353553385 : f32
    %170 = vector.broadcast %cst_105 : f32 to vector<16x64xf32>
    %171 = arith.mulf %169, %170 : vector<16x64xf32>
    %172 = arith.addf %171, %1 : vector<16x64xf32>
    %cst_106 = arith.constant dense<0xFF800000> : vector<16xf32>
    %173 = vector.multi_reduction <maximumf>, %172, %cst_106 [1] : vector<16x64xf32> to vector<16xf32>
    %174 = vector.shape_cast %173 : vector<16xf32> to vector<16x1xf32>
    %175 = vector.broadcast %174 : vector<16x1xf32> to vector<16x64xf32>
    %176 = arith.subf %172, %175 : vector<16x64xf32>
    %177 = math.exp %176 : vector<16x64xf32>
    %cst_107 = arith.constant dense<0.000000e+00> : vector<16x64xf32>
    %178 = tpu.matmul %177, %3, %cst_107 {dimension_numbers = #tpu.dot_dimension_numbers<[1], [0], [0], [1], [0, 0, 1, 1], [], []>} : vector<16x64xf32>, vector<64x64xf32>, vector<16x64xf32> -> vector<16x64xf32>
    %179 = tpu.reciprocal %178 {approx = true} : vector<16x64xf32> -> vector<16x64xf32>
    %180 = arith.mulf %177, %179 : vector<16x64xf32>
    %181 = arith.truncf %180 : vector<16x64xf32> to vector<16x64xbf16>
    %cst_108 = arith.constant dense<0.000000e+00> : vector<16x32xf32>
    %182 = tpu.matmul %181, %167, %cst_108 {dimension_numbers = #tpu.dot_dimension_numbers<[1], [0], [0], [1], [0, 0, 1, 1], [], []>} : vector<16x64xbf16>, vector<64x32xbf16>, vector<16x32xf32> -> vector<16x32xf32>
    %183 = arith.truncf %182 : vector<16x32xf32> to vector<16x32xbf16>
    %cst_109 = arith.constant dense<0.000000e+00> : vector<16x32xf32>
    %184 = tpu.matmul %183, %136, %cst_109 {dimension_numbers = #tpu.dot_dimension_numbers<[1], [0], [0], [1], [0, 0, 1, 1], [], []>} : vector<16x32xbf16>, vector<32x32xbf16>, vector<16x32xf32> -> vector<16x32xf32>
    %185 = vector.broadcast %138 : vector<1x32xf32> to vector<16x32xf32>
    %186 = arith.addf %184, %185 : vector<16x32xf32>
    %187 = arith.addf %130, %186 : vector<16x32xf32>
    %cst_110 = arith.constant dense<0.000000e+00> : vector<16xf32>
    %188 = vector.multi_reduction <add>, %187, %cst_110 [1] : vector<16x32xf32> to vector<16xf32>
    %189 = vector.shape_cast %188 : vector<16xf32> to vector<16x1xf32>
    %cst_111 = arith.constant 3.200000e+01 : f32
    %190 = vector.broadcast %cst_111 : f32 to vector<16x1xf32>
    %191 = arith.divf %189, %190 : vector<16x1xf32>
    %192 = vector.broadcast %191 : vector<16x1xf32> to vector<16x32xf32>
    %193 = arith.subf %187, %192 : vector<16x32xf32>
    %194 = vector.broadcast %191 : vector<16x1xf32> to vector<16x32xf32>
    %195 = arith.subf %187, %194 : vector<16x32xf32>
    %196 = arith.mulf %193, %195 : vector<16x32xf32>
    %cst_112 = arith.constant dense<0.000000e+00> : vector<16xf32>
    %197 = vector.multi_reduction <add>, %196, %cst_112 [1] : vector<16x32xf32> to vector<16xf32>
    %198 = vector.shape_cast %197 : vector<16xf32> to vector<16x1xf32>
    %cst_113 = arith.constant 3.200000e+01 : f32
    %199 = vector.broadcast %cst_113 : f32 to vector<16x1xf32>
    %200 = arith.divf %198, %199 : vector<16x1xf32>
    %201 = vector.broadcast %191 : vector<16x1xf32> to vector<16x32xf32>
    %202 = arith.subf %187, %201 : vector<16x32xf32>
    %cst_114 = arith.constant 9.99999974E-6 : f32
    %203 = vector.broadcast %cst_114 : f32 to vector<16x1xf32>
    %204 = arith.addf %200, %203 : vector<16x1xf32>
    %205 = math.rsqrt %204 : vector<16x1xf32>
    %206 = vector.broadcast %205 : vector<16x1xf32> to vector<16x32xf32>
    %207 = arith.mulf %202, %206 : vector<16x32xf32>
    %208 = vector.broadcast %140 : vector<1x32xf32> to vector<16x32xf32>
    %209 = arith.mulf %207, %208 : vector<16x32xf32>
    %210 = vector.broadcast %142 : vector<1x32xf32> to vector<16x32xf32>
    %211 = arith.addf %209, %210 : vector<16x32xf32>
    %212 = arith.truncf %211 : vector<16x32xf32> to vector<16x32xbf16>
    %cst_115 = arith.constant dense<0.000000e+00> : vector<16x64xf32>
    %213 = tpu.matmul %212, %144, %cst_115 {dimension_numbers = #tpu.dot_dimension_numbers<[1], [0], [0], [1], [0, 0, 1, 1], [], []>} : vector<16x32xbf16>, vector<32x64xbf16>, vector<16x64xf32> -> vector<16x64xf32>
    %214 = vector.broadcast %146 : vector<1x64xf32> to vector<16x64xf32>
    %215 = arith.addf %213, %214 : vector<16x64xf32>
    %cst_116 = arith.constant 0.000000e+00 : f32
    %216 = vector.broadcast %cst_116 : f32 to vector<16x64xf32>
    %217 = arith.maximumf %215, %216 : vector<16x64xf32>
    %218 = arith.truncf %217 : vector<16x64xf32> to vector<16x64xbf16>
    %cst_117 = arith.constant dense<0.000000e+00> : vector<16x32xf32>
    %219 = tpu.matmul %218, %148, %cst_117 {dimension_numbers = #tpu.dot_dimension_numbers<[1], [0], [0], [1], [0, 0, 1, 1], [], []>} : vector<16x64xbf16>, vector<64x32xbf16>, vector<16x32xf32> -> vector<16x32xf32>
    %220 = vector.broadcast %150 : vector<1x32xf32> to vector<16x32xf32>
    %221 = arith.addf %219, %220 : vector<16x32xf32>
    %222 = arith.addf %211, %221 : vector<16x32xf32>
    %cst_118 = arith.constant dense<0.000000e+00> : vector<16xf32>
    %223 = vector.multi_reduction <add>, %222, %cst_118 [1] : vector<16x32xf32> to vector<16xf32>
    %224 = vector.shape_cast %223 : vector<16xf32> to vector<16x1xf32>
    %cst_119 = arith.constant 3.200000e+01 : f32
    %225 = vector.broadcast %cst_119 : f32 to vector<16x1xf32>
    %226 = arith.divf %224, %225 : vector<16x1xf32>
    %227 = vector.broadcast %226 : vector<16x1xf32> to vector<16x32xf32>
    %228 = arith.subf %222, %227 : vector<16x32xf32>
    %229 = vector.broadcast %226 : vector<16x1xf32> to vector<16x32xf32>
    %230 = arith.subf %222, %229 : vector<16x32xf32>
    %231 = arith.mulf %228, %230 : vector<16x32xf32>
    %cst_120 = arith.constant dense<0.000000e+00> : vector<16xf32>
    %232 = vector.multi_reduction <add>, %231, %cst_120 [1] : vector<16x32xf32> to vector<16xf32>
    %233 = vector.shape_cast %232 : vector<16xf32> to vector<16x1xf32>
    %cst_121 = arith.constant 3.200000e+01 : f32
    %234 = vector.broadcast %cst_121 : f32 to vector<16x1xf32>
    %235 = arith.divf %233, %234 : vector<16x1xf32>
    %236 = vector.broadcast %226 : vector<16x1xf32> to vector<16x32xf32>
    %237 = arith.subf %222, %236 : vector<16x32xf32>
    %cst_122 = arith.constant 9.99999974E-6 : f32
    %238 = vector.broadcast %cst_122 : f32 to vector<16x1xf32>
    %239 = arith.addf %235, %238 : vector<16x1xf32>
    %240 = math.rsqrt %239 : vector<16x1xf32>
    %241 = vector.broadcast %240 : vector<16x1xf32> to vector<16x32xf32>
    %242 = arith.mulf %237, %241 : vector<16x32xf32>
    %243 = vector.broadcast %152 : vector<1x32xf32> to vector<16x32xf32>
    %244 = arith.mulf %242, %243 : vector<16x32xf32>
    %245 = vector.broadcast %154 : vector<1x32xf32> to vector<16x32xf32>
    %246 = arith.addf %244, %245 : vector<16x32xf32>
    %247 = arith.truncf %246 : vector<16x32xf32> to vector<16x32xbf16>
    %c0_123 = arith.constant 0 : index
    %c0_124 = arith.constant 0 : index
    %248 = vector.load %arg18[%c0_123, %c0_124] : memref<32x16xbf16, #tpu.memory_space<vmem>>, vector<32x16xbf16>
    %cst_125 = arith.constant dense<0.000000e+00> : vector<16x16xf32>
    %249 = tpu.matmul %247, %248, %cst_125 {dimension_numbers = #tpu.dot_dimension_numbers<[1], [0], [0], [1], [0, 0, 1, 1], [], []>} : vector<16x32xbf16>, vector<32x16xbf16>, vector<16x16xf32> -> vector<16x16xf32>
    %c0_126 = arith.constant 0 : index
    %c0_127 = arith.constant 0 : index
    %250 = vector.load %arg19[%c0_126, %c0_127] : memref<1x16xf32, #tpu.memory_space<vmem>>, vector<1x16xf32>
    %251 = vector.broadcast %250 : vector<1x16xf32> to vector<16x16xf32>
    %252 = arith.addf %249, %251 : vector<16x16xf32>
    %253 = arith.negf %252 : vector<16x16xf32>
    %254 = math.exp %253 : vector<16x16xf32>
    %cst_128 = arith.constant 1.000000e+00 : f32
    %255 = vector.broadcast %cst_128 : f32 to vector<16x16xf32>
    %256 = arith.addf %255, %254 : vector<16x16xf32>
    %257 = arith.divf %255, %256 : vector<16x16xf32>
    %cst_129 = arith.constant 1.500000e+01 : f32
    %258 = vector.broadcast %cst_129 : f32 to vector<16x16xf32>
    %259 = arith.mulf %257, %258 : vector<16x16xf32>
    %cst_130 = arith.constant 5.000000e-01 : f32
    %260 = vector.broadcast %cst_130 : f32 to vector<16x16xf32>
    %261 = arith.addf %259, %260 : vector<16x16xf32>
    %262 = math.floor %261 : vector<16x16xf32>
    %cst_131 = arith.constant 0.0666666701 : f32
    %263 = vector.broadcast %cst_131 : f32 to vector<16x16xf32>
    %264 = arith.mulf %262, %263 : vector<16x16xf32>
    %265 = arith.truncf %264 : vector<16x16xf32> to vector<16x16xbf16>
    %c0_132 = arith.constant 0 : index
    %c0_133 = arith.constant 0 : index
    %266 = vector.load %arg20[%c0_132, %c0_133] : memref<16x32xbf16, #tpu.memory_space<vmem>>, vector<16x32xbf16>
    %cst_134 = arith.constant dense<0.000000e+00> : vector<16x32xf32>
    %267 = tpu.matmul %265, %266, %cst_134 {dimension_numbers = #tpu.dot_dimension_numbers<[1], [0], [0], [1], [0, 0, 1, 1], [], []>} : vector<16x16xbf16>, vector<16x32xbf16>, vector<16x32xf32> -> vector<16x32xf32>
    %c0_135 = arith.constant 0 : index
    %c0_136 = arith.constant 0 : index
    %268 = vector.load %arg21[%c0_135, %c0_136] : memref<1x32xf32, #tpu.memory_space<vmem>>, vector<1x32xf32>
    %269 = vector.broadcast %268 : vector<1x32xf32> to vector<16x32xf32>
    %270 = arith.addf %267, %269 : vector<16x32xf32>
    %271 = arith.addf %270, %0 : vector<16x32xf32>
    %c0_137 = arith.constant 0 : index
    %c0_138 = arith.constant 0 : index
    %c0_139 = arith.constant 0 : index
    %272 = vector.load %arg22[%c0_137, %c0_138, %c0_139] : memref<2x32x96xbf16, #tpu.memory_space<vmem>>, vector<1x32x96xbf16>
    %273 = vector.shape_cast %272 : vector<1x32x96xbf16> to vector<32x96xbf16>
    %c0_140 = arith.constant 0 : index
    %c0_141 = arith.constant 0 : index
    %c0_142 = arith.constant 0 : index
    %274 = vector.load %arg23[%c0_140, %c0_141, %c0_142] : memref<2x1x96xf32, #tpu.memory_space<vmem>>, vector<1x1x96xf32>
    %275 = vector.shape_cast %274 : vector<1x1x96xf32> to vector<1x96xf32>
    %c0_143 = arith.constant 0 : index
    %c0_144 = arith.constant 0 : index
    %c0_145 = arith.constant 0 : index
    %276 = vector.load %arg24[%c0_143, %c0_144, %c0_145] : memref<2x32x32xbf16, #tpu.memory_space<vmem>>, vector<1x32x32xbf16>
    %277 = vector.shape_cast %276 : vector<1x32x32xbf16> to vector<32x32xbf16>
    %c0_146 = arith.constant 0 : index
    %c0_147 = arith.constant 0 : index
    %c0_148 = arith.constant 0 : index
    %278 = vector.load %arg25[%c0_146, %c0_147, %c0_148] : memref<2x1x32xf32, #tpu.memory_space<vmem>>, vector<1x1x32xf32>
    %279 = vector.shape_cast %278 : vector<1x1x32xf32> to vector<1x32xf32>
    %c0_149 = arith.constant 0 : index
    %c0_150 = arith.constant 0 : index
    %c0_151 = arith.constant 0 : index
    %280 = vector.load %arg26[%c0_149, %c0_150, %c0_151] : memref<2x1x32xf32, #tpu.memory_space<vmem>>, vector<1x1x32xf32>
    %281 = vector.shape_cast %280 : vector<1x1x32xf32> to vector<1x32xf32>
    %c0_152 = arith.constant 0 : index
    %c0_153 = arith.constant 0 : index
    %c0_154 = arith.constant 0 : index
    %282 = vector.load %arg27[%c0_152, %c0_153, %c0_154] : memref<2x1x32xf32, #tpu.memory_space<vmem>>, vector<1x1x32xf32>
    %283 = vector.shape_cast %282 : vector<1x1x32xf32> to vector<1x32xf32>
    %c0_155 = arith.constant 0 : index
    %c0_156 = arith.constant 0 : index
    %c0_157 = arith.constant 0 : index
    %284 = vector.load %arg28[%c0_155, %c0_156, %c0_157] : memref<2x32x64xbf16, #tpu.memory_space<vmem>>, vector<1x32x64xbf16>
    %285 = vector.shape_cast %284 : vector<1x32x64xbf16> to vector<32x64xbf16>
    %c0_158 = arith.constant 0 : index
    %c0_159 = arith.constant 0 : index
    %c0_160 = arith.constant 0 : index
    %286 = vector.load %arg29[%c0_158, %c0_159, %c0_160] : memref<2x1x64xf32, #tpu.memory_space<vmem>>, vector<1x1x64xf32>
    %287 = vector.shape_cast %286 : vector<1x1x64xf32> to vector<1x64xf32>
    %c0_161 = arith.constant 0 : index
    %c0_162 = arith.constant 0 : index
    %c0_163 = arith.constant 0 : index
    %288 = vector.load %arg30[%c0_161, %c0_162, %c0_163] : memref<2x64x32xbf16, #tpu.memory_space<vmem>>, vector<1x64x32xbf16>
    %289 = vector.shape_cast %288 : vector<1x64x32xbf16> to vector<64x32xbf16>
    %c0_164 = arith.constant 0 : index
    %c0_165 = arith.constant 0 : index
    %c0_166 = arith.constant 0 : index
    %290 = vector.load %arg31[%c0_164, %c0_165, %c0_166] : memref<2x1x32xf32, #tpu.memory_space<vmem>>, vector<1x1x32xf32>
    %291 = vector.shape_cast %290 : vector<1x1x32xf32> to vector<1x32xf32>
    %c0_167 = arith.constant 0 : index
    %c0_168 = arith.constant 0 : index
    %c0_169 = arith.constant 0 : index
    %292 = vector.load %arg32[%c0_167, %c0_168, %c0_169] : memref<2x1x32xf32, #tpu.memory_space<vmem>>, vector<1x1x32xf32>
    %293 = vector.shape_cast %292 : vector<1x1x32xf32> to vector<1x32xf32>
    %c0_170 = arith.constant 0 : index
    %c0_171 = arith.constant 0 : index
    %c0_172 = arith.constant 0 : index
    %294 = vector.load %arg33[%c0_170, %c0_171, %c0_172] : memref<2x1x32xf32, #tpu.memory_space<vmem>>, vector<1x1x32xf32>
    %295 = vector.shape_cast %294 : vector<1x1x32xf32> to vector<1x32xf32>
    %296 = arith.truncf %271 : vector<16x32xf32> to vector<16x32xbf16>
    %cst_173 = arith.constant dense<0.000000e+00> : vector<16x96xf32>
    %297 = tpu.matmul %296, %273, %cst_173 {dimension_numbers = #tpu.dot_dimension_numbers<[1], [0], [0], [1], [0, 0, 1, 1], [], []>} : vector<16x32xbf16>, vector<32x96xbf16>, vector<16x96xf32> -> vector<16x96xf32>
    %298 = vector.broadcast %275 : vector<1x96xf32> to vector<16x96xf32>
    %299 = arith.addf %297, %298 : vector<16x96xf32>
    %300 = vector.extract_strided_slice %299 {offsets = [0, 0], sizes = [16, 32], strides = [1, 1]} : vector<16x96xf32> to vector<16x32xf32>
    %301 = vector.extract_strided_slice %299 {offsets = [0, 32], sizes = [16, 32], strides = [1, 1]} : vector<16x96xf32> to vector<16x32xf32>
    %302 = vector.extract_strided_slice %299 {offsets = [0, 64], sizes = [16, 32], strides = [1, 1]} : vector<16x96xf32> to vector<16x32xf32>
    %303 = tpu.concatenate %301, %301, %301, %301 in 0 : vector<16x32xf32>, vector<16x32xf32>, vector<16x32xf32>, vector<16x32xf32> -> vector<64x32xf32>
    %304 = arith.mulf %303, %2 : vector<64x32xf32>
    %305 = arith.truncf %304 : vector<64x32xf32> to vector<64x32xbf16>
    %306 = tpu.concatenate %302, %302, %302, %302 in 0 : vector<16x32xf32>, vector<16x32xf32>, vector<16x32xf32>, vector<16x32xf32> -> vector<64x32xf32>
    %307 = arith.mulf %306, %2 : vector<64x32xf32>
    %308 = arith.truncf %307 : vector<64x32xf32> to vector<64x32xbf16>
    %309 = arith.truncf %300 : vector<16x32xf32> to vector<16x32xbf16>
    %cst_174 = arith.constant dense<0.000000e+00> : vector<16x64xf32>
    %310 = tpu.matmul %309, %305, %cst_174 {dimension_numbers = #tpu.dot_dimension_numbers<[1], [1], [0], [0], [0, 0, 1, 0], [], []>} : vector<16x32xbf16>, vector<64x32xbf16>, vector<16x64xf32> -> vector<16x64xf32>
    %cst_175 = arith.constant 0.353553385 : f32
    %311 = vector.broadcast %cst_175 : f32 to vector<16x64xf32>
    %312 = arith.mulf %310, %311 : vector<16x64xf32>
    %313 = arith.addf %312, %1 : vector<16x64xf32>
    %cst_176 = arith.constant dense<0xFF800000> : vector<16xf32>
    %314 = vector.multi_reduction <maximumf>, %313, %cst_176 [1] : vector<16x64xf32> to vector<16xf32>
    %315 = vector.shape_cast %314 : vector<16xf32> to vector<16x1xf32>
    %316 = vector.broadcast %315 : vector<16x1xf32> to vector<16x64xf32>
    %317 = arith.subf %313, %316 : vector<16x64xf32>
    %318 = math.exp %317 : vector<16x64xf32>
    %cst_177 = arith.constant dense<0.000000e+00> : vector<16x64xf32>
    %319 = tpu.matmul %318, %3, %cst_177 {dimension_numbers = #tpu.dot_dimension_numbers<[1], [0], [0], [1], [0, 0, 1, 1], [], []>} : vector<16x64xf32>, vector<64x64xf32>, vector<16x64xf32> -> vector<16x64xf32>
    %320 = tpu.reciprocal %319 {approx = true} : vector<16x64xf32> -> vector<16x64xf32>
    %321 = arith.mulf %318, %320 : vector<16x64xf32>
    %322 = arith.truncf %321 : vector<16x64xf32> to vector<16x64xbf16>
    %cst_178 = arith.constant dense<0.000000e+00> : vector<16x32xf32>
    %323 = tpu.matmul %322, %308, %cst_178 {dimension_numbers = #tpu.dot_dimension_numbers<[1], [0], [0], [1], [0, 0, 1, 1], [], []>} : vector<16x64xbf16>, vector<64x32xbf16>, vector<16x32xf32> -> vector<16x32xf32>
    %324 = arith.truncf %323 : vector<16x32xf32> to vector<16x32xbf16>
    %cst_179 = arith.constant dense<0.000000e+00> : vector<16x32xf32>
    %325 = tpu.matmul %324, %277, %cst_179 {dimension_numbers = #tpu.dot_dimension_numbers<[1], [0], [0], [1], [0, 0, 1, 1], [], []>} : vector<16x32xbf16>, vector<32x32xbf16>, vector<16x32xf32> -> vector<16x32xf32>
    %326 = vector.broadcast %279 : vector<1x32xf32> to vector<16x32xf32>
    %327 = arith.addf %325, %326 : vector<16x32xf32>
    %328 = arith.addf %271, %327 : vector<16x32xf32>
    %cst_180 = arith.constant dense<0.000000e+00> : vector<16xf32>
    %329 = vector.multi_reduction <add>, %328, %cst_180 [1] : vector<16x32xf32> to vector<16xf32>
    %330 = vector.shape_cast %329 : vector<16xf32> to vector<16x1xf32>
    %cst_181 = arith.constant 3.200000e+01 : f32
    %331 = vector.broadcast %cst_181 : f32 to vector<16x1xf32>
    %332 = arith.divf %330, %331 : vector<16x1xf32>
    %333 = vector.broadcast %332 : vector<16x1xf32> to vector<16x32xf32>
    %334 = arith.subf %328, %333 : vector<16x32xf32>
    %335 = vector.broadcast %332 : vector<16x1xf32> to vector<16x32xf32>
    %336 = arith.subf %328, %335 : vector<16x32xf32>
    %337 = arith.mulf %334, %336 : vector<16x32xf32>
    %cst_182 = arith.constant dense<0.000000e+00> : vector<16xf32>
    %338 = vector.multi_reduction <add>, %337, %cst_182 [1] : vector<16x32xf32> to vector<16xf32>
    %339 = vector.shape_cast %338 : vector<16xf32> to vector<16x1xf32>
    %cst_183 = arith.constant 3.200000e+01 : f32
    %340 = vector.broadcast %cst_183 : f32 to vector<16x1xf32>
    %341 = arith.divf %339, %340 : vector<16x1xf32>
    %342 = vector.broadcast %332 : vector<16x1xf32> to vector<16x32xf32>
    %343 = arith.subf %328, %342 : vector<16x32xf32>
    %cst_184 = arith.constant 9.99999974E-6 : f32
    %344 = vector.broadcast %cst_184 : f32 to vector<16x1xf32>
    %345 = arith.addf %341, %344 : vector<16x1xf32>
    %346 = math.rsqrt %345 : vector<16x1xf32>
    %347 = vector.broadcast %346 : vector<16x1xf32> to vector<16x32xf32>
    %348 = arith.mulf %343, %347 : vector<16x32xf32>
    %349 = vector.broadcast %281 : vector<1x32xf32> to vector<16x32xf32>
    %350 = arith.mulf %348, %349 : vector<16x32xf32>
    %351 = vector.broadcast %283 : vector<1x32xf32> to vector<16x32xf32>
    %352 = arith.addf %350, %351 : vector<16x32xf32>
    %353 = arith.truncf %352 : vector<16x32xf32> to vector<16x32xbf16>
    %cst_185 = arith.constant dense<0.000000e+00> : vector<16x64xf32>
    %354 = tpu.matmul %353, %285, %cst_185 {dimension_numbers = #tpu.dot_dimension_numbers<[1], [0], [0], [1], [0, 0, 1, 1], [], []>} : vector<16x32xbf16>, vector<32x64xbf16>, vector<16x64xf32> -> vector<16x64xf32>
    %355 = vector.broadcast %287 : vector<1x64xf32> to vector<16x64xf32>
    %356 = arith.addf %354, %355 : vector<16x64xf32>
    %cst_186 = arith.constant 0.000000e+00 : f32
    %357 = vector.broadcast %cst_186 : f32 to vector<16x64xf32>
    %358 = arith.maximumf %356, %357 : vector<16x64xf32>
    %359 = arith.truncf %358 : vector<16x64xf32> to vector<16x64xbf16>
    %cst_187 = arith.constant dense<0.000000e+00> : vector<16x32xf32>
    %360 = tpu.matmul %359, %289, %cst_187 {dimension_numbers = #tpu.dot_dimension_numbers<[1], [0], [0], [1], [0, 0, 1, 1], [], []>} : vector<16x64xbf16>, vector<64x32xbf16>, vector<16x32xf32> -> vector<16x32xf32>
    %361 = vector.broadcast %291 : vector<1x32xf32> to vector<16x32xf32>
    %362 = arith.addf %360, %361 : vector<16x32xf32>
    %363 = arith.addf %352, %362 : vector<16x32xf32>
    %cst_188 = arith.constant dense<0.000000e+00> : vector<16xf32>
    %364 = vector.multi_reduction <add>, %363, %cst_188 [1] : vector<16x32xf32> to vector<16xf32>
    %365 = vector.shape_cast %364 : vector<16xf32> to vector<16x1xf32>
    %cst_189 = arith.constant 3.200000e+01 : f32
    %366 = vector.broadcast %cst_189 : f32 to vector<16x1xf32>
    %367 = arith.divf %365, %366 : vector<16x1xf32>
    %368 = vector.broadcast %367 : vector<16x1xf32> to vector<16x32xf32>
    %369 = arith.subf %363, %368 : vector<16x32xf32>
    %370 = vector.broadcast %367 : vector<16x1xf32> to vector<16x32xf32>
    %371 = arith.subf %363, %370 : vector<16x32xf32>
    %372 = arith.mulf %369, %371 : vector<16x32xf32>
    %cst_190 = arith.constant dense<0.000000e+00> : vector<16xf32>
    %373 = vector.multi_reduction <add>, %372, %cst_190 [1] : vector<16x32xf32> to vector<16xf32>
    %374 = vector.shape_cast %373 : vector<16xf32> to vector<16x1xf32>
    %cst_191 = arith.constant 3.200000e+01 : f32
    %375 = vector.broadcast %cst_191 : f32 to vector<16x1xf32>
    %376 = arith.divf %374, %375 : vector<16x1xf32>
    %377 = vector.broadcast %367 : vector<16x1xf32> to vector<16x32xf32>
    %378 = arith.subf %363, %377 : vector<16x32xf32>
    %cst_192 = arith.constant 9.99999974E-6 : f32
    %379 = vector.broadcast %cst_192 : f32 to vector<16x1xf32>
    %380 = arith.addf %376, %379 : vector<16x1xf32>
    %381 = math.rsqrt %380 : vector<16x1xf32>
    %382 = vector.broadcast %381 : vector<16x1xf32> to vector<16x32xf32>
    %383 = arith.mulf %378, %382 : vector<16x32xf32>
    %384 = vector.broadcast %293 : vector<1x32xf32> to vector<16x32xf32>
    %385 = arith.mulf %383, %384 : vector<16x32xf32>
    %386 = vector.broadcast %295 : vector<1x32xf32> to vector<16x32xf32>
    %387 = arith.addf %385, %386 : vector<16x32xf32>
    %c1_193 = arith.constant 1 : index
    %c0_194 = arith.constant 0 : index
    %c0_195 = arith.constant 0 : index
    %388 = vector.load %arg22[%c1_193, %c0_194, %c0_195] : memref<2x32x96xbf16, #tpu.memory_space<vmem>>, vector<1x32x96xbf16>
    %389 = vector.shape_cast %388 : vector<1x32x96xbf16> to vector<32x96xbf16>
    %c1_196 = arith.constant 1 : index
    %c0_197 = arith.constant 0 : index
    %c0_198 = arith.constant 0 : index
    %390 = vector.load %arg23[%c1_196, %c0_197, %c0_198] : memref<2x1x96xf32, #tpu.memory_space<vmem>>, vector<1x1x96xf32>
    %391 = vector.shape_cast %390 : vector<1x1x96xf32> to vector<1x96xf32>
    %c1_199 = arith.constant 1 : index
    %c0_200 = arith.constant 0 : index
    %c0_201 = arith.constant 0 : index
    %392 = vector.load %arg24[%c1_199, %c0_200, %c0_201] : memref<2x32x32xbf16, #tpu.memory_space<vmem>>, vector<1x32x32xbf16>
    %393 = vector.shape_cast %392 : vector<1x32x32xbf16> to vector<32x32xbf16>
    %c1_202 = arith.constant 1 : index
    %c0_203 = arith.constant 0 : index
    %c0_204 = arith.constant 0 : index
    %394 = vector.load %arg25[%c1_202, %c0_203, %c0_204] : memref<2x1x32xf32, #tpu.memory_space<vmem>>, vector<1x1x32xf32>
    %395 = vector.shape_cast %394 : vector<1x1x32xf32> to vector<1x32xf32>
    %c1_205 = arith.constant 1 : index
    %c0_206 = arith.constant 0 : index
    %c0_207 = arith.constant 0 : index
    %396 = vector.load %arg26[%c1_205, %c0_206, %c0_207] : memref<2x1x32xf32, #tpu.memory_space<vmem>>, vector<1x1x32xf32>
    %397 = vector.shape_cast %396 : vector<1x1x32xf32> to vector<1x32xf32>
    %c1_208 = arith.constant 1 : index
    %c0_209 = arith.constant 0 : index
    %c0_210 = arith.constant 0 : index
    %398 = vector.load %arg27[%c1_208, %c0_209, %c0_210] : memref<2x1x32xf32, #tpu.memory_space<vmem>>, vector<1x1x32xf32>
    %399 = vector.shape_cast %398 : vector<1x1x32xf32> to vector<1x32xf32>
    %c1_211 = arith.constant 1 : index
    %c0_212 = arith.constant 0 : index
    %c0_213 = arith.constant 0 : index
    %400 = vector.load %arg28[%c1_211, %c0_212, %c0_213] : memref<2x32x64xbf16, #tpu.memory_space<vmem>>, vector<1x32x64xbf16>
    %401 = vector.shape_cast %400 : vector<1x32x64xbf16> to vector<32x64xbf16>
    %c1_214 = arith.constant 1 : index
    %c0_215 = arith.constant 0 : index
    %c0_216 = arith.constant 0 : index
    %402 = vector.load %arg29[%c1_214, %c0_215, %c0_216] : memref<2x1x64xf32, #tpu.memory_space<vmem>>, vector<1x1x64xf32>
    %403 = vector.shape_cast %402 : vector<1x1x64xf32> to vector<1x64xf32>
    %c1_217 = arith.constant 1 : index
    %c0_218 = arith.constant 0 : index
    %c0_219 = arith.constant 0 : index
    %404 = vector.load %arg30[%c1_217, %c0_218, %c0_219] : memref<2x64x32xbf16, #tpu.memory_space<vmem>>, vector<1x64x32xbf16>
    %405 = vector.shape_cast %404 : vector<1x64x32xbf16> to vector<64x32xbf16>
    %c1_220 = arith.constant 1 : index
    %c0_221 = arith.constant 0 : index
    %c0_222 = arith.constant 0 : index
    %406 = vector.load %arg31[%c1_220, %c0_221, %c0_222] : memref<2x1x32xf32, #tpu.memory_space<vmem>>, vector<1x1x32xf32>
    %407 = vector.shape_cast %406 : vector<1x1x32xf32> to vector<1x32xf32>
    %c1_223 = arith.constant 1 : index
    %c0_224 = arith.constant 0 : index
    %c0_225 = arith.constant 0 : index
    %408 = vector.load %arg32[%c1_223, %c0_224, %c0_225] : memref<2x1x32xf32, #tpu.memory_space<vmem>>, vector<1x1x32xf32>
    %409 = vector.shape_cast %408 : vector<1x1x32xf32> to vector<1x32xf32>
    %c1_226 = arith.constant 1 : index
    %c0_227 = arith.constant 0 : index
    %c0_228 = arith.constant 0 : index
    %410 = vector.load %arg33[%c1_226, %c0_227, %c0_228] : memref<2x1x32xf32, #tpu.memory_space<vmem>>, vector<1x1x32xf32>
    %411 = vector.shape_cast %410 : vector<1x1x32xf32> to vector<1x32xf32>
    %412 = arith.truncf %387 : vector<16x32xf32> to vector<16x32xbf16>
    %cst_229 = arith.constant dense<0.000000e+00> : vector<16x96xf32>
    %413 = tpu.matmul %412, %389, %cst_229 {dimension_numbers = #tpu.dot_dimension_numbers<[1], [0], [0], [1], [0, 0, 1, 1], [], []>} : vector<16x32xbf16>, vector<32x96xbf16>, vector<16x96xf32> -> vector<16x96xf32>
    %414 = vector.broadcast %391 : vector<1x96xf32> to vector<16x96xf32>
    %415 = arith.addf %413, %414 : vector<16x96xf32>
    %416 = vector.extract_strided_slice %415 {offsets = [0, 0], sizes = [16, 32], strides = [1, 1]} : vector<16x96xf32> to vector<16x32xf32>
    %417 = vector.extract_strided_slice %415 {offsets = [0, 32], sizes = [16, 32], strides = [1, 1]} : vector<16x96xf32> to vector<16x32xf32>
    %418 = vector.extract_strided_slice %415 {offsets = [0, 64], sizes = [16, 32], strides = [1, 1]} : vector<16x96xf32> to vector<16x32xf32>
    %419 = tpu.concatenate %417, %417, %417, %417 in 0 : vector<16x32xf32>, vector<16x32xf32>, vector<16x32xf32>, vector<16x32xf32> -> vector<64x32xf32>
    %420 = arith.mulf %419, %2 : vector<64x32xf32>
    %421 = arith.truncf %420 : vector<64x32xf32> to vector<64x32xbf16>
    %422 = tpu.concatenate %418, %418, %418, %418 in 0 : vector<16x32xf32>, vector<16x32xf32>, vector<16x32xf32>, vector<16x32xf32> -> vector<64x32xf32>
    %423 = arith.mulf %422, %2 : vector<64x32xf32>
    %424 = arith.truncf %423 : vector<64x32xf32> to vector<64x32xbf16>
    %425 = arith.truncf %416 : vector<16x32xf32> to vector<16x32xbf16>
    %cst_230 = arith.constant dense<0.000000e+00> : vector<16x64xf32>
    %426 = tpu.matmul %425, %421, %cst_230 {dimension_numbers = #tpu.dot_dimension_numbers<[1], [1], [0], [0], [0, 0, 1, 0], [], []>} : vector<16x32xbf16>, vector<64x32xbf16>, vector<16x64xf32> -> vector<16x64xf32>
    %cst_231 = arith.constant 0.353553385 : f32
    %427 = vector.broadcast %cst_231 : f32 to vector<16x64xf32>
    %428 = arith.mulf %426, %427 : vector<16x64xf32>
    %429 = arith.addf %428, %1 : vector<16x64xf32>
    %cst_232 = arith.constant dense<0xFF800000> : vector<16xf32>
    %430 = vector.multi_reduction <maximumf>, %429, %cst_232 [1] : vector<16x64xf32> to vector<16xf32>
    %431 = vector.shape_cast %430 : vector<16xf32> to vector<16x1xf32>
    %432 = vector.broadcast %431 : vector<16x1xf32> to vector<16x64xf32>
    %433 = arith.subf %429, %432 : vector<16x64xf32>
    %434 = math.exp %433 : vector<16x64xf32>
    %cst_233 = arith.constant dense<0.000000e+00> : vector<16x64xf32>
    %435 = tpu.matmul %434, %3, %cst_233 {dimension_numbers = #tpu.dot_dimension_numbers<[1], [0], [0], [1], [0, 0, 1, 1], [], []>} : vector<16x64xf32>, vector<64x64xf32>, vector<16x64xf32> -> vector<16x64xf32>
    %436 = tpu.reciprocal %435 {approx = true} : vector<16x64xf32> -> vector<16x64xf32>
    %437 = arith.mulf %434, %436 : vector<16x64xf32>
    %438 = arith.truncf %437 : vector<16x64xf32> to vector<16x64xbf16>
    %cst_234 = arith.constant dense<0.000000e+00> : vector<16x32xf32>
    %439 = tpu.matmul %438, %424, %cst_234 {dimension_numbers = #tpu.dot_dimension_numbers<[1], [0], [0], [1], [0, 0, 1, 1], [], []>} : vector<16x64xbf16>, vector<64x32xbf16>, vector<16x32xf32> -> vector<16x32xf32>
    %440 = arith.truncf %439 : vector<16x32xf32> to vector<16x32xbf16>
    %cst_235 = arith.constant dense<0.000000e+00> : vector<16x32xf32>
    %441 = tpu.matmul %440, %393, %cst_235 {dimension_numbers = #tpu.dot_dimension_numbers<[1], [0], [0], [1], [0, 0, 1, 1], [], []>} : vector<16x32xbf16>, vector<32x32xbf16>, vector<16x32xf32> -> vector<16x32xf32>
    %442 = vector.broadcast %395 : vector<1x32xf32> to vector<16x32xf32>
    %443 = arith.addf %441, %442 : vector<16x32xf32>
    %444 = arith.addf %387, %443 : vector<16x32xf32>
    %cst_236 = arith.constant dense<0.000000e+00> : vector<16xf32>
    %445 = vector.multi_reduction <add>, %444, %cst_236 [1] : vector<16x32xf32> to vector<16xf32>
    %446 = vector.shape_cast %445 : vector<16xf32> to vector<16x1xf32>
    %cst_237 = arith.constant 3.200000e+01 : f32
    %447 = vector.broadcast %cst_237 : f32 to vector<16x1xf32>
    %448 = arith.divf %446, %447 : vector<16x1xf32>
    %449 = vector.broadcast %448 : vector<16x1xf32> to vector<16x32xf32>
    %450 = arith.subf %444, %449 : vector<16x32xf32>
    %451 = vector.broadcast %448 : vector<16x1xf32> to vector<16x32xf32>
    %452 = arith.subf %444, %451 : vector<16x32xf32>
    %453 = arith.mulf %450, %452 : vector<16x32xf32>
    %cst_238 = arith.constant dense<0.000000e+00> : vector<16xf32>
    %454 = vector.multi_reduction <add>, %453, %cst_238 [1] : vector<16x32xf32> to vector<16xf32>
    %455 = vector.shape_cast %454 : vector<16xf32> to vector<16x1xf32>
    %cst_239 = arith.constant 3.200000e+01 : f32
    %456 = vector.broadcast %cst_239 : f32 to vector<16x1xf32>
    %457 = arith.divf %455, %456 : vector<16x1xf32>
    %458 = vector.broadcast %448 : vector<16x1xf32> to vector<16x32xf32>
    %459 = arith.subf %444, %458 : vector<16x32xf32>
    %cst_240 = arith.constant 9.99999974E-6 : f32
    %460 = vector.broadcast %cst_240 : f32 to vector<16x1xf32>
    %461 = arith.addf %457, %460 : vector<16x1xf32>
    %462 = math.rsqrt %461 : vector<16x1xf32>
    %463 = vector.broadcast %462 : vector<16x1xf32> to vector<16x32xf32>
    %464 = arith.mulf %459, %463 : vector<16x32xf32>
    %465 = vector.broadcast %397 : vector<1x32xf32> to vector<16x32xf32>
    %466 = arith.mulf %464, %465 : vector<16x32xf32>
    %467 = vector.broadcast %399 : vector<1x32xf32> to vector<16x32xf32>
    %468 = arith.addf %466, %467 : vector<16x32xf32>
    %469 = arith.truncf %468 : vector<16x32xf32> to vector<16x32xbf16>
    %cst_241 = arith.constant dense<0.000000e+00> : vector<16x64xf32>
    %470 = tpu.matmul %469, %401, %cst_241 {dimension_numbers = #tpu.dot_dimension_numbers<[1], [0], [0], [1], [0, 0, 1, 1], [], []>} : vector<16x32xbf16>, vector<32x64xbf16>, vector<16x64xf32> -> vector<16x64xf32>
    %471 = vector.broadcast %403 : vector<1x64xf32> to vector<16x64xf32>
    %472 = arith.addf %470, %471 : vector<16x64xf32>
    %cst_242 = arith.constant 0.000000e+00 : f32
    %473 = vector.broadcast %cst_242 : f32 to vector<16x64xf32>
    %474 = arith.maximumf %472, %473 : vector<16x64xf32>
    %475 = arith.truncf %474 : vector<16x64xf32> to vector<16x64xbf16>
    %cst_243 = arith.constant dense<0.000000e+00> : vector<16x32xf32>
    %476 = tpu.matmul %475, %405, %cst_243 {dimension_numbers = #tpu.dot_dimension_numbers<[1], [0], [0], [1], [0, 0, 1, 1], [], []>} : vector<16x64xbf16>, vector<64x32xbf16>, vector<16x32xf32> -> vector<16x32xf32>
    %477 = vector.broadcast %407 : vector<1x32xf32> to vector<16x32xf32>
    %478 = arith.addf %476, %477 : vector<16x32xf32>
    %479 = arith.addf %468, %478 : vector<16x32xf32>
    %cst_244 = arith.constant dense<0.000000e+00> : vector<16xf32>
    %480 = vector.multi_reduction <add>, %479, %cst_244 [1] : vector<16x32xf32> to vector<16xf32>
    %481 = vector.shape_cast %480 : vector<16xf32> to vector<16x1xf32>
    %cst_245 = arith.constant 3.200000e+01 : f32
    %482 = vector.broadcast %cst_245 : f32 to vector<16x1xf32>
    %483 = arith.divf %481, %482 : vector<16x1xf32>
    %484 = vector.broadcast %483 : vector<16x1xf32> to vector<16x32xf32>
    %485 = arith.subf %479, %484 : vector<16x32xf32>
    %486 = vector.broadcast %483 : vector<16x1xf32> to vector<16x32xf32>
    %487 = arith.subf %479, %486 : vector<16x32xf32>
    %488 = arith.mulf %485, %487 : vector<16x32xf32>
    %cst_246 = arith.constant dense<0.000000e+00> : vector<16xf32>
    %489 = vector.multi_reduction <add>, %488, %cst_246 [1] : vector<16x32xf32> to vector<16xf32>
    %490 = vector.shape_cast %489 : vector<16xf32> to vector<16x1xf32>
    %cst_247 = arith.constant 3.200000e+01 : f32
    %491 = vector.broadcast %cst_247 : f32 to vector<16x1xf32>
    %492 = arith.divf %490, %491 : vector<16x1xf32>
    %493 = vector.broadcast %483 : vector<16x1xf32> to vector<16x32xf32>
    %494 = arith.subf %479, %493 : vector<16x32xf32>
    %cst_248 = arith.constant 9.99999974E-6 : f32
    %495 = vector.broadcast %cst_248 : f32 to vector<16x1xf32>
    %496 = arith.addf %492, %495 : vector<16x1xf32>
    %497 = math.rsqrt %496 : vector<16x1xf32>
    %498 = vector.broadcast %497 : vector<16x1xf32> to vector<16x32xf32>
    %499 = arith.mulf %494, %498 : vector<16x32xf32>
    %500 = vector.broadcast %409 : vector<1x32xf32> to vector<16x32xf32>
    %501 = arith.mulf %499, %500 : vector<16x32xf32>
    %502 = vector.broadcast %411 : vector<1x32xf32> to vector<16x32xf32>
    %503 = arith.addf %501, %502 : vector<16x32xf32>
    %504 = arith.truncf %503 : vector<16x32xf32> to vector<16x32xbf16>
    %c0_249 = arith.constant 0 : index
    %c0_250 = arith.constant 0 : index
    %505 = vector.load %arg34[%c0_249, %c0_250] : memref<32x16xbf16, #tpu.memory_space<vmem>>, vector<32x16xbf16>
    %cst_251 = arith.constant dense<0.000000e+00> : vector<16x16xf32>
    %506 = tpu.matmul %504, %505, %cst_251 {dimension_numbers = #tpu.dot_dimension_numbers<[1], [0], [0], [1], [0, 0, 1, 1], [], []>} : vector<16x32xbf16>, vector<32x16xbf16>, vector<16x16xf32> -> vector<16x16xf32>
    %c0_252 = arith.constant 0 : index
    %c0_253 = arith.constant 0 : index
    %507 = vector.load %arg35[%c0_252, %c0_253] : memref<1x16xf32, #tpu.memory_space<vmem>>, vector<1x16xf32>
    %508 = vector.broadcast %507 : vector<1x16xf32> to vector<16x16xf32>
    %509 = arith.addf %506, %508 : vector<16x16xf32>
    %c0_254 = arith.constant 0 : index
    %c0_255 = arith.constant 0 : index
    %510 = vector.load %arg36[%c0_254, %c0_255] : memref<16x16xf32, #tpu.memory_space<vmem>>, vector<16x16xf32>
    tpu.vector_store %arg36[%c0_254, %c0_255], %509 {strides = array<i32>} : memref<16x16xf32, #tpu.memory_space<vmem>>, vector<16x16xf32>,
    return
  }
}

</mosaic_0001>

<llo_original>
// kernel: csi_autoencoder_forward.1
$region0: #{csi_autoencoder_forward.1}
  #allocation0 [shape = 'u32[]', space=smem, size = 0x4, offset = 0x4, fixed_abs, tag = 'smem constant byte address 0x4 - core index']
  #allocation1 [shape = 'u32[144,128]{1,0:T(1,128)}', space=vmem, size = 0x12000, scoped, tag = 'internal scratch']
  %s0 = inlined_call_operand.smem [shape: u32[37], index: -1, kind: input, shape index: {}]
  %s1 = sld [smem:[%s0]]
  %s2 = scalar_lea.smem %s0, 1
  %s3 = sld [smem:[%s2]]
  %s4 = scalar_lea.smem %s0, 2
  %s5 = sld [smem:[%s4]]
  %s6 = scalar_lea.smem %s0, 3
  %s7 = sld [smem:[%s6]]
  %s8 = scalar_lea.smem %s0, 4
  %s9 = sld [smem:[%s8]]
  %s10 = scalar_lea.smem %s0, 5
  %s11 = sld [smem:[%s10]]
  %s12 = scalar_lea.smem %s0, 6
  %s13 = sld [smem:[%s12]]
  %s14 = scalar_lea.smem %s0, 7
  %s15 = sld [smem:[%s14]]
  %s16 = scalar_lea.smem %s0, 8
  %s17 = sld [smem:[%s16]]
  %s18 = scalar_lea.smem %s0, 9
  %s19 = sld [smem:[%s18]]
  %s20 = scalar_lea.smem %s0, 10
  %s21 = sld [smem:[%s20]]
  %s22 = scalar_lea.smem %s0, 11
  %s23 = sld [smem:[%s22]]
  %s24 = scalar_lea.smem %s0, 12
  %s25 = sld [smem:[%s24]]
  %s26 = scalar_lea.smem %s0, 13
  %s27 = sld [smem:[%s26]]
  %s28 = scalar_lea.smem %s0, 14
  %s29 = sld [smem:[%s28]]
  %s30 = scalar_lea.smem %s0, 15
  %s31 = sld [smem:[%s30]]
  %s32 = scalar_lea.smem %s0, 16
  %s33 = sld [smem:[%s32]]
  %s34 = scalar_lea.smem %s0, 17
  %s35 = sld [smem:[%s34]]
  %s36 = scalar_lea.smem %s0, 18
  %s37 = sld [smem:[%s36]]
  %s38 = scalar_lea.smem %s0, 19
  %s39 = sld [smem:[%s38]]
  %s40 = scalar_lea.smem %s0, 20
  %s41 = sld [smem:[%s40]]
  %s42 = scalar_lea.smem %s0, 21
  %s43 = sld [smem:[%s42]]
  %s44 = scalar_lea.smem %s0, 22
  %s45 = sld [smem:[%s44]]
  %s46 = scalar_lea.smem %s0, 23
  %s47 = sld [smem:[%s46]]
  %s48 = scalar_lea.smem %s0, 24
  %s49 = sld [smem:[%s48]]
  %s50 = scalar_lea.smem %s0, 25
  %s51 = sld [smem:[%s50]]
  %s52 = scalar_lea.smem %s0, 26
  %s53 = sld [smem:[%s52]]
  %s54 = scalar_lea.smem %s0, 27
  %s55 = sld [smem:[%s54]]
  %s56 = scalar_lea.smem %s0, 28
  %s57 = sld [smem:[%s56]]
  %s58 = scalar_lea.smem %s0, 29
  %s59 = sld [smem:[%s58]]
  %s60 = scalar_lea.smem %s0, 30
  %s61 = sld [smem:[%s60]]
  %s62 = scalar_lea.smem %s0, 31
  %s63 = sld [smem:[%s62]]
  %s64 = scalar_lea.smem %s0, 32
  %s65 = sld [smem:[%s64]]
  %s66 = scalar_lea.smem %s0, 33
  %s67 = sld [smem:[%s66]]
  %s68 = scalar_lea.smem %s0, 34
  %s69 = sld [smem:[%s68]]
  %s70 = scalar_lea.smem %s0, 35
  %s71 = sld [smem:[%s70]]
  %s72 = scalar_lea.smem %s0, 36
  %s73 = sld [smem:[%s72]]
  %s74 = sld [smem:[#allocation0]]
  $region154: #{csi_autoencoder_forward.1} parent=0
    _
  %s76 = ssub.s32 1, %s74
  %s77 = scalar_select 0, %s76, %s74
  $region1: #{csi_autoencoder_forward.1} parent=0
    #allocation2 [shape = 'u8[8192]{0}', space=vmem, size = 0x2000, scoped, tag = 'output window, operand 0, single buffered']
    #allocation3 [shape = 's32[1]{0}', space=sflag, size = 0x4, scoped, tag = 'scoped memory for csi_autoencoder_forward.1']
    %78 = vsyncpa [#allocation3], 0
    // Predicated region
    $region2: #{csi_autoencoder_forward.1} parent=1 // pred_check
      _
    $region3: #{csi_autoencoder_forward.1} parent=1 // pred_check_branch
      %80 = sbr.rel (0) target = $region5
    $region4: #{csi_autoencoder_forward.1} parent=1 // pred_region
      _
    $region5: #{csi_autoencoder_forward.1} parent=1 // pred_fallthru
      _
    // Predicated region
    $region6: #{csi_autoencoder_forward.1} parent=1 // pred_check
      _
    $region7: #{csi_autoencoder_forward.1} parent=1 // pred_check_branch
      %82 = sbr.rel (0) target = $region9
    $region8: #{csi_autoencoder_forward.1} parent=1 // pred_region
      _
    $region9: #{csi_autoencoder_forward.1} parent=1 // pred_fallthru
      _
    // Predicated region
    $region10: #{csi_autoencoder_forward.1} parent=1 // pred_check
      _
    $region11: #{csi_autoencoder_forward.1} parent=1 // pred_check_branch
      %84 = sbr.rel (0) target = $region13
    $region12: #{csi_autoencoder_forward.1} parent=1 // pred_region
      _
    $region13: #{csi_autoencoder_forward.1} parent=1 // pred_fallthru
      _
    // Predicated region
    $region14: #{csi_autoencoder_forward.1} parent=1 // pred_check
      _
    $region15: #{csi_autoencoder_forward.1} parent=1 // pred_check_branch
      %86 = sbr.rel (0) target = $region17
    $region16: #{csi_autoencoder_forward.1} parent=1 // pred_region
      _
    $region17: #{csi_autoencoder_forward.1} parent=1 // pred_fallthru
      _
    // Predicated region
    $region18: #{csi_autoencoder_forward.1} parent=1 // pred_check
      _
    $region19: #{csi_autoencoder_forward.1} parent=1 // pred_check_branch
      %88 = sbr.rel (0) target = $region21
    $region20: #{csi_autoencoder_forward.1} parent=1 // pred_region
      _
    $region21: #{csi_autoencoder_forward.1} parent=1 // pred_fallthru
      _
    // Predicated region
    $region22: #{csi_autoencoder_forward.1} parent=1 // pred_check
      _
    $region23: #{csi_autoencoder_forward.1} parent=1 // pred_check_branch
      %90 = sbr.rel (0) target = $region25
    $region24: #{csi_autoencoder_forward.1} parent=1 // pred_region
      _
    $region25: #{csi_autoencoder_forward.1} parent=1 // pred_fallthru
      _
    // Predicated region
    $region26: #{csi_autoencoder_forward.1} parent=1 // pred_check
      _
    $region27: #{csi_autoencoder_forward.1} parent=1 // pred_check_branch
      %92 = sbr.rel (0) target = $region29
    $region28: #{csi_autoencoder_forward.1} parent=1 // pred_region
      _
    $region29: #{csi_autoencoder_forward.1} parent=1 // pred_fallthru
      _
    // Predicated region
    $region30: #{csi_autoencoder_forward.1} parent=1 // pred_check
      _
    $region31: #{csi_autoencoder_forward.1} parent=1 // pred_check_branch
      %94 = sbr.rel (0) target = $region33
    $region32: #{csi_autoencoder_forward.1} parent=1 // pred_region
      _
    $region33: #{csi_autoencoder_forward.1} parent=1 // pred_fallthru
      _
    // Predicated region
    $region34: #{csi_autoencoder_forward.1} parent=1 // pred_check
      _
    $region35: #{csi_autoencoder_forward.1} parent=1 // pred_check_branch
      %96 = sbr.rel (0) target = $region37
    $region36: #{csi_autoencoder_forward.1} parent=1 // pred_region
      _
    $region37: #{csi_autoencoder_forward.1} parent=1 // pred_fallthru
      _
    // Predicated region
    $region38: #{csi_autoencoder_forward.1} parent=1 // pred_check
      _
    $region39: #{csi_autoencoder_forward.1} parent=1 // pred_check_branch
      %98 = sbr.rel (0) target = $region41
    $region40: #{csi_autoencoder_forward.1} parent=1 // pred_region
      _
    $region41: #{csi_autoencoder_forward.1} parent=1 // pred_fallthru
      _
    // Predicated region
    $region42: #{csi_autoencoder_forward.1} parent=1 // pred_check
      _
    $region43: #{csi_autoencoder_forward.1} parent=1 // pred_check_branch
      %100 = sbr.rel (0) target = $region45
    $region44: #{csi_autoencoder_forward.1} parent=1 // pred_region
      _
    $region45: #{csi_autoencoder_forward.1} parent=1 // pred_fallthru
      _
    // Predicated region
    $region46: #{csi_autoencoder_forward.1} parent=1 // pred_check
      _
    $region47: #{csi_autoencoder_forward.1} parent=1 // pred_check_branch
      %102 = sbr.rel (0) target = $region49
    $region48: #{csi_autoencoder_forward.1} parent=1 // pred_region
      _
    $region49: #{csi_autoencoder_forward.1} parent=1 // pred_fallthru
      _
    // Predicated region
    $region50: #{csi_autoencoder_forward.1} parent=1 // pred_check
      _
    $region51: #{csi_autoencoder_forward.1} parent=1 // pred_check_branch
      %104 = sbr.rel (0) target = $region53
    $region52: #{csi_autoencoder_forward.1} parent=1 // pred_region
      _
    $region53: #{csi_autoencoder_forward.1} parent=1 // pred_fallthru
      _
    // Predicated region
    $region54: #{csi_autoencoder_forward.1} parent=1 // pred_check
      _
    $region55: #{csi_autoencoder_forward.1} parent=1 // pred_check_branch
      %106 = sbr.rel (0) target = $region57
    $region56: #{csi_autoencoder_forward.1} parent=1 // pred_region
      _
    $region57: #{csi_autoencoder_forward.1} parent=1 // pred_fallthru
      _
    // Predicated region
    $region58: #{csi_autoencoder_forward.1} parent=1 // pred_check
      _
    $region59: #{csi_autoencoder_forward.1} parent=1 // pred_check_branch
      %108 = sbr.rel (0) target = $region61
    $region60: #{csi_autoencoder_forward.1} parent=1 // pred_region
      _
    $region61: #{csi_autoencoder_forward.1} parent=1 // pred_fallthru
      _
    // Predicated region
    $region62: #{csi_autoencoder_forward.1} parent=1 // pred_check
      _
    $region63: #{csi_autoencoder_forward.1} parent=1 // pred_check_branch
      %110 = sbr.rel (0) target = $region65
    $region64: #{csi_autoencoder_forward.1} parent=1 // pred_region
      _
    $region65: #{csi_autoencoder_forward.1} parent=1 // pred_fallthru
      _
    // Predicated region
    $region66: #{csi_autoencoder_forward.1} parent=1 // pred_check
      _
    $region67: #{csi_autoencoder_forward.1} parent=1 // pred_check_branch
      %112 = sbr.rel (0) target = $region69
    $region68: #{csi_autoencoder_forward.1} parent=1 // pred_region
      _
    $region69: #{csi_autoencoder_forward.1} parent=1 // pred_fallthru
      _
    // Predicated region
    $region70: #{csi_autoencoder_forward.1} parent=1 // pred_check
      _
    $region71: #{csi_autoencoder_forward.1} parent=1 // pred_check_branch
      %114 = sbr.rel (0) target = $region73
    $region72: #{csi_autoencoder_forward.1} parent=1 // pred_region
      _
    $region73: #{csi_autoencoder_forward.1} parent=1 // pred_fallthru
      _
    // Predicated region
    $region74: #{csi_autoencoder_forward.1} parent=1 // pred_check
      _
    $region75: #{csi_autoencoder_forward.1} parent=1 // pred_check_branch
      %116 = sbr.rel (0) target = $region77
    $region76: #{csi_autoencoder_forward.1} parent=1 // pred_region
      _
    $region77: #{csi_autoencoder_forward.1} parent=1 // pred_fallthru
      _
    // Predicated region
    $region78: #{csi_autoencoder_forward.1} parent=1 // pred_check
      _
    $region79: #{csi_autoencoder_forward.1} parent=1 // pred_check_branch
      %118 = sbr.rel (0) target = $region81
    $region80: #{csi_autoencoder_forward.1} parent=1 // pred_region
      _
    $region81: #{csi_autoencoder_forward.1} parent=1 // pred_fallthru
      _
    // Predicated region
    $region82: #{csi_autoencoder_forward.1} parent=1 // pred_check
      _
    $region83: #{csi_autoencoder_forward.1} parent=1 // pred_check_branch
      %120 = sbr.rel (0) target = $region85
    $region84: #{csi_autoencoder_forward.1} parent=1 // pred_region
      _
    $region85: #{csi_autoencoder_forward.1} parent=1 // pred_fallthru
      _
    // Predicated region
    $region86: #{csi_autoencoder_forward.1} parent=1 // pred_check
      _
    $region87: #{csi_autoencoder_forward.1} parent=1 // pred_check_branch
      %122 = sbr.rel (0) target = $region89
    $region88: #{csi_autoencoder_forward.1} parent=1 // pred_region
      _
    $region89: #{csi_autoencoder_forward.1} parent=1 // pred_fallthru
      _
    // Predicated region
    $region90: #{csi_autoencoder_forward.1} parent=1 // pred_check
      _
    $region91: #{csi_autoencoder_forward.1} parent=1 // pred_check_branch
      %124 = sbr.rel (0) target = $region93
    $region92: #{csi_autoencoder_forward.1} parent=1 // pred_region
      _
    $region93: #{csi_autoencoder_forward.1} parent=1 // pred_fallthru
      _
    // Predicated region
    $region94: #{csi_autoencoder_forward.1} parent=1 // pred_check
      _
    $region95: #{csi_autoencoder_forward.1} parent=1 // pred_check_branch
      %126 = sbr.rel (0) target = $region97
    $region96: #{csi_autoencoder_forward.1} parent=1 // pred_region
      _
    $region97: #{csi_autoencoder_forward.1} parent=1 // pred_fallthru
      _
    // Predicated region
    $region98: #{csi_autoencoder_forward.1} parent=1 // pred_check
      _
    $region99: #{csi_autoencoder_forward.1} parent=1 // pred_check_branch
      %128 = sbr.rel (0) target = $region101
    $region100: #{csi_autoencoder_forward.1} parent=1 // pred_region
      _
    $region101: #{csi_autoencoder_forward.1} parent=1 // pred_fallthru
      _
    // Predicated region
    $region102: #{csi_autoencoder_forward.1} parent=1 // pred_check
      _
    $region103: #{csi_autoencoder_forward.1} parent=1 // pred_check_branch
      %130 = sbr.rel (0) target = $region105
    $region104: #{csi_autoencoder_forward.1} parent=1 // pred_region
      _
    $region105: #{csi_autoencoder_forward.1} parent=1 // pred_fallthru
      _
    // Predicated region
    $region106: #{csi_autoencoder_forward.1} parent=1 // pred_check
      _
    $region107: #{csi_autoencoder_forward.1} parent=1 // pred_check_branch
      %132 = sbr.rel (0) target = $region109
    $region108: #{csi_autoencoder_forward.1} parent=1 // pred_region
      _
    $region109: #{csi_autoencoder_forward.1} parent=1 // pred_fallthru
      _
    // Predicated region
    $region110: #{csi_autoencoder_forward.1} parent=1 // pred_check
      _
    $region111: #{csi_autoencoder_forward.1} parent=1 // pred_check_branch
      %134 = sbr.rel (0) target = $region113
    $region112: #{csi_autoencoder_forward.1} parent=1 // pred_region
      _
    $region113: #{csi_autoencoder_forward.1} parent=1 // pred_fallthru
      _
    // Predicated region
    $region114: #{csi_autoencoder_forward.1} parent=1 // pred_check
      _
    $region115: #{csi_autoencoder_forward.1} parent=1 // pred_check_branch
      %136 = sbr.rel (0) target = $region117
    $region116: #{csi_autoencoder_forward.1} parent=1 // pred_region
      _
    $region117: #{csi_autoencoder_forward.1} parent=1 // pred_fallthru
      _
    // Predicated region
    $region118: #{csi_autoencoder_forward.1} parent=1 // pred_check
      _
    $region119: #{csi_autoencoder_forward.1} parent=1 // pred_check_branch
      %138 = sbr.rel (0) target = $region121
    $region120: #{csi_autoencoder_forward.1} parent=1 // pred_region
      _
    $region121: #{csi_autoencoder_forward.1} parent=1 // pred_fallthru
      _
    // Predicated region
    $region122: #{csi_autoencoder_forward.1} parent=1 // pred_check
      _
    $region123: #{csi_autoencoder_forward.1} parent=1 // pred_check_branch
      %140 = sbr.rel (0) target = $region125
    $region124: #{csi_autoencoder_forward.1} parent=1 // pred_region
      _
    $region125: #{csi_autoencoder_forward.1} parent=1 // pred_fallthru
      _
    // Predicated region
    $region126: #{csi_autoencoder_forward.1} parent=1 // pred_check
      _
    $region127: #{csi_autoencoder_forward.1} parent=1 // pred_check_branch
      %142 = sbr.rel (0) target = $region129
    $region128: #{csi_autoencoder_forward.1} parent=1 // pred_region
      _
    $region129: #{csi_autoencoder_forward.1} parent=1 // pred_fallthru
      _
    // Predicated region
    $region130: #{csi_autoencoder_forward.1} parent=1 // pred_check
      _
    $region131: #{csi_autoencoder_forward.1} parent=1 // pred_check_branch
      %144 = sbr.rel (0) target = $region133
    $region132: #{csi_autoencoder_forward.1} parent=1 // pred_region
      _
    $region133: #{csi_autoencoder_forward.1} parent=1 // pred_fallthru
      _
    // Predicated region
    $region134: #{csi_autoencoder_forward.1} parent=1 // pred_check
      _
    $region135: #{csi_autoencoder_forward.1} parent=1 // pred_check_branch
      %146 = sbr.rel (0) target = $region137
    $region136: #{csi_autoencoder_forward.1} parent=1 // pred_region
      _
    $region137: #{csi_autoencoder_forward.1} parent=1 // pred_fallthru
      _
    // Predicated region
    $region138: #{csi_autoencoder_forward.1} parent=1 // pred_check
      _
    $region139: #{csi_autoencoder_forward.1} parent=1 // pred_check_branch
      %148 = sbr.rel (0) target = $region141
    $region140: #{csi_autoencoder_forward.1} parent=1 // pred_region
      _
    $region141: #{csi_autoencoder_forward.1} parent=1 // pred_fallthru
      _
    // Predicated region
    $region142: #{csi_autoencoder_forward.1} parent=1 // pred_check
      _
    $region143: #{csi_autoencoder_forward.1} parent=1 // pred_check_branch
      %150 = sbr.rel (0) target = $region145
    $region144: #{csi_autoencoder_forward.1} parent=1 // pred_region
      _
    $region145: #{csi_autoencoder_forward.1} parent=1 // pred_fallthru
      _
    %v152 = vld [vmem:[%s5] sm:$0xff]
    %v153 = vld [vmem:[%s5 + $0x8] sm:$0xff]
    %v154 = vld [vmem:[%s7] sm:$0xff]
    %v155 = vld [vmem:[%s7 + $0x8] sm:$0xff]
    %v156 = vld [vmem:[%s9] sm:$0xff]
    %v157 = vld [vmem:[%s9 + $0x8] sm:$0xff]
    %v158 = vld [vmem:[%s9 + $0x10] sm:$0xff]
    %v159 = vld [vmem:[%s9 + $0x18] sm:$0xff]
    %v160 = vld [vmem:[%s9 + $0x20] sm:$0xff]
    %v161 = vld [vmem:[%s9 + $0x28] sm:$0xff]
    %v162 = vld [vmem:[%s9 + $0x30] sm:$0xff]
    %v163 = vld [vmem:[%s9 + $0x38] sm:$0xff]
    %v164 = vld [vmem:[%s11] sm:$0xff]
    %v165 = vld [vmem:[%s11 + $0x8] sm:$0xff]
    %v166 = vld [vmem:[%s11 + $0x10] sm:$0xff]
    %v167 = vld [vmem:[%s11 + $0x18] sm:$0xff]
    %v168 = vld [vmem:[%s11 + $0x20] sm:$0xff]
    %v169 = vld [vmem:[%s11 + $0x28] sm:$0xff]
    %v170 = vld [vmem:[%s11 + $0x30] sm:$0xff]
    %v171 = vld [vmem:[%s11 + $0x38] sm:$0xff]
    %v172 = vld [vmem:[%s1] sm:$0xff]
    %v173 = vld [vmem:[%s1 + $0x8] sm:$0xff]
    %v174 = vlaneseq
    %v175 = vand.u32 %v174, 127
    %176 = vset.pattern.permute.xlu0 0
    %177 = vperm.xlu0 %176, %v172
    %v178 = vpop.permute.xlu0 %177
    %179 = vset.pattern.permute.xlu0 0
    %180 = vperm.xlu0 %179, %v173
    %v181 = vpop.permute.xlu0 %180
    %vm182 = vcmp.eq.s32.totalorder %v175, %v178
    %vm183 = vcmp.eq.s32.totalorder %v175, %v181
    %v184 = vsel %vm182, 1, 0
    %v185 = vsel %vm183, 1, 0
    %v186 = vcvt.s32.f32 %v184
    %v187 = vcvt.s32.f32 %v185
    %v188 = vld [vmem:[%s3] sm:$0xff]
    %v189 = vld [vmem:[%s3 + $0x8] sm:$0xff]
    %vm190 = vcmask 130048
    %v192 = vsel %vm190, %v186, 0
    %v195 = vsel %vm190, %v187, 0
    %197 = vmatprep.subr.mxu0 0.0
    %198 = vmatpush1.msra.mxu0 %v188
    %199 = vmatprep.subr.mxu0 0.0
    %200 = vmatpush1.msra.mxu0 %v189
    %201 = vmatprep.subr.mxu0 0.0
    %202 = vmatpush1.msra.mxu0 0.0
    %203 = vmatprep.subr.mxu0 0.0
    %204 = vmatpush1.msra.mxu0 0.0
    %205 = vmatprep.subr.mxu0 0.0
    %206 = vmatpush1.msra.mxu0 0.0
    %207 = vmatprep.subr.mxu0 0.0
    %208 = vmatpush1.msra.mxu0 0.0
    %209 = vmatprep.subr.mxu0 0.0
    %210 = vmatpush1.msra.mxu0 0.0
    %211 = vmatprep.subr.mxu0 0.0
    %212 = vmatpush1.msra.mxu0 0.0
    %213 = vmatprep.subr.mxu0 0.0
    %214 = vmatpush1.msra.mxu0 0.0
    %215 = vmatprep.subr.mxu0 0.0
    %216 = vmatpush1.msra.mxu0 0.0
    %217 = vmatprep.subr.mxu0 0.0
    %218 = vmatpush1.msra.mxu0 0.0
    %219 = vmatprep.subr.mxu0 0.0
    %220 = vmatpush1.msra.mxu0 0.0
    %221 = vmatprep.subr.mxu0 0.0
    %222 = vmatpush1.msra.mxu0 0.0
    %223 = vmatprep.subr.mxu0 0.0
    %224 = vmatpush1.msra.mxu0 0.0
    %225 = vmatprep.subr.mxu0 0.0
    %226 = vmatpush1.msra.mxu0 0.0
    %227 = vmatprep.subr.mxu0 0.0
    %228 = vmatpush1.msra.mxu0 0.0
    %229 = vmatprep.subr.mxu0 0.0
    %230 = vmatpush1.msra.mxu0 0.0
    %231 = vmatprep.subr.mxu0 0.0
    %232 = vmatpush1.msra.mxu0 0.0
    %233 = vmatprep.subr.mxu0 0.0
    %234 = vmatpush1.msra.mxu0 0.0
    %235 = vmatprep.subr.mxu0 0.0
    %236 = vmatpush1.msra.mxu0 0.0
    %237 = vmatprep.subr.mxu0 0.0
    %238 = vmatpush1.msra.mxu0 0.0
    %239 = vmatprep.subr.mxu0 0.0
    %240 = vmatpush1.msra.mxu0 0.0
    %241 = vmatprep.subr.mxu0 0.0
    %242 = vmatpush1.msra.mxu0 0.0
    %243 = vmatprep.subr.mxu0 0.0
    %244 = vmatpush1.msra.mxu0 0.0
    %245 = vmatprep.subr.mxu0 0.0
    %246 = vmatpush1.msra.mxu0 0.0
    %247 = vmatprep.subr.mxu0 0.0
    %248 = vmatpush1.msra.mxu0 0.0
    %249 = vmatprep.subr.mxu0 0.0
    %250 = vmatpush1.msra.mxu0 0.0
    %251 = vmatprep.subr.mxu0 0.0
    %252 = vmatpush1.msra.mxu0 0.0
    %253 = vmatprep.subr.mxu0 0.0
    %254 = vmatpush1.msra.mxu0 0.0
    %255 = vmatprep.subr.mxu0 0.0
    %256 = vmatpush1.msra.mxu0 0.0
    %257 = vmatprep.subr.mxu0 0.0
    %258 = vmatpush1.msra.mxu0 0.0
    %259 = vmatprep.subr.mxu0 0.0
    %260 = vmatpush1.msra.mxu0 0.0
    %261 = vmatprep.mubr.f32.mxu0 0.0
    %262 = vmatmul.mubr.f32.gmra.mrb[0].mxu0 %v192
    %v263 = vpop.f32.mrb[0].mxu0
    %v264 = vadd.f32 0.0, %v263
    %v265 = vpop.f32.mrb[0].mxu0
    %266 = vmatprep.mubr.f32.mxu0 0.0
    %267 = vmatmul.mubr.f32.gmra.mrb[0].mxu0 %v195
    %v268 = vpop.f32.mrb[0].mxu0
    %v269 = vadd.f32 0.0, %v268
    %v270 = vpop.f32.mrb[0].mxu0
    %271 = vdwg.mxu0
    %v272 = vmul.f32 %v264, 5.656854
    %v273 = vmul.f32 %v269, 5.656854
    %v274 = vadd.f32 %v272, %v152
    %v275 = vadd.f32 %v273, %v153
    %v276 = vld [vmem:[%s13] sm:$0xf]
    %v277 = vld [vmem:[%s13 + $0x4] sm:$0xf]
    %v278 = vld [vmem:[%s13 + $0x8] sm:$0xf]
    %v279 = vld [vmem:[%s13 + $0xc] sm:$0xf]
    %v280 = vld [vmem:[%s15] sm:$0x1]
    %v281 = vld [vmem:[%s17] sm:$0xf]
    %v282 = vld [vmem:[%s17 + $0x4] sm:$0xf]
    %v283 = vld [vmem:[%s17 + $0x8] sm:$0xf]
    %v284 = vld [vmem:[%s17 + $0xc] sm:$0xf]
    %v285 = vld [vmem:[%s19] sm:$0x1]
    %v286 = vld [vmem:[%s21] sm:$0x1]
    %v287 = vld [vmem:[%s23] sm:$0x1]
    %v288 = vld [vmem:[%s25] sm:$0xf]
    %v289 = vld [vmem:[%s25 + $0x4] sm:$0xf]
    %v290 = vld [vmem:[%s25 + $0x8] sm:$0xf]
    %v291 = vld [vmem:[%s25 + $0xc] sm:$0xf]
    %v292 = vld [vmem:[%s27] sm:$0x1]
    %v293 = vld [vmem:[%s29] sm:$0xf]
    %v294 = vld [vmem:[%s29 + $0x4] sm:$0xf]
    %v295 = vld [vmem:[%s29 + $0x8] sm:$0xf]
    %v296 = vld [vmem:[%s29 + $0xc] sm:$0xf]
    %v297 = vld [vmem:[%s29 + $0x10] sm:$0xf]
    %v298 = vld [vmem:[%s29 + $0x14] sm:$0xf]
    %v299 = vld [vmem:[%s29 + $0x18] sm:$0xf]
    %v300 = vld [vmem:[%s29 + $0x1c] sm:$0xf]
    %v301 = vld [vmem:[%s31] sm:$0x1]
    %v302 = vld [vmem:[%s33] sm:$0x1]
    %v303 = vld [vmem:[%s35] sm:$0x1]
    %v304 = vpack.c.bf16 %v275, %v274
    %v306 = vlaneseq
    %v307 = vshrl.u32 %v306, 7
    %v308 = vsub.s32 0, %v307
    %v309 = vrot.slane %v280, %v308
    %v315 = vunpack.c.l.b16 %v276
    %v316 = vunpack.c.l.b16 %v277
    %v317 = vunpack.c.l.b16 %v278
    %v318 = vunpack.c.l.b16 %v279
    %v319 = vpack.c.b16 %v316, %v315
    %v320 = vpack.c.b16 %v318, %v317
    %vm323 = vcmask 261120
    %v325 = vsel %vm323, %v304, 0
    %327 = vmatprep.subr.bf16.mxu0 0
    %328 = vmatpush1.bf16.msra.mxu0 %v319
    %329 = vmatprep.subr.bf16.mxu0 0
    %330 = vmatpush1.bf16.msra.mxu0 %v320
    %331 = vmatprep.subr.bf16.mxu0 0
    %332 = vmatpush1.bf16.msra.mxu0 0
    %333 = vmatprep.subr.bf16.mxu0 0
    %334 = vmatpush1.bf16.msra.mxu0 0
    %335 = vmatprep.subr.bf16.mxu0 0
    %336 = vmatpush1.bf16.msra.mxu0 0
    %337 = vmatprep.subr.bf16.mxu0 0
    %338 = vmatpush1.bf16.msra.mxu0 0
    %339 = vmatprep.subr.bf16.mxu0 0
    %340 = vmatpush1.bf16.msra.mxu0 0
    %341 = vmatprep.subr.bf16.mxu0 0
    %342 = vmatpush1.bf16.msra.mxu0 0
    %343 = vmatprep.subr.bf16.mxu0 0
    %344 = vmatpush1.bf16.msra.mxu0 0
    %345 = vmatprep.subr.bf16.mxu0 0
    %346 = vmatpush1.bf16.msra.mxu0 0
    %347 = vmatprep.subr.bf16.mxu0 0
    %348 = vmatpush1.bf16.msra.mxu0 0
    %349 = vmatprep.subr.bf16.mxu0 0
    %350 = vmatpush1.bf16.msra.mxu0 0
    %351 = vmatprep.subr.bf16.mxu0 0
    %352 = vmatpush1.bf16.msra.mxu0 0
    %353 = vmatprep.subr.bf16.mxu0 0
    %354 = vmatpush1.bf16.msra.mxu0 0
    %355 = vmatprep.subr.bf16.mxu0 0
    %356 = vmatpush1.bf16.msra.mxu0 0
    %357 = vmatprep.subr.bf16.mxu0 0
    %358 = vmatpush1.bf16.msra.mxu0 0
    %359 = vmatprep.mubr.bf16.mxu0 0
    %360 = vmatmul.mubr.bf16.gmra.mrb[0].mxu0 %v325
    %v361 = vpop.f32.mrb[0].mxu0
    %v362 = vadd.f32 %v309, %v361
    %v363 = vpop.f32.mrb[0].mxu0
    %v364 = vpop.f32.mrb[0].mxu0
    %v365 = vadd.f32 %v309, %v364
    %v366 = vpop.f32.mrb[0].mxu0
    %367 = vdwg.mxu0
    %376 = vrot.lane.b32.xlu0 %v156, 32
    %v377 = vpop.permute.xlu0 %376
    %378 = vrot.lane.b32.xlu0 %v157, 32
    %v379 = vpop.permute.xlu0 %378
    %380 = vrot.lane.b32.xlu0 %v158, 32
    %v381 = vpop.permute.xlu0 %380
    %382 = vrot.lane.b32.xlu0 %v159, 32
    %v383 = vpop.permute.xlu0 %382
    %384 = vrot.lane.b32.xlu0 %v160, 32
    %v385 = vpop.permute.xlu0 %384
    %386 = vrot.lane.b32.xlu0 %v161, 32
    %v387 = vpop.permute.xlu0 %386
    %388 = vrot.lane.b32.xlu0 %v162, 32
    %v389 = vpop.permute.xlu0 %388
    %390 = vrot.lane.b32.xlu0 %v163, 32
    %v391 = vpop.permute.xlu0 %390
    %v400 = vmul.f32 %v362, %v377
    %v401 = vmul.f32 %v365, %v379
    %v402 = vmul.f32 %v362, %v381
    %v403 = vmul.f32 %v365, %v383
    %v404 = vmul.f32 %v362, %v385
    %v405 = vmul.f32 %v365, %v387
    %v406 = vmul.f32 %v362, %v389
    %v407 = vmul.f32 %v365, %v391
    %v408 = vpack.c.bf16 %v401, %v400
    %v409 = vpack.c.bf16 %v403, %v402
    %v410 = vpack.c.bf16 %v405, %v404
    %v411 = vpack.c.bf16 %v407, %v406
    %412 = vrot.lane.b32.xlu0 %v156, 64
    %v413 = vpop.permute.xlu0 %412
    %414 = vrot.lane.b32.xlu0 %v157, 64
    %v415 = vpop.permute.xlu0 %414
    %416 = vrot.lane.b32.xlu0 %v158, 64
    %v417 = vpop.permute.xlu0 %416
    %418 = vrot.lane.b32.xlu0 %v159, 64
    %v419 = vpop.permute.xlu0 %418
    %420 = vrot.lane.b32.xlu0 %v160, 64
    %v421 = vpop.permute.xlu0 %420
    %422 = vrot.lane.b32.xlu0 %v161, 64
    %v423 = vpop.permute.xlu0 %422
    %424 = vrot.lane.b32.xlu0 %v162, 64
    %v425 = vpop.permute.xlu0 %424
    %426 = vrot.lane.b32.xlu0 %v163, 64
    %v427 = vpop.permute.xlu0 %426
    %v436 = vmul.f32 %v362, %v413
    %v437 = vmul.f32 %v365, %v415
    %v438 = vmul.f32 %v362, %v417
    %v439 = vmul.f32 %v365, %v419
    %v440 = vmul.f32 %v362, %v421
    %v441 = vmul.f32 %v365, %v423
    %v442 = vmul.f32 %v362, %v425
    %v443 = vmul.f32 %v365, %v427
    %v444 = vpack.c.bf16 %v437, %v436
    %v445 = vpack.c.bf16 %v439, %v438
    %v446 = vpack.c.bf16 %v441, %v440
    %v447 = vpack.c.bf16 %v443, %v442
    %v448 = vpack.c.bf16 %v365, %v362
    %453 = vrot.lane.b32.xlu0 %v408, 96
    %v454 = vpop.permute.xlu0 %453
    %455 = vrot.lane.b32.xlu0 %v409, 96
    %v456 = vpop.permute.xlu0 %455
    %457 = vrot.lane.b32.xlu0 %v410, 96
    %v458 = vpop.permute.xlu0 %457
    %459 = vrot.lane.b32.xlu0 %v411, 96
    %v460 = vpop.permute.xlu0 %459
    %v462 = vsel %vm323, %v448, 0
    %v465 = vsel %vm323, %v454, 0
    %v468 = vsel %vm323, %v456, 0
    %v471 = vsel %vm323, %v458, 0
    %v474 = vsel %vm323, %v460, 0
    %476 = vmatprep.subr.bf16.mxu0 0
    %477 = vmatpush1.bf16.xpose.msra.mxu0 %v465
    %478 = vmatprep.subr.bf16.mxu0 0
    %479 = vmatpush1.bf16.xpose.msra.mxu0 %v468
    %480 = vmatprep.subr.bf16.mxu0 0
    %481 = vmatpush1.bf16.xpose.msra.mxu0 %v471
    %482 = vmatprep.subr.bf16.mxu0 0
    %483 = vmatpush1.bf16.xpose.msra.mxu0 %v474
    %484 = vmatprep.subr.bf16.mxu0 0
    %485 = vmatpush1.bf16.xpose.msra.mxu0 0
    %486 = vmatprep.subr.bf16.mxu0 0
    %487 = vmatpush1.bf16.xpose.msra.mxu0 0
    %488 = vmatprep.subr.bf16.mxu0 0
    %489 = vmatpush1.bf16.xpose.msra.mxu0 0
    %490 = vmatprep.subr.bf16.mxu0 0
    %491 = vmatpush1.bf16.xpose.msra.mxu0 0
    %492 = vmatprep.subr.bf16.mxu0 0
    %493 = vmatpush1.bf16.xpose.msra.mxu0 0
    %494 = vmatprep.subr.bf16.mxu0 0
    %495 = vmatpush1.bf16.xpose.msra.mxu0 0
    %496 = vmatprep.subr.bf16.mxu0 0
    %497 = vmatpush1.bf16.xpose.msra.mxu0 0
    %498 = vmatprep.subr.bf16.mxu0 0
    %499 = vmatpush1.bf16.xpose.msra.mxu0 0
    %500 = vmatprep.subr.bf16.mxu0 0
    %501 = vmatpush1.bf16.xpose.msra.mxu0 0
    %502 = vmatprep.subr.bf16.mxu0 0
    %503 = vmatpush1.bf16.xpose.msra.mxu0 0
    %504 = vmatprep.subr.bf16.mxu0 0
    %505 = vmatpush1.bf16.xpose.msra.mxu0 0
    %506 = vmatprep.subr.bf16.mxu0 0
    %507 = vmatpush1.bf16.xpose.msra.mxu0 0
    %508 = vmatprep.mubr.bf16.mxu0 0
    %509 = vmatmul.mubr.bf16.gmra.mrb[0].mxu0 %v462
    %v510 = vpop.f32.mrb[0].mxu0
    %v511 = vadd.f32 0.0, %v510
    %v512 = vpop.f32.mrb[0].mxu0
    %v513 = vpop.f32.mrb[0].mxu0
    %v514 = vadd.f32 0.0, %v513
    %v515 = vpop.f32.mrb[0].mxu0
    %516 = vdwg.mxu0
    %v517 = vmul.f32 %v511, 0.35355338
    %v518 = vmul.f32 %v514, 0.35355338
    %v519 = vadd.f32 %v517, %v154
    %v520 = vadd.f32 %v518, %v155
    %vm521 = vcmask 523264
    %v522 = vsel %vm521, %v519, -inf
    %523 = vmax.xlane.f32.xlu0 %v522
    %v524 = vpop.xlane.xlu0 %523
    %v525 = vsel %vm521, %v520, -inf
    %526 = vmax.xlane.f32.xlu0 %v525
    %v527 = vpop.xlane.xlu0 %526
    %v528 = vsub.f32 %v519, %v524
    %v529 = vsub.f32 %v520, %v527
    %v530 = vmul.f32 %v528, 1.442695
    %v531 = vpow.pop %v530
    %v532 = vmul.f32 %v529, 1.442695
    %v533 = vpow.pop %v532
    %v535 = vsel %vm521, %v531, 0
    %v538 = vsel %vm521, %v533, 0
    %540 = vmatprep.subr.mxu0 0.0
    %541 = vmatpush1.msra.mxu0 %v164
    %542 = vmatprep.subr.mxu0 0.0
    %543 = vmatpush1.msra.mxu0 %v165
    %544 = vmatprep.subr.mxu0 0.0
    %545 = vmatpush1.msra.mxu0 %v166
    %546 = vmatprep.subr.mxu0 0.0
    %547 = vmatpush1.msra.mxu0 %v167
    %548 = vmatprep.subr.mxu0 0.0
    %549 = vmatpush1.msra.mxu0 %v168
    %550 = vmatprep.subr.mxu0 0.0
    %551 = vmatpush1.msra.mxu0 %v169
    %552 = vmatprep.subr.mxu0 0.0
    %553 = vmatpush1.msra.mxu0 %v170
    %554 = vmatprep.subr.mxu0 0.0
    %555 = vmatpush1.msra.mxu0 %v171
    %556 = vmatprep.subr.mxu0 0.0
    %557 = vmatpush1.msra.mxu0 0.0
    %558 = vmatprep.subr.mxu0 0.0
    %559 = vmatpush1.msra.mxu0 0.0
    %560 = vmatprep.subr.mxu0 0.0
    %561 = vmatpush1.msra.mxu0 0.0
    %562 = vmatprep.subr.mxu0 0.0
    %563 = vmatpush1.msra.mxu0 0.0
    %564 = vmatprep.subr.mxu0 0.0
    %565 = vmatpush1.msra.mxu0 0.0
    %566 = vmatprep.subr.mxu0 0.0
    %567 = vmatpush1.msra.mxu0 0.0
    %568 = vmatprep.subr.mxu0 0.0
    %569 = vmatpush1.msra.mxu0 0.0
    %570 = vmatprep.subr.mxu0 0.0
    %571 = vmatpush1.msra.mxu0 0.0
    %572 = vmatprep.subr.mxu0 0.0
    %573 = vmatpush1.msra.mxu0 0.0
    %574 = vmatprep.subr.mxu0 0.0
    %575 = vmatpush1.msra.mxu0 0.0
    %576 = vmatprep.subr.mxu0 0.0
    %577 = vmatpush1.msra.mxu0 0.0
    %578 = vmatprep.subr.mxu0 0.0
    %579 = vmatpush1.msra.mxu0 0.0
    %580 = vmatprep.subr.mxu0 0.0
    %581 = vmatpush1.msra.mxu0 0.0
    %582 = vmatprep.subr.mxu0 0.0
    %583 = vmatpush1.msra.mxu0 0.0
    %584 = vmatprep.subr.mxu0 0.0
    %585 = vmatpush1.msra.mxu0 0.0
    %586 = vmatprep.subr.mxu0 0.0
    %587 = vmatpush1.msra.mxu0 0.0
    %588 = vmatprep.subr.mxu0 0.0
    %589 = vmatpush1.msra.mxu0 0.0
    %590 = vmatprep.subr.mxu0 0.0
    %591 = vmatpush1.msra.mxu0 0.0
    %592 = vmatprep.subr.mxu0 0.0
    %593 = vmatpush1.msra.mxu0 0.0
    %594 = vmatprep.subr.mxu0 0.0
    %595 = vmatpush1.msra.mxu0 0.0
    %596 = vmatprep.subr.mxu0 0.0
    %597 = vmatpush1.msra.mxu0 0.0
    %598 = vmatprep.subr.mxu0 0.0
    %599 = vmatpush1.msra.mxu0 0.0
    %600 = vmatprep.subr.mxu0 0.0
    %601 = vmatpush1.msra.mxu0 0.0
    %602 = vmatprep.subr.mxu0 0.0
    %603 = vmatpush1.msra.mxu0 0.0
    %604 = vmatprep.mubr.f32.mxu0 0.0
    %605 = vmatmul.mubr.f32.gmra.mrb[0].mxu0 %v535
    %v606 = vpop.f32.mrb[0].mxu0
    %v607 = vadd.f32 0.0, %v606
    %v608 = vpop.f32.mrb[0].mxu0
    %609 = vmatprep.mubr.f32.mxu0 0.0
    %610 = vmatmul.mubr.f32.gmra.mrb[0].mxu0 %v538
    %v611 = vpop.f32.mrb[0].mxu0
    %v612 = vadd.f32 0.0, %v611
    %v613 = vpop.f32.mrb[0].mxu0
    %614 = vdwg.mxu0
    %v615 = vrcp.pop %v607
    %v616 = vrcp.pop %v612
    %v617 = vmul.f32 %v531, %v615
    %v618 = vmul.f32 %v533, %v616
    %v619 = vpack.c.bf16 %v618, %v617
    %624 = vrot.lane.b32.xlu0 %v444, 64
    %v625 = vpop.permute.xlu0 %624
    %626 = vrot.lane.b32.xlu0 %v445, 64
    %v627 = vpop.permute.xlu0 %626
    %628 = vrot.lane.b32.xlu0 %v446, 64
    %v629 = vpop.permute.xlu0 %628
    %630 = vrot.lane.b32.xlu0 %v447, 64
    %v631 = vpop.permute.xlu0 %630
    %v637 = vsel %vm521, %v619, 0
    %639 = vmatprep.subr.bf16.mxu0 0
    %640 = vmatpush1.bf16.msra.mxu0 %v625
    %641 = vmatprep.subr.bf16.mxu0 0
    %642 = vmatpush1.bf16.msra.mxu0 %v627
    %643 = vmatprep.subr.bf16.mxu0 0
    %644 = vmatpush1.bf16.msra.mxu0 %v629
    %645 = vmatprep.subr.bf16.mxu0 0
    %646 = vmatpush1.bf16.msra.mxu0 %v631
    %647 = vmatprep.subr.bf16.mxu0 0
    %648 = vmatpush1.bf16.msra.mxu0 0
    %649 = vmatprep.subr.bf16.mxu0 0
    %650 = vmatpush1.bf16.msra.mxu0 0
    %651 = vmatprep.subr.bf16.mxu0 0
    %652 = vmatpush1.bf16.msra.mxu0 0
    %653 = vmatprep.subr.bf16.mxu0 0
    %654 = vmatpush1.bf16.msra.mxu0 0
    %655 = vmatprep.subr.bf16.mxu0 0
    %656 = vmatpush1.bf16.msra.mxu0 0
    %657 = vmatprep.subr.bf16.mxu0 0
    %658 = vmatpush1.bf16.msra.mxu0 0
    %659 = vmatprep.subr.bf16.mxu0 0
    %660 = vmatpush1.bf16.msra.mxu0 0
    %661 = vmatprep.subr.bf16.mxu0 0
    %662 = vmatpush1.bf16.msra.mxu0 0
    %663 = vmatprep.subr.bf16.mxu0 0
    %664 = vmatpush1.bf16.msra.mxu0 0
    %665 = vmatprep.subr.bf16.mxu0 0
    %666 = vmatpush1.bf16.msra.mxu0 0
    %667 = vmatprep.subr.bf16.mxu0 0
    %668 = vmatpush1.bf16.msra.mxu0 0
    %669 = vmatprep.subr.bf16.mxu0 0
    %670 = vmatpush1.bf16.msra.mxu0 0
    %671 = vmatprep.mubr.bf16.mxu0 0
    %672 = vmatmul.mubr.bf16.gmra.mrb[0].mxu0 %v637
    %v673 = vpop.f32.mrb[0].mxu0
    %v674 = vadd.f32 0.0, %v673
    %v675 = vpop.f32.mrb[0].mxu0
    %v676 = vpop.f32.mrb[0].mxu0
    %v677 = vadd.f32 0.0, %v676
    %v678 = vpop.f32.mrb[0].mxu0
    %679 = vdwg.mxu0
    %v680 = vpack.c.bf16 %v677, %v674
    %v682 = vlaneseq
    %v683 = vshrl.u32 %v682, 7
    %v684 = vsub.s32 0, %v683
    %v685 = vrot.slane %v285, %v684
    %v691 = vunpack.c.l.b16 %v281
    %v692 = vunpack.c.l.b16 %v282
    %v693 = vunpack.c.l.b16 %v283
    %v694 = vunpack.c.l.b16 %v284
    %v695 = vpack.c.b16 %v692, %v691
    %v696 = vpack.c.b16 %v694, %v693
    %v700 = vsel %vm323, %v680, 0
    %702 = vmatprep.subr.bf16.mxu0 0
    %703 = vmatpush1.bf16.msra.mxu0 %v695
    %704 = vmatprep.subr.bf16.mxu0 0
    %705 = vmatpush1.bf16.msra.mxu0 %v696
    %706 = vmatprep.subr.bf16.mxu0 0
    %707 = vmatpush1.bf16.msra.mxu0 0
    %708 = vmatprep.subr.bf16.mxu0 0
    %709 = vmatpush1.bf16.msra.mxu0 0
    %710 = vmatprep.subr.bf16.mxu0 0
    %711 = vmatpush1.bf16.msra.mxu0 0
    %712 = vmatprep.subr.bf16.mxu0 0
    %713 = vmatpush1.bf16.msra.mxu0 0
    %714 = vmatprep.subr.bf16.mxu0 0
    %715 = vmatpush1.bf16.msra.mxu0 0
    %716 = vmatprep.subr.bf16.mxu0 0
    %717 = vmatpush1.bf16.msra.mxu0 0
    %718 = vmatprep.subr.bf16.mxu0 0
    %719 = vmatpush1.bf16.msra.mxu0 0
    %720 = vmatprep.subr.bf16.mxu0 0
    %721 = vmatpush1.bf16.msra.mxu0 0
    %722 = vmatprep.subr.bf16.mxu0 0
    %723 = vmatpush1.bf16.msra.mxu0 0
    %724 = vmatprep.subr.bf16.mxu0 0
    %725 = vmatpush1.bf16.msra.mxu0 0
    %726 = vmatprep.subr.bf16.mxu0 0
    %727 = vmatpush1.bf16.msra.mxu0 0
    %728 = vmatprep.subr.bf16.mxu0 0
    %729 = vmatpush1.bf16.msra.mxu0 0
    %730 = vmatprep.subr.bf16.mxu0 0
    %731 = vmatpush1.bf16.msra.mxu0 0
    %732 = vmatprep.subr.bf16.mxu0 0
    %733 = vmatpush1.bf16.msra.mxu0 0
    %734 = vmatprep.mubr.bf16.mxu0 0
    %735 = vmatmul.mubr.bf16.gmra.mrb[0].mxu0 %v700
    %v736 = vpop.f32.mrb[0].mxu0
    %v737 = vadd.f32 %v685, %v736
    %v738 = vpop.f32.mrb[0].mxu0
    %v739 = vpop.f32.mrb[0].mxu0
    %v740 = vadd.f32 %v685, %v739
    %v741 = vpop.f32.mrb[0].mxu0
    %742 = vdwg.mxu0
    %v743 = vadd.f32 %v274, %v737
    %v744 = vadd.f32 %v275, %v740
    %v745 = vsel %vm323, %v743, 0.0
    %746 = vadd.xlane.f32.xlu0 %v745
    %v747 = vpop.xlane.xlu0 %746
    %v748 = vsel %vm323, %v744, 0.0
    %749 = vadd.xlane.f32.xlu0 %v748
    %v750 = vpop.xlane.xlu0 %749
    %v751 = vrcp.pop 32.0
    %v752 = vmul.f32 %v747, %v751
    %v753 = vmul.f32 %v750, %v751
    %v754 = vsub.f32 %v743, %v752
    %v755 = vsub.f32 %v744, %v753
    %v756 = vmul.f32 %v754, %v754
    %v757 = vmul.f32 %v755, %v755
    %v758 = vsel %vm323, %v756, 0.0
    %759 = vadd.xlane.f32.xlu0 %v758
    %v760 = vpop.xlane.xlu0 %759
    %v761 = vsel %vm323, %v757, 0.0
    %762 = vadd.xlane.f32.xlu0 %v761
    %v763 = vpop.xlane.xlu0 %762
    %v764 = vmul.f32 %v760, %v751
    %v765 = vmul.f32 %v763, %v751
    %v766 = vadd.f32 %v764, 1e-05
    %v767 = vadd.f32 %v765, 1e-05
    %v768 = vrsqrt.pop %v766
    %v769 = vrsqrt.pop %v767
    %v770 = vmul.f32 %v754, %v768
    %v771 = vmul.f32 %v755, %v769
    %v773 = vlaneseq
    %v774 = vshrl.u32 %v773, 7
    %v775 = vsub.s32 0, %v774
    %v776 = vrot.slane %v286, %v775
    %v778 = vmul.f32 %v770, %v776
    %v779 = vmul.f32 %v771, %v776
    %v781 = vlaneseq
    %v782 = vshrl.u32 %v781, 7
    %v783 = vsub.s32 0, %v782
    %v784 = vrot.slane %v287, %v783
    %v786 = vadd.f32 %v778, %v784
    %v787 = vadd.f32 %v779, %v784
    %v788 = vpack.c.bf16 %v787, %v786
    %v790 = vlaneseq
    %v791 = vshrl.u32 %v790, 7
    %v792 = vsub.s32 0, %v791
    %v793 = vrot.slane %v292, %v792
    %v799 = vunpack.c.l.b16 %v288
    %v800 = vunpack.c.l.b16 %v289
    %v801 = vunpack.c.l.b16 %v290
    %v802 = vunpack.c.l.b16 %v291
    %v803 = vpack.c.b16 %v800, %v799
    %v804 = vpack.c.b16 %v802, %v801
    %v808 = vsel %vm323, %v788, 0
    %810 = vmatprep.subr.bf16.mxu0 0
    %811 = vmatpush1.bf16.msra.mxu0 %v803
    %812 = vmatprep.subr.bf16.mxu0 0
    %813 = vmatpush1.bf16.msra.mxu0 %v804
    %814 = vmatprep.subr.bf16.mxu0 0
    %815 = vmatpush1.bf16.msra.mxu0 0
    %816 = vmatprep.subr.bf16.mxu0 0
    %817 = vmatpush1.bf16.msra.mxu0 0
    %818 = vmatprep.subr.bf16.mxu0 0
    %819 = vmatpush1.bf16.msra.mxu0 0
    %820 = vmatprep.subr.bf16.mxu0 0
    %821 = vmatpush1.bf16.msra.mxu0 0
    %822 = vmatprep.subr.bf16.mxu0 0
    %823 = vmatpush1.bf16.msra.mxu0 0
    %824 = vmatprep.subr.bf16.mxu0 0
    %825 = vmatpush1.bf16.msra.mxu0 0
    %826 = vmatprep.subr.bf16.mxu0 0
    %827 = vmatpush1.bf16.msra.mxu0 0
    %828 = vmatprep.subr.bf16.mxu0 0
    %829 = vmatpush1.bf16.msra.mxu0 0
    %830 = vmatprep.subr.bf16.mxu0 0
    %831 = vmatpush1.bf16.msra.mxu0 0
    %832 = vmatprep.subr.bf16.mxu0 0
    %833 = vmatpush1.bf16.msra.mxu0 0
    %834 = vmatprep.subr.bf16.mxu0 0
    %835 = vmatpush1.bf16.msra.mxu0 0
    %836 = vmatprep.subr.bf16.mxu0 0
    %837 = vmatpush1.bf16.msra.mxu0 0
    %838 = vmatprep.subr.bf16.mxu0 0
    %839 = vmatpush1.bf16.msra.mxu0 0
    %840 = vmatprep.subr.bf16.mxu0 0
    %841 = vmatpush1.bf16.msra.mxu0 0
    %842 = vmatprep.mubr.bf16.mxu0 0
    %843 = vmatmul.mubr.bf16.gmra.mrb[0].mxu0 %v808
    %v844 = vpop.f32.mrb[0].mxu0
    %v845 = vadd.f32 %v793, %v844
    %v846 = vpop.f32.mrb[0].mxu0
    %v847 = vpop.f32.mrb[0].mxu0
    %v848 = vadd.f32 %v793, %v847
    %v849 = vpop.f32.mrb[0].mxu0
    %850 = vdwg.mxu0
    %v851 = vmax.f32 %v845, 0.0
    %v852 = vmax.f32 %v848, 0.0
    %v853 = vpack.c.bf16 %v852, %v851
    %v855 = vlaneseq
    %v856 = vshrl.u32 %v855, 7
    %v857 = vsub.s32 0, %v856
    %v858 = vrot.slane %v301, %v857
    %v868 = vunpack.c.l.b16 %v293
    %v869 = vunpack.c.l.b16 %v294
    %v870 = vunpack.c.l.b16 %v295
    %v871 = vunpack.c.l.b16 %v296
    %v872 = vunpack.c.l.b16 %v297
    %v873 = vunpack.c.l.b16 %v298
    %v874 = vunpack.c.l.b16 %v299
    %v875 = vunpack.c.l.b16 %v300
    %v876 = vpack.c.b16 %v869, %v868
    %v877 = vpack.c.b16 %v871, %v870
    %v878 = vpack.c.b16 %v873, %v872
    %v879 = vpack.c.b16 %v875, %v874
    %v885 = vsel %vm521, %v853, 0
    %887 = vmatprep.subr.bf16.mxu0 0
    %888 = vmatpush1.bf16.msra.mxu0 %v876
    %889 = vmatprep.subr.bf16.mxu0 0
    %890 = vmatpush1.bf16.msra.mxu0 %v877
    %891 = vmatprep.subr.bf16.mxu0 0
    %892 = vmatpush1.bf16.msra.mxu0 %v878
    %893 = vmatprep.subr.bf16.mxu0 0
    %894 = vmatpush1.bf16.msra.mxu0 %v879
    %895 = vmatprep.subr.bf16.mxu0 0
    %896 = vmatpush1.bf16.msra.mxu0 0
    %897 = vmatprep.subr.bf16.mxu0 0
    %898 = vmatpush1.bf16.msra.mxu0 0
    %899 = vmatprep.subr.bf16.mxu0 0
    %900 = vmatpush1.bf16.msra.mxu0 0
    %901 = vmatprep.subr.bf16.mxu0 0
    %902 = vmatpush1.bf16.msra.mxu0 0
    %903 = vmatprep.subr.bf16.mxu0 0
    %904 = vmatpush1.bf16.msra.mxu0 0
    %905 = vmatprep.subr.bf16.mxu0 0
    %906 = vmatpush1.bf16.msra.mxu0 0
    %907 = vmatprep.subr.bf16.mxu0 0
    %908 = vmatpush1.bf16.msra.mxu0 0
    %909 = vmatprep.subr.bf16.mxu0 0
    %910 = vmatpush1.bf16.msra.mxu0 0
    %911 = vmatprep.subr.bf16.mxu0 0
    %912 = vmatpush1.bf16.msra.mxu0 0
    %913 = vmatprep.subr.bf16.mxu0 0
    %914 = vmatpush1.bf16.msra.mxu0 0
    %915 = vmatprep.subr.bf16.mxu0 0
    %916 = vmatpush1.bf16.msra.mxu0 0
    %917 = vmatprep.subr.bf16.mxu0 0
    %918 = vmatpush1.bf16.msra.mxu0 0
    %919 = vmatprep.mubr.bf16.mxu0 0
    %920 = vmatmul.mubr.bf16.gmra.mrb[0].mxu0 %v885
    %v921 = vpop.f32.mrb[0].mxu0
    %v922 = vadd.f32 %v858, %v921
    %v923 = vpop.f32.mrb[0].mxu0
    %v924 = vpop.f32.mrb[0].mxu0
    %v925 = vadd.f32 %v858, %v924
    %v926 = vpop.f32.mrb[0].mxu0
    %927 = vdwg.mxu0
    %v928 = vadd.f32 %v786, %v922
    %v929 = vadd.f32 %v787, %v925
    %v930 = vsel %vm323, %v928, 0.0
    %931 = vadd.xlane.f32.xlu0 %v930
    %v932 = vpop.xlane.xlu0 %931
    %v933 = vsel %vm323, %v929, 0.0
    %934 = vadd.xlane.f32.xlu0 %v933
    %v935 = vpop.xlane.xlu0 %934
    %v936 = vmul.f32 %v932, %v751
    %v937 = vmul.f32 %v935, %v751
    %v938 = vsub.f32 %v928, %v936
    %v939 = vsub.f32 %v929, %v937
    %v940 = vmul.f32 %v938, %v938
    %v941 = vmul.f32 %v939, %v939
    %v942 = vsel %vm323, %v940, 0.0
    %943 = vadd.xlane.f32.xlu0 %v942
    %v944 = vpop.xlane.xlu0 %943
    %v945 = vsel %vm323, %v941, 0.0
    %946 = vadd.xlane.f32.xlu0 %v945
    %v947 = vpop.xlane.xlu0 %946
    %v948 = vmul.f32 %v944, %v751
    %v949 = vmul.f32 %v947, %v751
    %v950 = vadd.f32 %v948, 1e-05
    %v951 = vadd.f32 %v949, 1e-05
    %v952 = vrsqrt.pop %v950
    %v953 = vrsqrt.pop %v951
    %v954 = vmul.f32 %v938, %v952
    %v955 = vmul.f32 %v939, %v953
    %v957 = vlaneseq
    %v958 = vshrl.u32 %v957, 7
    %v959 = vsub.s32 0, %v958
    %v960 = vrot.slane %v302, %v959
    %v962 = vmul.f32 %v954, %v960
    %v963 = vmul.f32 %v955, %v960
    %v965 = vlaneseq
    %v966 = vshrl.u32 %v965, 7
    %v967 = vsub.s32 0, %v966
    %v968 = vrot.slane %v303, %v967
    %v970 = vadd.f32 %v962, %v968
    %v971 = vadd.f32 %v963, %v968
    %s972 = scalar_lea.vmem %s13, 16
    %v973 = vld [vmem:[%s972] sm:$0xf]
    %v974 = vld [vmem:[%s972 + $0x4] sm:$0xf]
    %v975 = vld [vmem:[%s972 + $0x8] sm:$0xf]
    %v976 = vld [vmem:[%s972 + $0xc] sm:$0xf]
    %s977 = scalar_lea.vmem %s15, 1
    %v978 = vld [vmem:[%s977] sm:$0x1]
    %s979 = scalar_lea.vmem %s17, 16
    %v980 = vld [vmem:[%s979] sm:$0xf]
    %v981 = vld [vmem:[%s979 + $0x4] sm:$0xf]
    %v982 = vld [vmem:[%s979 + $0x8] sm:$0xf]
    %v983 = vld [vmem:[%s979 + $0xc] sm:$0xf]
    %s984 = scalar_lea.vmem %s19, 1
    %v985 = vld [vmem:[%s984] sm:$0x1]
    %s986 = scalar_lea.vmem %s21, 1
    %v987 = vld [vmem:[%s986] sm:$0x1]
    %s988 = scalar_lea.vmem %s23, 1
    %v989 = vld [vmem:[%s988] sm:$0x1]
    %s990 = scalar_lea.vmem %s25, 16
    %v991 = vld [vmem:[%s990] sm:$0xf]
    %v992 = vld [vmem:[%s990 + $0x4] sm:$0xf]
    %v993 = vld [vmem:[%s990 + $0x8] sm:$0xf]
    %v994 = vld [vmem:[%s990 + $0xc] sm:$0xf]
    %s995 = scalar_lea.vmem %s27, 1
    %v996 = vld [vmem:[%s995] sm:$0x1]
    %s997 = scalar_lea.vmem %s29, 32
    %v998 = vld [vmem:[%s997] sm:$0xf]
    %v999 = vld [vmem:[%s997 + $0x4] sm:$0xf]
    %v1000 = vld [vmem:[%s997 + $0x8] sm:$0xf]
    %v1001 = vld [vmem:[%s997 + $0xc] sm:$0xf]
    %v1002 = vld [vmem:[%s997 + $0x10] sm:$0xf]
    %v1003 = vld [vmem:[%s997 + $0x14] sm:$0xf]
    %v1004 = vld [vmem:[%s997 + $0x18] sm:$0xf]
    %v1005 = vld [vmem:[%s997 + $0x1c] sm:$0xf]
    %s1006 = scalar_lea.vmem %s31, 1
    %v1007 = vld [vmem:[%s1006] sm:$0x1]
    %s1008 = scalar_lea.vmem %s33, 1
    %v1009 = vld [vmem:[%s1008] sm:$0x1]
    %s1010 = scalar_lea.vmem %s35, 1
    %v1011 = vld [vmem:[%s1010] sm:$0x1]
    %v1012 = vpack.c.bf16 %v971, %v970
    %v1014 = vlaneseq
    %v1015 = vshrl.u32 %v1014, 7
    %v1016 = vsub.s32 0, %v1015
    %v1017 = vrot.slane %v978, %v1016
    %v1023 = vunpack.c.l.b16 %v973
    %v1024 = vunpack.c.l.b16 %v974
    %v1025 = vunpack.c.l.b16 %v975
    %v1026 = vunpack.c.l.b16 %v976
    %v1027 = vpack.c.b16 %v1024, %v1023
    %v1028 = vpack.c.b16 %v1026, %v1025
    %v1032 = vsel %vm323, %v1012, 0
    %1034 = vmatprep.subr.bf16.mxu0 0
    %1035 = vmatpush1.bf16.msra.mxu0 %v1027
    %1036 = vmatprep.subr.bf16.mxu0 0
    %1037 = vmatpush1.bf16.msra.mxu0 %v1028
    %1038 = vmatprep.subr.bf16.mxu0 0
    %1039 = vmatpush1.bf16.msra.mxu0 0
    %1040 = vmatprep.subr.bf16.mxu0 0
    %1041 = vmatpush1.bf16.msra.mxu0 0
    %1042 = vmatprep.subr.bf16.mxu0 0
    %1043 = vmatpush1.bf16.msra.mxu0 0
    %1044 = vmatprep.subr.bf16.mxu0 0
    %1045 = vmatpush1.bf16.msra.mxu0 0
    %1046 = vmatprep.subr.bf16.mxu0 0
    %1047 = vmatpush1.bf16.msra.mxu0 0
    %1048 = vmatprep.subr.bf16.mxu0 0
    %1049 = vmatpush1.bf16.msra.mxu0 0
    %1050 = vmatprep.subr.bf16.mxu0 0
    %1051 = vmatpush1.bf16.msra.mxu0 0
    %1052 = vmatprep.subr.bf16.mxu0 0
    %1053 = vmatpush1.bf16.msra.mxu0 0
    %1054 = vmatprep.subr.bf16.mxu0 0
    %1055 = vmatpush1.bf16.msra.mxu0 0
    %1056 = vmatprep.subr.bf16.mxu0 0
    %1057 = vmatpush1.bf16.msra.mxu0 0
    %1058 = vmatprep.subr.bf16.mxu0 0
    %1059 = vmatpush1.bf16.msra.mxu0 0
    %1060 = vmatprep.subr.bf16.mxu0 0
    %1061 = vmatpush1.bf16.msra.mxu0 0
    %1062 = vmatprep.subr.bf16.mxu0 0
    %1063 = vmatpush1.bf16.msra.mxu0 0
    %1064 = vmatprep.subr.bf16.mxu0 0
    %1065 = vmatpush1.bf16.msra.mxu0 0
    %1066 = vmatprep.mubr.bf16.mxu0 0
    %1067 = vmatmul.mubr.bf16.gmra.mrb[0].mxu0 %v1032
    %v1068 = vpop.f32.mrb[0].mxu0
    %v1069 = vadd.f32 %v1017, %v1068
    %v1070 = vpop.f32.mrb[0].mxu0
    %v1071 = vpop.f32.mrb[0].mxu0
    %v1072 = vadd.f32 %v1017, %v1071
    %v1073 = vpop.f32.mrb[0].mxu0
    %1074 = vdwg.mxu0
    %v1075 = vmul.f32 %v1069, %v377
    %v1076 = vmul.f32 %v1072, %v379
    %v1077 = vmul.f32 %v1069, %v381
    %v1078 = vmul.f32 %v1072, %v383
    %v1079 = vmul.f32 %v1069, %v385
    %v1080 = vmul.f32 %v1072, %v387
    %v1081 = vmul.f32 %v1069, %v389
    %v1082 = vmul.f32 %v1072, %v391
    %v1083 = vpack.c.bf16 %v1076, %v1075
    %v1084 = vpack.c.bf16 %v1078, %v1077
    %v1085 = vpack.c.bf16 %v1080, %v1079
    %v1086 = vpack.c.bf16 %v1082, %v1081
    %v1087 = vmul.f32 %v1069, %v413
    %v1088 = vmul.f32 %v1072, %v415
    %v1089 = vmul.f32 %v1069, %v417
    %v1090 = vmul.f32 %v1072, %v419
    %v1091 = vmul.f32 %v1069, %v421
    %v1092 = vmul.f32 %v1072, %v423
    %v1093 = vmul.f32 %v1069, %v425
    %v1094 = vmul.f32 %v1072, %v427
    %v1095 = vpack.c.bf16 %v1088, %v1087
    %v1096 = vpack.c.bf16 %v1090, %v1089
    %v1097 = vpack.c.bf16 %v1092, %v1091
    %v1098 = vpack.c.bf16 %v1094, %v1093
    %v1099 = vpack.c.bf16 %v1072, %v1069
    %1104 = vrot.lane.b32.xlu0 %v1083, 96
    %v1105 = vpop.permute.xlu0 %1104
    %1106 = vrot.lane.b32.xlu0 %v1084, 96
    %v1107 = vpop.permute.xlu0 %1106
    %1108 = vrot.lane.b32.xlu0 %v1085, 96
    %v1109 = vpop.permute.xlu0 %1108
    %1110 = vrot.lane.b32.xlu0 %v1086, 96
    %v1111 = vpop.permute.xlu0 %1110
    %v1113 = vsel %vm323, %v1099, 0
    %v1116 = vsel %vm323, %v1105, 0
    %v1119 = vsel %vm323, %v1107, 0
    %v1122 = vsel %vm323, %v1109, 0
    %v1125 = vsel %vm323, %v1111, 0
    %1127 = vmatprep.subr.bf16.mxu0 0
    %1128 = vmatpush1.bf16.xpose.msra.mxu0 %v1116
    %1129 = vmatprep.subr.bf16.mxu0 0
    %1130 = vmatpush1.bf16.xpose.msra.mxu0 %v1119
    %1131 = vmatprep.subr.bf16.mxu0 0
    %1132 = vmatpush1.bf16.xpose.msra.mxu0 %v1122
    %1133 = vmatprep.subr.bf16.mxu0 0
    %1134 = vmatpush1.bf16.xpose.msra.mxu0 %v1125
    %1135 = vmatprep.subr.bf16.mxu0 0
    %1136 = vmatpush1.bf16.xpose.msra.mxu0 0
    %1137 = vmatprep.subr.bf16.mxu0 0
    %1138 = vmatpush1.bf16.xpose.msra.mxu0 0
    %1139 = vmatprep.subr.bf16.mxu0 0
    %1140 = vmatpush1.bf16.xpose.msra.mxu0 0
    %1141 = vmatprep.subr.bf16.mxu0 0
    %1142 = vmatpush1.bf16.xpose.msra.mxu0 0
    %1143 = vmatprep.subr.bf16.mxu0 0
    %1144 = vmatpush1.bf16.xpose.msra.mxu0 0
    %1145 = vmatprep.subr.bf16.mxu0 0
    %1146 = vmatpush1.bf16.xpose.msra.mxu0 0
    %1147 = vmatprep.subr.bf16.mxu0 0
    %1148 = vmatpush1.bf16.xpose.msra.mxu0 0
    %1149 = vmatprep.subr.bf16.mxu0 0
    %1150 = vmatpush1.bf16.xpose.msra.mxu0 0
    %1151 = vmatprep.subr.bf16.mxu0 0
    %1152 = vmatpush1.bf16.xpose.msra.mxu0 0
    %1153 = vmatprep.subr.bf16.mxu0 0
    %1154 = vmatpush1.bf16.xpose.msra.mxu0 0
    %1155 = vmatprep.subr.bf16.mxu0 0
    %1156 = vmatpush1.bf16.xpose.msra.mxu0 0
    %1157 = vmatprep.subr.bf16.mxu0 0
    %1158 = vmatpush1.bf16.xpose.msra.mxu0 0
    %1159 = vmatprep.mubr.bf16.mxu0 0
    %1160 = vmatmul.mubr.bf16.gmra.mrb[0].mxu0 %v1113
    %v1161 = vpop.f32.mrb[0].mxu0
    %v1162 = vadd.f32 0.0, %v1161
    %v1163 = vpop.f32.mrb[0].mxu0
    %v1164 = vpop.f32.mrb[0].mxu0
    %v1165 = vadd.f32 0.0, %v1164
    %v1166 = vpop.f32.mrb[0].mxu0
    %1167 = vdwg.mxu0
    %v1168 = vmul.f32 %v1162, 0.35355338
    %v1169 = vmul.f32 %v1165, 0.35355338
    %v1170 = vadd.f32 %v1168, %v154
    %v1171 = vadd.f32 %v1169, %v155
    %v1172 = vsel %vm521, %v1170, -inf
    %1173 = vmax.xlane.f32.xlu0 %v1172
    %v1174 = vpop.xlane.xlu0 %1173
    %v1175 = vsel %vm521, %v1171, -inf
    %1176 = vmax.xlane.f32.xlu0 %v1175
    %v1177 = vpop.xlane.xlu0 %1176
    %v1178 = vsub.f32 %v1170, %v1174
    %v1179 = vsub.f32 %v1171, %v1177
    %v1180 = vmul.f32 %v1178, 1.442695
    %v1181 = vpow.pop %v1180
    %v1182 = vmul.f32 %v1179, 1.442695
    %v1183 = vpow.pop %v1182
    %v1185 = vsel %vm521, %v1181, 0
    %v1188 = vsel %vm521, %v1183, 0
    %1190 = vmatprep.subr.mxu0 0.0
    %1191 = vmatpush1.msra.mxu0 %v164
    %1192 = vmatprep.subr.mxu0 0.0
    %1193 = vmatpush1.msra.mxu0 %v165
    %1194 = vmatprep.subr.mxu0 0.0
    %1195 = vmatpush1.msra.mxu0 %v166
    %1196 = vmatprep.subr.mxu0 0.0
    %1197 = vmatpush1.msra.mxu0 %v167
    %1198 = vmatprep.subr.mxu0 0.0
    %1199 = vmatpush1.msra.mxu0 %v168
    %1200 = vmatprep.subr.mxu0 0.0
    %1201 = vmatpush1.msra.mxu0 %v169
    %1202 = vmatprep.subr.mxu0 0.0
    %1203 = vmatpush1.msra.mxu0 %v170
    %1204 = vmatprep.subr.mxu0 0.0
    %1205 = vmatpush1.msra.mxu0 %v171
    %1206 = vmatprep.subr.mxu0 0.0
    %1207 = vmatpush1.msra.mxu0 0.0
    %1208 = vmatprep.subr.mxu0 0.0
    %1209 = vmatpush1.msra.mxu0 0.0
    %1210 = vmatprep.subr.mxu0 0.0
    %1211 = vmatpush1.msra.mxu0 0.0
    %1212 = vmatprep.subr.mxu0 0.0
    %1213 = vmatpush1.msra.mxu0 0.0
    %1214 = vmatprep.subr.mxu0 0.0
    %1215 = vmatpush1.msra.mxu0 0.0
    %1216 = vmatprep.subr.mxu0 0.0
    %1217 = vmatpush1.msra.mxu0 0.0
    %1218 = vmatprep.subr.mxu0 0.0
    %1219 = vmatpush1.msra.mxu0 0.0
    %1220 = vmatprep.subr.mxu0 0.0
    %1221 = vmatpush1.msra.mxu0 0.0
    %1222 = vmatprep.subr.mxu0 0.0
    %1223 = vmatpush1.msra.mxu0 0.0
    %1224 = vmatprep.subr.mxu0 0.0
    %1225 = vmatpush1.msra.mxu0 0.0
    %1226 = vmatprep.subr.mxu0 0.0
    %1227 = vmatpush1.msra.mxu0 0.0
    %1228 = vmatprep.subr.mxu0 0.0
    %1229 = vmatpush1.msra.mxu0 0.0
    %1230 = vmatprep.subr.mxu0 0.0
    %1231 = vmatpush1.msra.mxu0 0.0
    %1232 = vmatprep.subr.mxu0 0.0
    %1233 = vmatpush1.msra.mxu0 0.0
    %1234 = vmatprep.subr.mxu0 0.0
    %1235 = vmatpush1.msra.mxu0 0.0
    %1236 = vmatprep.subr.mxu0 0.0
    %1237 = vmatpush1.msra.mxu0 0.0
    %1238 = vmatprep.subr.mxu0 0.0
    %1239 = vmatpush1.msra.mxu0 0.0
    %1240 = vmatprep.subr.mxu0 0.0
    %1241 = vmatpush1.msra.mxu0 0.0
    %1242 = vmatprep.subr.mxu0 0.0
    %1243 = vmatpush1.msra.mxu0 0.0
    %1244 = vmatprep.subr.mxu0 0.0
    %1245 = vmatpush1.msra.mxu0 0.0
    %1246 = vmatprep.subr.mxu0 0.0
    %1247 = vmatpush1.msra.mxu0 0.0
    %1248 = vmatprep.subr.mxu0 0.0
    %1249 = vmatpush1.msra.mxu0 0.0
    %1250 = vmatprep.subr.mxu0 0.0
    %1251 = vmatpush1.msra.mxu0 0.0
    %1252 = vmatprep.subr.mxu0 0.0
    %1253 = vmatpush1.msra.mxu0 0.0
    %1254 = vmatprep.mubr.f32.mxu0 0.0
    %1255 = vmatmul.mubr.f32.gmra.mrb[0].mxu0 %v1185
    %v1256 = vpop.f32.mrb[0].mxu0
    %v1257 = vadd.f32 0.0, %v1256
    %v1258 = vpop.f32.mrb[0].mxu0
    %1259 = vmatprep.mubr.f32.mxu0 0.0
    %1260 = vmatmul.mubr.f32.gmra.mrb[0].mxu0 %v1188
    %v1261 = vpop.f32.mrb[0].mxu0
    %v1262 = vadd.f32 0.0, %v1261
    %v1263 = vpop.f32.mrb[0].mxu0
    %1264 = vdwg.mxu0
    %v1265 = vrcp.pop %v1257
    %v1266 = vrcp.pop %v1262
    %v1267 = vmul.f32 %v1181, %v1265
    %v1268 = vmul.f32 %v1183, %v1266
    %v1269 = vpack.c.bf16 %v1268, %v1267
    %1274 = vrot.lane.b32.xlu0 %v1095, 64
    %v1275 = vpop.permute.xlu0 %1274
    %1276 = vrot.lane.b32.xlu0 %v1096, 64
    %v1277 = vpop.permute.xlu0 %1276
    %1278 = vrot.lane.b32.xlu0 %v1097, 64
    %v1279 = vpop.permute.xlu0 %1278
    %1280 = vrot.lane.b32.xlu0 %v1098, 64
    %v1281 = vpop.permute.xlu0 %1280
    %v1287 = vsel %vm521, %v1269, 0
    %1289 = vmatprep.subr.bf16.mxu0 0
    %1290 = vmatpush1.bf16.msra.mxu0 %v1275
    %1291 = vmatprep.subr.bf16.mxu0 0
    %1292 = vmatpush1.bf16.msra.mxu0 %v1277
    %1293 = vmatprep.subr.bf16.mxu0 0
    %1294 = vmatpush1.bf16.msra.mxu0 %v1279
    %1295 = vmatprep.subr.bf16.mxu0 0
    %1296 = vmatpush1.bf16.msra.mxu0 %v1281
    %1297 = vmatprep.subr.bf16.mxu0 0
    %1298 = vmatpush1.bf16.msra.mxu0 0
    %1299 = vmatprep.subr.bf16.mxu0 0
    %1300 = vmatpush1.bf16.msra.mxu0 0
    %1301 = vmatprep.subr.bf16.mxu0 0
    %1302 = vmatpush1.bf16.msra.mxu0 0
    %1303 = vmatprep.subr.bf16.mxu0 0
    %1304 = vmatpush1.bf16.msra.mxu0 0
    %1305 = vmatprep.subr.bf16.mxu0 0
    %1306 = vmatpush1.bf16.msra.mxu0 0
    %1307 = vmatprep.subr.bf16.mxu0 0
    %1308 = vmatpush1.bf16.msra.mxu0 0
    %1309 = vmatprep.subr.bf16.mxu0 0
    %1310 = vmatpush1.bf16.msra.mxu0 0
    %1311 = vmatprep.subr.bf16.mxu0 0
    %1312 = vmatpush1.bf16.msra.mxu0 0
    %1313 = vmatprep.subr.bf16.mxu0 0
    %1314 = vmatpush1.bf16.msra.mxu0 0
    %1315 = vmatprep.subr.bf16.mxu0 0
    %1316 = vmatpush1.bf16.msra.mxu0 0
    %1317 = vmatprep.subr.bf16.mxu0 0
    %1318 = vmatpush1.bf16.msra.mxu0 0
    %1319 = vmatprep.subr.bf16.mxu0 0
    %1320 = vmatpush1.bf16.msra.mxu0 0
    %1321 = vmatprep.mubr.bf16.mxu0 0
    %1322 = vmatmul.mubr.bf16.gmra.mrb[0].mxu0 %v1287
    %v1323 = vpop.f32.mrb[0].mxu0
    %v1324 = vadd.f32 0.0, %v1323
    %v1325 = vpop.f32.mrb[0].mxu0
    %v1326 = vpop.f32.mrb[0].mxu0
    %v1327 = vadd.f32 0.0, %v1326
    %v1328 = vpop.f32.mrb[0].mxu0
    %1329 = vdwg.mxu0
    %v1330 = vpack.c.bf16 %v1327, %v1324
    %v1332 = vlaneseq
    %v1333 = vshrl.u32 %v1332, 7
    %v1334 = vsub.s32 0, %v1333
    %v1335 = vrot.slane %v985, %v1334
    %v1341 = vunpack.c.l.b16 %v980
    %v1342 = vunpack.c.l.b16 %v981
    %v1343 = vunpack.c.l.b16 %v982
    %v1344 = vunpack.c.l.b16 %v983
    %v1345 = vpack.c.b16 %v1342, %v1341
    %v1346 = vpack.c.b16 %v1344, %v1343
    %v1350 = vsel %vm323, %v1330, 0
    %1352 = vmatprep.subr.bf16.mxu0 0
    %1353 = vmatpush1.bf16.msra.mxu0 %v1345
    %1354 = vmatprep.subr.bf16.mxu0 0
    %1355 = vmatpush1.bf16.msra.mxu0 %v1346
    %1356 = vmatprep.subr.bf16.mxu0 0
    %1357 = vmatpush1.bf16.msra.mxu0 0
    %1358 = vmatprep.subr.bf16.mxu0 0
    %1359 = vmatpush1.bf16.msra.mxu0 0
    %1360 = vmatprep.subr.bf16.mxu0 0
    %1361 = vmatpush1.bf16.msra.mxu0 0
    %1362 = vmatprep.subr.bf16.mxu0 0
    %1363 = vmatpush1.bf16.msra.mxu0 0
    %1364 = vmatprep.subr.bf16.mxu0 0
    %1365 = vmatpush1.bf16.msra.mxu0 0
    %1366 = vmatprep.subr.bf16.mxu0 0
    %1367 = vmatpush1.bf16.msra.mxu0 0
    %1368 = vmatprep.subr.bf16.mxu0 0
    %1369 = vmatpush1.bf16.msra.mxu0 0
    %1370 = vmatprep.subr.bf16.mxu0 0
    %1371 = vmatpush1.bf16.msra.mxu0 0
    %1372 = vmatprep.subr.bf16.mxu0 0
    %1373 = vmatpush1.bf16.msra.mxu0 0
    %1374 = vmatprep.subr.bf16.mxu0 0
    %1375 = vmatpush1.bf16.msra.mxu0 0
    %1376 = vmatprep.subr.bf16.mxu0 0
    %1377 = vmatpush1.bf16.msra.mxu0 0
    %1378 = vmatprep.subr.bf16.mxu0 0
    %1379 = vmatpush1.bf16.msra.mxu0 0
    %1380 = vmatprep.subr.bf16.mxu0 0
    %1381 = vmatpush1.bf16.msra.mxu0 0
    %1382 = vmatprep.subr.bf16.mxu0 0
    %1383 = vmatpush1.bf16.msra.mxu0 0
    %1384 = vmatprep.mubr.bf16.mxu0 0
    %1385 = vmatmul.mubr.bf16.gmra.mrb[0].mxu0 %v1350
    %v1386 = vpop.f32.mrb[0].mxu0
    %v1387 = vadd.f32 %v1335, %v1386
    %v1388 = vpop.f32.mrb[0].mxu0
    %v1389 = vpop.f32.mrb[0].mxu0
    %v1390 = vadd.f32 %v1335, %v1389
    %v1391 = vpop.f32.mrb[0].mxu0
    %1392 = vdwg.mxu0
    %v1393 = vadd.f32 %v970, %v1387
    %v1394 = vadd.f32 %v971, %v1390
    %v1395 = vsel %vm323, %v1393, 0.0
    %1396 = vadd.xlane.f32.xlu0 %v1395
    %v1397 = vpop.xlane.xlu0 %1396
    %v1398 = vsel %vm323, %v1394, 0.0
    %1399 = vadd.xlane.f32.xlu0 %v1398
    %v1400 = vpop.xlane.xlu0 %1399
    %v1401 = vmul.f32 %v1397, %v751
    %v1402 = vmul.f32 %v1400, %v751
    %v1403 = vsub.f32 %v1393, %v1401
    %v1404 = vsub.f32 %v1394, %v1402
    %v1405 = vmul.f32 %v1403, %v1403
    %v1406 = vmul.f32 %v1404, %v1404
    %v1407 = vsel %vm323, %v1405, 0.0
    %1408 = vadd.xlane.f32.xlu0 %v1407
    %v1409 = vpop.xlane.xlu0 %1408
    %v1410 = vsel %vm323, %v1406, 0.0
    %1411 = vadd.xlane.f32.xlu0 %v1410
    %v1412 = vpop.xlane.xlu0 %1411
    %v1413 = vmul.f32 %v1409, %v751
    %v1414 = vmul.f32 %v1412, %v751
    %v1415 = vadd.f32 %v1413, 1e-05
    %v1416 = vadd.f32 %v1414, 1e-05
    %v1417 = vrsqrt.pop %v1415
    %v1418 = vrsqrt.pop %v1416
    %v1419 = vmul.f32 %v1403, %v1417
    %v1420 = vmul.f32 %v1404, %v1418
    %v1422 = vlaneseq
    %v1423 = vshrl.u32 %v1422, 7
    %v1424 = vsub.s32 0, %v1423
    %v1425 = vrot.slane %v987, %v1424
    %v1427 = vmul.f32 %v1419, %v1425
    %v1428 = vmul.f32 %v1420, %v1425
    %v1430 = vlaneseq
    %v1431 = vshrl.u32 %v1430, 7
    %v1432 = vsub.s32 0, %v1431
    %v1433 = vrot.slane %v989, %v1432
    %v1435 = vadd.f32 %v1427, %v1433
    %v1436 = vadd.f32 %v1428, %v1433
    %v1437 = vpack.c.bf16 %v1436, %v1435
    %v1439 = vlaneseq
    %v1440 = vshrl.u32 %v1439, 7
    %v1441 = vsub.s32 0, %v1440
    %v1442 = vrot.slane %v996, %v1441
    %v1448 = vunpack.c.l.b16 %v991
    %v1449 = vunpack.c.l.b16 %v992
    %v1450 = vunpack.c.l.b16 %v993
    %v1451 = vunpack.c.l.b16 %v994
    %v1452 = vpack.c.b16 %v1449, %v1448
    %v1453 = vpack.c.b16 %v1451, %v1450
    %v1457 = vsel %vm323, %v1437, 0
    %1459 = vmatprep.subr.bf16.mxu0 0
    %1460 = vmatpush1.bf16.msra.mxu0 %v1452
    %1461 = vmatprep.subr.bf16.mxu0 0
    %1462 = vmatpush1.bf16.msra.mxu0 %v1453
    %1463 = vmatprep.subr.bf16.mxu0 0
    %1464 = vmatpush1.bf16.msra.mxu0 0
    %1465 = vmatprep.subr.bf16.mxu0 0
    %1466 = vmatpush1.bf16.msra.mxu0 0
    %1467 = vmatprep.subr.bf16.mxu0 0
    %1468 = vmatpush1.bf16.msra.mxu0 0
    %1469 = vmatprep.subr.bf16.mxu0 0
    %1470 = vmatpush1.bf16.msra.mxu0 0
    %1471 = vmatprep.subr.bf16.mxu0 0
    %1472 = vmatpush1.bf16.msra.mxu0 0
    %1473 = vmatprep.subr.bf16.mxu0 0
    %1474 = vmatpush1.bf16.msra.mxu0 0
    %1475 = vmatprep.subr.bf16.mxu0 0
    %1476 = vmatpush1.bf16.msra.mxu0 0
    %1477 = vmatprep.subr.bf16.mxu0 0
    %1478 = vmatpush1.bf16.msra.mxu0 0
    %1479 = vmatprep.subr.bf16.mxu0 0
    %1480 = vmatpush1.bf16.msra.mxu0 0
    %1481 = vmatprep.subr.bf16.mxu0 0
    %1482 = vmatpush1.bf16.msra.mxu0 0
    %1483 = vmatprep.subr.bf16.mxu0 0
    %1484 = vmatpush1.bf16.msra.mxu0 0
    %1485 = vmatprep.subr.bf16.mxu0 0
    %1486 = vmatpush1.bf16.msra.mxu0 0
    %1487 = vmatprep.subr.bf16.mxu0 0
    %1488 = vmatpush1.bf16.msra.mxu0 0
    %1489 = vmatprep.subr.bf16.mxu0 0
    %1490 = vmatpush1.bf16.msra.mxu0 0
    %1491 = vmatprep.mubr.bf16.mxu0 0
    %1492 = vmatmul.mubr.bf16.gmra.mrb[0].mxu0 %v1457
    %v1493 = vpop.f32.mrb[0].mxu0
    %v1494 = vadd.f32 %v1442, %v1493
    %v1495 = vpop.f32.mrb[0].mxu0
    %v1496 = vpop.f32.mrb[0].mxu0
    %v1497 = vadd.f32 %v1442, %v1496
    %v1498 = vpop.f32.mrb[0].mxu0
    %1499 = vdwg.mxu0
    %v1500 = vmax.f32 %v1494, 0.0
    %v1501 = vmax.f32 %v1497, 0.0
    %v1502 = vpack.c.bf16 %v1501, %v1500
    %v1504 = vlaneseq
    %v1505 = vshrl.u32 %v1504, 7
    %v1506 = vsub.s32 0, %v1505
    %v1507 = vrot.slane %v1007, %v1506
    %v1517 = vunpack.c.l.b16 %v998
    %v1518 = vunpack.c.l.b16 %v999
    %v1519 = vunpack.c.l.b16 %v1000
    %v1520 = vunpack.c.l.b16 %v1001
    %v1521 = vunpack.c.l.b16 %v1002
    %v1522 = vunpack.c.l.b16 %v1003
    %v1523 = vunpack.c.l.b16 %v1004
    %v1524 = vunpack.c.l.b16 %v1005
    %v1525 = vpack.c.b16 %v1518, %v1517
    %v1526 = vpack.c.b16 %v1520, %v1519
    %v1527 = vpack.c.b16 %v1522, %v1521
    %v1528 = vpack.c.b16 %v1524, %v1523
    %v1534 = vsel %vm521, %v1502, 0
    %1536 = vmatprep.subr.bf16.mxu0 0
    %1537 = vmatpush1.bf16.msra.mxu0 %v1525
    %1538 = vmatprep.subr.bf16.mxu0 0
    %1539 = vmatpush1.bf16.msra.mxu0 %v1526
    %1540 = vmatprep.subr.bf16.mxu0 0
    %1541 = vmatpush1.bf16.msra.mxu0 %v1527
    %1542 = vmatprep.subr.bf16.mxu0 0
    %1543 = vmatpush1.bf16.msra.mxu0 %v1528
    %1544 = vmatprep.subr.bf16.mxu0 0
    %1545 = vmatpush1.bf16.msra.mxu0 0
    %1546 = vmatprep.subr.bf16.mxu0 0
    %1547 = vmatpush1.bf16.msra.mxu0 0
    %1548 = vmatprep.subr.bf16.mxu0 0
    %1549 = vmatpush1.bf16.msra.mxu0 0
    %1550 = vmatprep.subr.bf16.mxu0 0
    %1551 = vmatpush1.bf16.msra.mxu0 0
    %1552 = vmatprep.subr.bf16.mxu0 0
    %1553 = vmatpush1.bf16.msra.mxu0 0
    %1554 = vmatprep.subr.bf16.mxu0 0
    %1555 = vmatpush1.bf16.msra.mxu0 0
    %1556 = vmatprep.subr.bf16.mxu0 0
    %1557 = vmatpush1.bf16.msra.mxu0 0
    %1558 = vmatprep.subr.bf16.mxu0 0
    %1559 = vmatpush1.bf16.msra.mxu0 0
    %1560 = vmatprep.subr.bf16.mxu0 0
    %1561 = vmatpush1.bf16.msra.mxu0 0
    %1562 = vmatprep.subr.bf16.mxu0 0
    %1563 = vmatpush1.bf16.msra.mxu0 0
    %1564 = vmatprep.subr.bf16.mxu0 0
    %1565 = vmatpush1.bf16.msra.mxu0 0
    %1566 = vmatprep.subr.bf16.mxu0 0
    %1567 = vmatpush1.bf16.msra.mxu0 0
    %1568 = vmatprep.mubr.bf16.mxu0 0
    %1569 = vmatmul.mubr.bf16.gmra.mrb[0].mxu0 %v1534
    %v1570 = vpop.f32.mrb[0].mxu0
    %v1571 = vadd.f32 %v1507, %v1570
    %v1572 = vpop.f32.mrb[0].mxu0
    %v1573 = vpop.f32.mrb[0].mxu0
    %v1574 = vadd.f32 %v1507, %v1573
    %v1575 = vpop.f32.mrb[0].mxu0
    %1576 = vdwg.mxu0
    %v1577 = vadd.f32 %v1435, %v1571
    %v1578 = vadd.f32 %v1436, %v1574
    %v1579 = vsel %vm323, %v1577, 0.0
    %1580 = vadd.xlane.f32.xlu0 %v1579
    %v1581 = vpop.xlane.xlu0 %1580
    %v1582 = vsel %vm323, %v1578, 0.0
    %1583 = vadd.xlane.f32.xlu0 %v1582
    %v1584 = vpop.xlane.xlu0 %1583
    %v1585 = vmul.f32 %v1581, %v751
    %v1586 = vmul.f32 %v1584, %v751
    %v1587 = vsub.f32 %v1577, %v1585
    %v1588 = vsub.f32 %v1578, %v1586
    %v1589 = vmul.f32 %v1587, %v1587
    %v1590 = vmul.f32 %v1588, %v1588
    %v1591 = vsel %vm323, %v1589, 0.0
    %1592 = vadd.xlane.f32.xlu0 %v1591
    %v1593 = vpop.xlane.xlu0 %1592
    %v1594 = vsel %vm323, %v1590, 0.0
    %1595 = vadd.xlane.f32.xlu0 %v1594
    %v1596 = vpop.xlane.xlu0 %1595
    %v1597 = vmul.f32 %v1593, %v751
    %v1598 = vmul.f32 %v1596, %v751
    %v1599 = vadd.f32 %v1597, 1e-05
    %v1600 = vadd.f32 %v1598, 1e-05
    %v1601 = vrsqrt.pop %v1599
    %v1602 = vrsqrt.pop %v1600
    %v1603 = vmul.f32 %v1587, %v1601
    %v1604 = vmul.f32 %v1588, %v1602
    %v1606 = vlaneseq
    %v1607 = vshrl.u32 %v1606, 7
    %v1608 = vsub.s32 0, %v1607
    %v1609 = vrot.slane %v1009, %v1608
    %v1611 = vmul.f32 %v1603, %v1609
    %v1612 = vmul.f32 %v1604, %v1609
    %v1614 = vlaneseq
    %v1615 = vshrl.u32 %v1614, 7
    %v1616 = vsub.s32 0, %v1615
    %v1617 = vrot.slane %v1011, %v1616
    %v1619 = vadd.f32 %v1611, %v1617
    %v1620 = vadd.f32 %v1612, %v1617
    %v1621 = vpack.c.bf16 %v1620, %v1619
    %v1622 = vld [vmem:[%s37] sm:$0xf]
    %v1623 = vld [vmem:[%s37 + $0x4] sm:$0xf]
    %v1624 = vld [vmem:[%s37 + $0x8] sm:$0xf]
    %v1625 = vld [vmem:[%s37 + $0xc] sm:$0xf]
    %v1626 = vld [vmem:[%s39] sm:$0x1]
    %v1628 = vlaneseq
    %v1629 = vshrl.u32 %v1628, 7
    %v1630 = vsub.s32 0, %v1629
    %v1631 = vrot.slane %v1626, %v1630
    %v1637 = vunpack.c.l.b16 %v1622
    %v1638 = vunpack.c.l.b16 %v1623
    %v1639 = vunpack.c.l.b16 %v1624
    %v1640 = vunpack.c.l.b16 %v1625
    %v1641 = vpack.c.b16 %v1638, %v1637
    %v1642 = vpack.c.b16 %v1640, %v1639
    %v1646 = vsel %vm323, %v1621, 0
    %1648 = vmatprep.subr.bf16.mxu0 0
    %1649 = vmatpush1.bf16.msra.mxu0 %v1641
    %1650 = vmatprep.subr.bf16.mxu0 0
    %1651 = vmatpush1.bf16.msra.mxu0 %v1642
    %1652 = vmatprep.subr.bf16.mxu0 0
    %1653 = vmatpush1.bf16.msra.mxu0 0
    %1654 = vmatprep.subr.bf16.mxu0 0
    %1655 = vmatpush1.bf16.msra.mxu0 0
    %1656 = vmatprep.subr.bf16.mxu0 0
    %1657 = vmatpush1.bf16.msra.mxu0 0
    %1658 = vmatprep.subr.bf16.mxu0 0
    %1659 = vmatpush1.bf16.msra.mxu0 0
    %1660 = vmatprep.subr.bf16.mxu0 0
    %1661 = vmatpush1.bf16.msra.mxu0 0
    %1662 = vmatprep.subr.bf16.mxu0 0
    %1663 = vmatpush1.bf16.msra.mxu0 0
    %1664 = vmatprep.subr.bf16.mxu0 0
    %1665 = vmatpush1.bf16.msra.mxu0 0
    %1666 = vmatprep.subr.bf16.mxu0 0
    %1667 = vmatpush1.bf16.msra.mxu0 0
    %1668 = vmatprep.subr.bf16.mxu0 0
    %1669 = vmatpush1.bf16.msra.mxu0 0
    %1670 = vmatprep.subr.bf16.mxu0 0
    %1671 = vmatpush1.bf16.msra.mxu0 0
    %1672 = vmatprep.subr.bf16.mxu0 0
    %1673 = vmatpush1.bf16.msra.mxu0 0
    %1674 = vmatprep.subr.bf16.mxu0 0
    %1675 = vmatpush1.bf16.msra.mxu0 0
    %1676 = vmatprep.subr.bf16.mxu0 0
    %1677 = vmatpush1.bf16.msra.mxu0 0
    %1678 = vmatprep.subr.bf16.mxu0 0
    %1679 = vmatpush1.bf16.msra.mxu0 0
    %1680 = vmatprep.mubr.bf16.mxu0 0
    %1681 = vmatmul.mubr.bf16.gmra.mrb[0].mxu0 %v1646
    %v1682 = vpop.f32.mrb[0].mxu0
    %v1683 = vadd.f32 %v1631, %v1682
    %v1684 = vpop.f32.mrb[0].mxu0
    %v1685 = vpop.f32.mrb[0].mxu0
    %v1686 = vadd.f32 %v1631, %v1685
    %v1687 = vpop.f32.mrb[0].mxu0
    %1688 = vdwg.mxu0
    %v1689 = vxor.u32 %v1683, 2147483648
    %v1690 = vxor.u32 %v1686, 2147483648
    %v1691 = vmul.f32 %v1689, 1.442695
    %v1692 = vpow.pop %v1691
    %v1693 = vmul.f32 %v1690, 1.442695
    %v1694 = vpow.pop %v1693
    %v1695 = vadd.f32 %v1692, 1.0
    %v1696 = vadd.f32 %v1694, 1.0
    %v1697 = vrcp.pop %v1695
    %v1698 = vmul.f32 1.0, %v1697
    %v1699 = vrcp.pop %v1696
    %v1700 = vmul.f32 1.0, %v1699
    %v1701 = vmul.f32 %v1698, 15.0
    %v1702 = vmul.f32 %v1700, 15.0
    %v1703 = vadd.f32 %v1701, 0.5
    %v1704 = vadd.f32 %v1702, 0.5
    %v1705 = vfloor.f32 %v1703
    %v1706 = vfloor.f32 %v1704
    %v1707 = vmul.f32 %v1705, 0.06666667
    %v1708 = vmul.f32 %v1706, 0.06666667
    %v1709 = vpack.c.bf16 %v1708, %v1707
    %v1710 = vld [vmem:[%s41] sm:$0xf]
    %v1711 = vld [vmem:[%s41 + $0x4] sm:$0xf]
    %v1712 = vld [vmem:[%s43] sm:$0x1]
    %v1714 = vlaneseq
    %v1715 = vshrl.u32 %v1714, 7
    %v1716 = vsub.s32 0, %v1715
    %v1717 = vrot.slane %v1712, %v1716
    %v1721 = vunpack.c.l.b16 %v1710
    %v1722 = vunpack.c.l.b16 %v1711
    %v1723 = vpack.c.b16 %v1722, %v1721
    %v1726 = vsel %vm190, %v1709, 0
    %1728 = vmatprep.subr.bf16.mxu0 0
    %1729 = vmatpush1.bf16.msra.mxu0 %v1723
    %1730 = vmatprep.subr.bf16.mxu0 0
    %1731 = vmatpush1.bf16.msra.mxu0 0
    %1732 = vmatprep.subr.bf16.mxu0 0
    %1733 = vmatpush1.bf16.msra.mxu0 0
    %1734 = vmatprep.subr.bf16.mxu0 0
    %1735 = vmatpush1.bf16.msra.mxu0 0
    %1736 = vmatprep.subr.bf16.mxu0 0
    %1737 = vmatpush1.bf16.msra.mxu0 0
    %1738 = vmatprep.subr.bf16.mxu0 0
    %1739 = vmatpush1.bf16.msra.mxu0 0
    %1740 = vmatprep.subr.bf16.mxu0 0
    %1741 = vmatpush1.bf16.msra.mxu0 0
    %1742 = vmatprep.subr.bf16.mxu0 0
    %1743 = vmatpush1.bf16.msra.mxu0 0
    %1744 = vmatprep.subr.bf16.mxu0 0
    %1745 = vmatpush1.bf16.msra.mxu0 0
    %1746 = vmatprep.subr.bf16.mxu0 0
    %1747 = vmatpush1.bf16.msra.mxu0 0
    %1748 = vmatprep.subr.bf16.mxu0 0
    %1749 = vmatpush1.bf16.msra.mxu0 0
    %1750 = vmatprep.subr.bf16.mxu0 0
    %1751 = vmatpush1.bf16.msra.mxu0 0
    %1752 = vmatprep.subr.bf16.mxu0 0
    %1753 = vmatpush1.bf16.msra.mxu0 0
    %1754 = vmatprep.subr.bf16.mxu0 0
    %1755 = vmatpush1.bf16.msra.mxu0 0
    %1756 = vmatprep.subr.bf16.mxu0 0
    %1757 = vmatpush1.bf16.msra.mxu0 0
    %1758 = vmatprep.subr.bf16.mxu0 0
    %1759 = vmatpush1.bf16.msra.mxu0 0
    %1760 = vmatprep.mubr.bf16.mxu0 0
    %1761 = vmatmul.mubr.bf16.gmra.mrb[0].mxu0 %v1726
    %v1762 = vpop.f32.mrb[0].mxu0
    %v1763 = vadd.f32 %v1717, %v1762
    %v1764 = vpop.f32.mrb[0].mxu0
    %v1765 = vpop.f32.mrb[0].mxu0
    %v1766 = vadd.f32 %v1717, %v1765
    %v1767 = vpop.f32.mrb[0].mxu0
    %1768 = vdwg.mxu0
    %v1769 = vadd.f32 %v1763, %v152
    %v1770 = vadd.f32 %v1766, %v153
    %v1771 = vld [vmem:[%s45] sm:$0xf]
    %v1772 = vld [vmem:[%s45 + $0x4] sm:$0xf]
    %v1773 = vld [vmem:[%s45 + $0x8] sm:$0xf]
    %v1774 = vld [vmem:[%s45 + $0xc] sm:$0xf]
    %v1775 = vld [vmem:[%s47] sm:$0x1]
    %v1776 = vld [vmem:[%s49] sm:$0xf]
    %v1777 = vld [vmem:[%s49 + $0x4] sm:$0xf]
    %v1778 = vld [vmem:[%s49 + $0x8] sm:$0xf]
    %v1779 = vld [vmem:[%s49 + $0xc] sm:$0xf]
    %v1780 = vld [vmem:[%s51] sm:$0x1]
    %v1781 = vld [vmem:[%s53] sm:$0x1]
    %v1782 = vld [vmem:[%s55] sm:$0x1]
    %v1783 = vld [vmem:[%s57] sm:$0xf]
    %v1784 = vld [vmem:[%s57 + $0x4] sm:$0xf]
    %v1785 = vld [vmem:[%s57 + $0x8] sm:$0xf]
    %v1786 = vld [vmem:[%s57 + $0xc] sm:$0xf]
    %v1787 = vld [vmem:[%s59] sm:$0x1]
    %v1788 = vld [vmem:[%s61] sm:$0xf]
    %v1789 = vld [vmem:[%s61 + $0x4] sm:$0xf]
    %v1790 = vld [vmem:[%s61 + $0x8] sm:$0xf]
    %v1791 = vld [vmem:[%s61 + $0xc] sm:$0xf]
    %v1792 = vld [vmem:[%s61 + $0x10] sm:$0xf]
    %v1793 = vld [vmem:[%s61 + $0x14] sm:$0xf]
    %v1794 = vld [vmem:[%s61 + $0x18] sm:$0xf]
    %v1795 = vld [vmem:[%s61 + $0x1c] sm:$0xf]
    %v1796 = vld [vmem:[%s63] sm:$0x1]
    %v1797 = vld [vmem:[%s65] sm:$0x1]
    %v1798 = vld [vmem:[%s67] sm:$0x1]
    %v1799 = vpack.c.bf16 %v1770, %v1769
    %v1801 = vlaneseq
    %v1802 = vshrl.u32 %v1801, 7
    %v1803 = vsub.s32 0, %v1802
    %v1804 = vrot.slane %v1775, %v1803
    %v1810 = vunpack.c.l.b16 %v1771
    %v1811 = vunpack.c.l.b16 %v1772
    %v1812 = vunpack.c.l.b16 %v1773
    %v1813 = vunpack.c.l.b16 %v1774
    %v1814 = vpack.c.b16 %v1811, %v1810
    %v1815 = vpack.c.b16 %v1813, %v1812
    %v1819 = vsel %vm323, %v1799, 0
    %1821 = vmatprep.subr.bf16.mxu0 0
    %1822 = vmatpush1.bf16.msra.mxu0 %v1814
    %1823 = vmatprep.subr.bf16.mxu0 0
    %1824 = vmatpush1.bf16.msra.mxu0 %v1815
    %1825 = vmatprep.subr.bf16.mxu0 0
    %1826 = vmatpush1.bf16.msra.mxu0 0
    %1827 = vmatprep.subr.bf16.mxu0 0
    %1828 = vmatpush1.bf16.msra.mxu0 0
    %1829 = vmatprep.subr.bf16.mxu0 0
    %1830 = vmatpush1.bf16.msra.mxu0 0
    %1831 = vmatprep.subr.bf16.mxu0 0
    %1832 = vmatpush1.bf16.msra.mxu0 0
    %1833 = vmatprep.subr.bf16.mxu0 0
    %1834 = vmatpush1.bf16.msra.mxu0 0
    %1835 = vmatprep.subr.bf16.mxu0 0
    %1836 = vmatpush1.bf16.msra.mxu0 0
    %1837 = vmatprep.subr.bf16.mxu0 0
    %1838 = vmatpush1.bf16.msra.mxu0 0
    %1839 = vmatprep.subr.bf16.mxu0 0
    %1840 = vmatpush1.bf16.msra.mxu0 0
    %1841 = vmatprep.subr.bf16.mxu0 0
    %1842 = vmatpush1.bf16.msra.mxu0 0
    %1843 = vmatprep.subr.bf16.mxu0 0
    %1844 = vmatpush1.bf16.msra.mxu0 0
    %1845 = vmatprep.subr.bf16.mxu0 0
    %1846 = vmatpush1.bf16.msra.mxu0 0
    %1847 = vmatprep.subr.bf16.mxu0 0
    %1848 = vmatpush1.bf16.msra.mxu0 0
    %1849 = vmatprep.subr.bf16.mxu0 0
    %1850 = vmatpush1.bf16.msra.mxu0 0
    %1851 = vmatprep.subr.bf16.mxu0 0
    %1852 = vmatpush1.bf16.msra.mxu0 0
    %1853 = vmatprep.mubr.bf16.mxu0 0
    %1854 = vmatmul.mubr.bf16.gmra.mrb[0].mxu0 %v1819
    %v1855 = vpop.f32.mrb[0].mxu0
    %v1856 = vadd.f32 %v1804, %v1855
    %v1857 = vpop.f32.mrb[0].mxu0
    %v1858 = vpop.f32.mrb[0].mxu0
    %v1859 = vadd.f32 %v1804, %v1858
    %v1860 = vpop.f32.mrb[0].mxu0
    %1861 = vdwg.mxu0
    %v1862 = vmul.f32 %v1856, %v377
    %v1863 = vmul.f32 %v1859, %v379
    %v1864 = vmul.f32 %v1856, %v381
    %v1865 = vmul.f32 %v1859, %v383
    %v1866 = vmul.f32 %v1856, %v385
    %v1867 = vmul.f32 %v1859, %v387
    %v1868 = vmul.f32 %v1856, %v389
    %v1869 = vmul.f32 %v1859, %v391
    %v1870 = vpack.c.bf16 %v1863, %v1862
    %v1871 = vpack.c.bf16 %v1865, %v1864
    %v1872 = vpack.c.bf16 %v1867, %v1866
    %v1873 = vpack.c.bf16 %v1869, %v1868
    %v1874 = vmul.f32 %v1856, %v413
    %v1875 = vmul.f32 %v1859, %v415
    %v1876 = vmul.f32 %v1856, %v417
    %v1877 = vmul.f32 %v1859, %v419
    %v1878 = vmul.f32 %v1856, %v421
    %v1879 = vmul.f32 %v1859, %v423
    %v1880 = vmul.f32 %v1856, %v425
    %v1881 = vmul.f32 %v1859, %v427
    %v1882 = vpack.c.bf16 %v1875, %v1874
    %v1883 = vpack.c.bf16 %v1877, %v1876
    %v1884 = vpack.c.bf16 %v1879, %v1878
    %v1885 = vpack.c.bf16 %v1881, %v1880
    %v1886 = vpack.c.bf16 %v1859, %v1856
    %1891 = vrot.lane.b32.xlu0 %v1870, 96
    %v1892 = vpop.permute.xlu0 %1891
    %1893 = vrot.lane.b32.xlu0 %v1871, 96
    %v1894 = vpop.permute.xlu0 %1893
    %1895 = vrot.lane.b32.xlu0 %v1872, 96
    %v1896 = vpop.permute.xlu0 %1895
    %1897 = vrot.lane.b32.xlu0 %v1873, 96
    %v1898 = vpop.permute.xlu0 %1897
    %v1900 = vsel %vm323, %v1886, 0
    %v1903 = vsel %vm323, %v1892, 0
    %v1906 = vsel %vm323, %v1894, 0
    %v1909 = vsel %vm323, %v1896, 0
    %v1912 = vsel %vm323, %v1898, 0
    %1914 = vmatprep.subr.bf16.mxu0 0
    %1915 = vmatpush1.bf16.xpose.msra.mxu0 %v1903
    %1916 = vmatprep.subr.bf16.mxu0 0
    %1917 = vmatpush1.bf16.xpose.msra.mxu0 %v1906
    %1918 = vmatprep.subr.bf16.mxu0 0
    %1919 = vmatpush1.bf16.xpose.msra.mxu0 %v1909
    %1920 = vmatprep.subr.bf16.mxu0 0
    %1921 = vmatpush1.bf16.xpose.msra.mxu0 %v1912
    %1922 = vmatprep.subr.bf16.mxu0 0
    %1923 = vmatpush1.bf16.xpose.msra.mxu0 0
    %1924 = vmatprep.subr.bf16.mxu0 0
    %1925 = vmatpush1.bf16.xpose.msra.mxu0 0
    %1926 = vmatprep.subr.bf16.mxu0 0
    %1927 = vmatpush1.bf16.xpose.msra.mxu0 0
    %1928 = vmatprep.subr.bf16.mxu0 0
    %1929 = vmatpush1.bf16.xpose.msra.mxu0 0
    %1930 = vmatprep.subr.bf16.mxu0 0
    %1931 = vmatpush1.bf16.xpose.msra.mxu0 0
    %1932 = vmatprep.subr.bf16.mxu0 0
    %1933 = vmatpush1.bf16.xpose.msra.mxu0 0
    %1934 = vmatprep.subr.bf16.mxu0 0
    %1935 = vmatpush1.bf16.xpose.msra.mxu0 0
    %1936 = vmatprep.subr.bf16.mxu0 0
    %1937 = vmatpush1.bf16.xpose.msra.mxu0 0
    %1938 = vmatprep.subr.bf16.mxu0 0
    %1939 = vmatpush1.bf16.xpose.msra.mxu0 0
    %1940 = vmatprep.subr.bf16.mxu0 0
    %1941 = vmatpush1.bf16.xpose.msra.mxu0 0
    %1942 = vmatprep.subr.bf16.mxu0 0
    %1943 = vmatpush1.bf16.xpose.msra.mxu0 0
    %1944 = vmatprep.subr.bf16.mxu0 0
    %1945 = vmatpush1.bf16.xpose.msra.mxu0 0
    %1946 = vmatprep.mubr.bf16.mxu0 0
    %1947 = vmatmul.mubr.bf16.gmra.mrb[0].mxu0 %v1900
    %v1948 = vpop.f32.mrb[0].mxu0
    %v1949 = vadd.f32 0.0, %v1948
    %v1950 = vpop.f32.mrb[0].mxu0
    %v1951 = vpop.f32.mrb[0].mxu0
    %v1952 = vadd.f32 0.0, %v1951
    %v1953 = vpop.f32.mrb[0].mxu0
    %1954 = vdwg.mxu0
    %v1955 = vmul.f32 %v1949, 0.35355338
    %v1956 = vmul.f32 %v1952, 0.35355338
    %v1957 = vadd.f32 %v1955, %v154
    %v1958 = vadd.f32 %v1956, %v155
    %v1959 = vsel %vm521, %v1957, -inf
    %1960 = vmax.xlane.f32.xlu0 %v1959
    %v1961 = vpop.xlane.xlu0 %1960
    %v1962 = vsel %vm521, %v1958, -inf
    %1963 = vmax.xlane.f32.xlu0 %v1962
    %v1964 = vpop.xlane.xlu0 %1963
    %v1965 = vsub.f32 %v1957, %v1961
    %v1966 = vsub.f32 %v1958, %v1964
    %v1967 = vmul.f32 %v1965, 1.442695
    %v1968 = vpow.pop %v1967
    %v1969 = vmul.f32 %v1966, 1.442695
    %v1970 = vpow.pop %v1969
    %v1972 = vsel %vm521, %v1968, 0
    %v1975 = vsel %vm521, %v1970, 0
    %1977 = vmatprep.subr.mxu0 0.0
    %1978 = vmatpush1.msra.mxu0 %v164
    %1979 = vmatprep.subr.mxu0 0.0
    %1980 = vmatpush1.msra.mxu0 %v165
    %1981 = vmatprep.subr.mxu0 0.0
    %1982 = vmatpush1.msra.mxu0 %v166
    %1983 = vmatprep.subr.mxu0 0.0
    %1984 = vmatpush1.msra.mxu0 %v167
    %1985 = vmatprep.subr.mxu0 0.0
    %1986 = vmatpush1.msra.mxu0 %v168
    %1987 = vmatprep.subr.mxu0 0.0
    %1988 = vmatpush1.msra.mxu0 %v169
    %1989 = vmatprep.subr.mxu0 0.0
    %1990 = vmatpush1.msra.mxu0 %v170
    %1991 = vmatprep.subr.mxu0 0.0
    %1992 = vmatpush1.msra.mxu0 %v171
    %1993 = vmatprep.subr.mxu0 0.0
    %1994 = vmatpush1.msra.mxu0 0.0
    %1995 = vmatprep.subr.mxu0 0.0
    %1996 = vmatpush1.msra.mxu0 0.0
    %1997 = vmatprep.subr.mxu0 0.0
    %1998 = vmatpush1.msra.mxu0 0.0
    %1999 = vmatprep.subr.mxu0 0.0
    %2000 = vmatpush1.msra.mxu0 0.0
    %2001 = vmatprep.subr.mxu0 0.0
    %2002 = vmatpush1.msra.mxu0 0.0
    %2003 = vmatprep.subr.mxu0 0.0
    %2004 = vmatpush1.msra.mxu0 0.0
    %2005 = vmatprep.subr.mxu0 0.0
    %2006 = vmatpush1.msra.mxu0 0.0
    %2007 = vmatprep.subr.mxu0 0.0
    %2008 = vmatpush1.msra.mxu0 0.0
    %2009 = vmatprep.subr.mxu0 0.0
    %2010 = vmatpush1.msra.mxu0 0.0
    %2011 = vmatprep.subr.mxu0 0.0
    %2012 = vmatpush1.msra.mxu0 0.0
    %2013 = vmatprep.subr.mxu0 0.0
    %2014 = vmatpush1.msra.mxu0 0.0
    %2015 = vmatprep.subr.mxu0 0.0
    %2016 = vmatpush1.msra.mxu0 0.0
    %2017 = vmatprep.subr.mxu0 0.0
    %2018 = vmatpush1.msra.mxu0 0.0
    %2019 = vmatprep.subr.mxu0 0.0
    %2020 = vmatpush1.msra.mxu0 0.0
    %2021 = vmatprep.subr.mxu0 0.0
    %2022 = vmatpush1.msra.mxu0 0.0
    %2023 = vmatprep.subr.mxu0 0.0
    %2024 = vmatpush1.msra.mxu0 0.0
    %2025 = vmatprep.subr.mxu0 0.0
    %2026 = vmatpush1.msra.mxu0 0.0
    %2027 = vmatprep.subr.mxu0 0.0
    %2028 = vmatpush1.msra.mxu0 0.0
    %2029 = vmatprep.subr.mxu0 0.0
    %2030 = vmatpush1.msra.mxu0 0.0
    %2031 = vmatprep.subr.mxu0 0.0
    %2032 = vmatpush1.msra.mxu0 0.0
    %2033 = vmatprep.subr.mxu0 0.0
    %2034 = vmatpush1.msra.mxu0 0.0
    %2035 = vmatprep.subr.mxu0 0.0
    %2036 = vmatpush1.msra.mxu0 0.0
    %2037 = vmatprep.subr.mxu0 0.0
    %2038 = vmatpush1.msra.mxu0 0.0
    %2039 = vmatprep.subr.mxu0 0.0
    %2040 = vmatpush1.msra.mxu0 0.0
    %2041 = vmatprep.mubr.f32.mxu0 0.0
    %2042 = vmatmul.mubr.f32.gmra.mrb[0].mxu0 %v1972
    %v2043 = vpop.f32.mrb[0].mxu0
    %v2044 = vadd.f32 0.0, %v2043
    %v2045 = vpop.f32.mrb[0].mxu0
    %2046 = vmatprep.mubr.f32.mxu0 0.0
    %2047 = vmatmul.mubr.f32.gmra.mrb[0].mxu0 %v1975
    %v2048 = vpop.f32.mrb[0].mxu0
    %v2049 = vadd.f32 0.0, %v2048
    %v2050 = vpop.f32.mrb[0].mxu0
    %2051 = vdwg.mxu0
    %v2052 = vrcp.pop %v2044
    %v2053 = vrcp.pop %v2049
    %v2054 = vmul.f32 %v1968, %v2052
    %v2055 = vmul.f32 %v1970, %v2053
    %v2056 = vpack.c.bf16 %v2055, %v2054
    %2061 = vrot.lane.b32.xlu0 %v1882, 64
    %v2062 = vpop.permute.xlu0 %2061
    %2063 = vrot.lane.b32.xlu0 %v1883, 64
    %v2064 = vpop.permute.xlu0 %2063
    %2065 = vrot.lane.b32.xlu0 %v1884, 64
    %v2066 = vpop.permute.xlu0 %2065
    %2067 = vrot.lane.b32.xlu0 %v1885, 64
    %v2068 = vpop.permute.xlu0 %2067
    %v2074 = vsel %vm521, %v2056, 0
    %2076 = vmatprep.subr.bf16.mxu0 0
    %2077 = vmatpush1.bf16.msra.mxu0 %v2062
    %2078 = vmatprep.subr.bf16.mxu0 0
    %2079 = vmatpush1.bf16.msra.mxu0 %v2064
    %2080 = vmatprep.subr.bf16.mxu0 0
    %2081 = vmatpush1.bf16.msra.mxu0 %v2066
    %2082 = vmatprep.subr.bf16.mxu0 0
    %2083 = vmatpush1.bf16.msra.mxu0 %v2068
    %2084 = vmatprep.subr.bf16.mxu0 0
    %2085 = vmatpush1.bf16.msra.mxu0 0
    %2086 = vmatprep.subr.bf16.mxu0 0
    %2087 = vmatpush1.bf16.msra.mxu0 0
    %2088 = vmatprep.subr.bf16.mxu0 0
    %2089 = vmatpush1.bf16.msra.mxu0 0
    %2090 = vmatprep.subr.bf16.mxu0 0
    %2091 = vmatpush1.bf16.msra.mxu0 0
    %2092 = vmatprep.subr.bf16.mxu0 0
    %2093 = vmatpush1.bf16.msra.mxu0 0
    %2094 = vmatprep.subr.bf16.mxu0 0
    %2095 = vmatpush1.bf16.msra.mxu0 0
    %2096 = vmatprep.subr.bf16.mxu0 0
    %2097 = vmatpush1.bf16.msra.mxu0 0
    %2098 = vmatprep.subr.bf16.mxu0 0
    %2099 = vmatpush1.bf16.msra.mxu0 0
    %2100 = vmatprep.subr.bf16.mxu0 0
    %2101 = vmatpush1.bf16.msra.mxu0 0
    %2102 = vmatprep.subr.bf16.mxu0 0
    %2103 = vmatpush1.bf16.msra.mxu0 0
    %2104 = vmatprep.subr.bf16.mxu0 0
    %2105 = vmatpush1.bf16.msra.mxu0 0
    %2106 = vmatprep.subr.bf16.mxu0 0
    %2107 = vmatpush1.bf16.msra.mxu0 0
    %2108 = vmatprep.mubr.bf16.mxu0 0
    %2109 = vmatmul.mubr.bf16.gmra.mrb[0].mxu0 %v2074
    %v2110 = vpop.f32.mrb[0].mxu0
    %v2111 = vadd.f32 0.0, %v2110
    %v2112 = vpop.f32.mrb[0].mxu0
    %v2113 = vpop.f32.mrb[0].mxu0
    %v2114 = vadd.f32 0.0, %v2113
    %v2115 = vpop.f32.mrb[0].mxu0
    %2116 = vdwg.mxu0
    %v2117 = vpack.c.bf16 %v2114, %v2111
    %v2119 = vlaneseq
    %v2120 = vshrl.u32 %v2119, 7
    %v2121 = vsub.s32 0, %v2120
    %v2122 = vrot.slane %v1780, %v2121
    %v2128 = vunpack.c.l.b16 %v1776
    %v2129 = vunpack.c.l.b16 %v1777
    %v2130 = vunpack.c.l.b16 %v1778
    %v2131 = vunpack.c.l.b16 %v1779
    %v2132 = vpack.c.b16 %v2129, %v2128
    %v2133 = vpack.c.b16 %v2131, %v2130
    %v2137 = vsel %vm323, %v2117, 0
    %2139 = vmatprep.subr.bf16.mxu0 0
    %2140 = vmatpush1.bf16.msra.mxu0 %v2132
    %2141 = vmatprep.subr.bf16.mxu0 0
    %2142 = vmatpush1.bf16.msra.mxu0 %v2133
    %2143 = vmatprep.subr.bf16.mxu0 0
    %2144 = vmatpush1.bf16.msra.mxu0 0
    %2145 = vmatprep.subr.bf16.mxu0 0
    %2146 = vmatpush1.bf16.msra.mxu0 0
    %2147 = vmatprep.subr.bf16.mxu0 0
    %2148 = vmatpush1.bf16.msra.mxu0 0
    %2149 = vmatprep.subr.bf16.mxu0 0
    %2150 = vmatpush1.bf16.msra.mxu0 0
    %2151 = vmatprep.subr.bf16.mxu0 0
    %2152 = vmatpush1.bf16.msra.mxu0 0
    %2153 = vmatprep.subr.bf16.mxu0 0
    %2154 = vmatpush1.bf16.msra.mxu0 0
    %2155 = vmatprep.subr.bf16.mxu0 0
    %2156 = vmatpush1.bf16.msra.mxu0 0
    %2157 = vmatprep.subr.bf16.mxu0 0
    %2158 = vmatpush1.bf16.msra.mxu0 0
    %2159 = vmatprep.subr.bf16.mxu0 0
    %2160 = vmatpush1.bf16.msra.mxu0 0
    %2161 = vmatprep.subr.bf16.mxu0 0
    %2162 = vmatpush1.bf16.msra.mxu0 0
    %2163 = vmatprep.subr.bf16.mxu0 0
    %2164 = vmatpush1.bf16.msra.mxu0 0
    %2165 = vmatprep.subr.bf16.mxu0 0
    %2166 = vmatpush1.bf16.msra.mxu0 0
    %2167 = vmatprep.subr.bf16.mxu0 0
    %2168 = vmatpush1.bf16.msra.mxu0 0
    %2169 = vmatprep.subr.bf16.mxu0 0
    %2170 = vmatpush1.bf16.msra.mxu0 0
    %2171 = vmatprep.mubr.bf16.mxu0 0
    %2172 = vmatmul.mubr.bf16.gmra.mrb[0].mxu0 %v2137
    %v2173 = vpop.f32.mrb[0].mxu0
    %v2174 = vadd.f32 %v2122, %v2173
    %v2175 = vpop.f32.mrb[0].mxu0
    %v2176 = vpop.f32.mrb[0].mxu0
    %v2177 = vadd.f32 %v2122, %v2176
    %v2178 = vpop.f32.mrb[0].mxu0
    %2179 = vdwg.mxu0
    %v2180 = vadd.f32 %v1769, %v2174
    %v2181 = vadd.f32 %v1770, %v2177
    %v2182 = vsel %vm323, %v2180, 0.0
    %2183 = vadd.xlane.f32.xlu0 %v2182
    %v2184 = vpop.xlane.xlu0 %2183
    %v2185 = vsel %vm323, %v2181, 0.0
    %2186 = vadd.xlane.f32.xlu0 %v2185
    %v2187 = vpop.xlane.xlu0 %2186
    %v2188 = vmul.f32 %v2184, %v751
    %v2189 = vmul.f32 %v2187, %v751
    %v2190 = vsub.f32 %v2180, %v2188
    %v2191 = vsub.f32 %v2181, %v2189
    %v2192 = vmul.f32 %v2190, %v2190
    %v2193 = vmul.f32 %v2191, %v2191
    %v2194 = vsel %vm323, %v2192, 0.0
    %2195 = vadd.xlane.f32.xlu0 %v2194
    %v2196 = vpop.xlane.xlu0 %2195
    %v2197 = vsel %vm323, %v2193, 0.0
    %2198 = vadd.xlane.f32.xlu0 %v2197
    %v2199 = vpop.xlane.xlu0 %2198
    %v2200 = vmul.f32 %v2196, %v751
    %v2201 = vmul.f32 %v2199, %v751
    %v2202 = vadd.f32 %v2200, 1e-05
    %v2203 = vadd.f32 %v2201, 1e-05
    %v2204 = vrsqrt.pop %v2202
    %v2205 = vrsqrt.pop %v2203
    %v2206 = vmul.f32 %v2190, %v2204
    %v2207 = vmul.f32 %v2191, %v2205
    %v2209 = vlaneseq
    %v2210 = vshrl.u32 %v2209, 7
    %v2211 = vsub.s32 0, %v2210
    %v2212 = vrot.slane %v1781, %v2211
    %v2214 = vmul.f32 %v2206, %v2212
    %v2215 = vmul.f32 %v2207, %v2212
    %v2217 = vlaneseq
    %v2218 = vshrl.u32 %v2217, 7
    %v2219 = vsub.s32 0, %v2218
    %v2220 = vrot.slane %v1782, %v2219
    %v2222 = vadd.f32 %v2214, %v2220
    %v2223 = vadd.f32 %v2215, %v2220
    %v2224 = vpack.c.bf16 %v2223, %v2222
    %v2226 = vlaneseq
    %v2227 = vshrl.u32 %v2226, 7
    %v2228 = vsub.s32 0, %v2227
    %v2229 = vrot.slane %v1787, %v2228
    %v2235 = vunpack.c.l.b16 %v1783
    %v2236 = vunpack.c.l.b16 %v1784
    %v2237 = vunpack.c.l.b16 %v1785
    %v2238 = vunpack.c.l.b16 %v1786
    %v2239 = vpack.c.b16 %v2236, %v2235
    %v2240 = vpack.c.b16 %v2238, %v2237
    %v2244 = vsel %vm323, %v2224, 0
    %2246 = vmatprep.subr.bf16.mxu0 0
    %2247 = vmatpush1.bf16.msra.mxu0 %v2239
    %2248 = vmatprep.subr.bf16.mxu0 0
    %2249 = vmatpush1.bf16.msra.mxu0 %v2240
    %2250 = vmatprep.subr.bf16.mxu0 0
    %2251 = vmatpush1.bf16.msra.mxu0 0
    %2252 = vmatprep.subr.bf16.mxu0 0
    %2253 = vmatpush1.bf16.msra.mxu0 0
    %2254 = vmatprep.subr.bf16.mxu0 0
    %2255 = vmatpush1.bf16.msra.mxu0 0
    %2256 = vmatprep.subr.bf16.mxu0 0
    %2257 = vmatpush1.bf16.msra.mxu0 0
    %2258 = vmatprep.subr.bf16.mxu0 0
    %2259 = vmatpush1.bf16.msra.mxu0 0
    %2260 = vmatprep.subr.bf16.mxu0 0
    %2261 = vmatpush1.bf16.msra.mxu0 0
    %2262 = vmatprep.subr.bf16.mxu0 0
    %2263 = vmatpush1.bf16.msra.mxu0 0
    %2264 = vmatprep.subr.bf16.mxu0 0
    %2265 = vmatpush1.bf16.msra.mxu0 0
    %2266 = vmatprep.subr.bf16.mxu0 0
    %2267 = vmatpush1.bf16.msra.mxu0 0
    %2268 = vmatprep.subr.bf16.mxu0 0
    %2269 = vmatpush1.bf16.msra.mxu0 0
    %2270 = vmatprep.subr.bf16.mxu0 0
    %2271 = vmatpush1.bf16.msra.mxu0 0
    %2272 = vmatprep.subr.bf16.mxu0 0
    %2273 = vmatpush1.bf16.msra.mxu0 0
    %2274 = vmatprep.subr.bf16.mxu0 0
    %2275 = vmatpush1.bf16.msra.mxu0 0
    %2276 = vmatprep.subr.bf16.mxu0 0
    %2277 = vmatpush1.bf16.msra.mxu0 0
    %2278 = vmatprep.mubr.bf16.mxu0 0
    %2279 = vmatmul.mubr.bf16.gmra.mrb[0].mxu0 %v2244
    %v2280 = vpop.f32.mrb[0].mxu0
    %v2281 = vadd.f32 %v2229, %v2280
    %v2282 = vpop.f32.mrb[0].mxu0
    %v2283 = vpop.f32.mrb[0].mxu0
    %v2284 = vadd.f32 %v2229, %v2283
    %v2285 = vpop.f32.mrb[0].mxu0
    %2286 = vdwg.mxu0
    %v2287 = vmax.f32 %v2281, 0.0
    %v2288 = vmax.f32 %v2284, 0.0
    %v2289 = vpack.c.bf16 %v2288, %v2287
    %v2291 = vlaneseq
    %v2292 = vshrl.u32 %v2291, 7
    %v2293 = vsub.s32 0, %v2292
    %v2294 = vrot.slane %v1796, %v2293
    %v2304 = vunpack.c.l.b16 %v1788
    %v2305 = vunpack.c.l.b16 %v1789
    %v2306 = vunpack.c.l.b16 %v1790
    %v2307 = vunpack.c.l.b16 %v1791
    %v2308 = vunpack.c.l.b16 %v1792
    %v2309 = vunpack.c.l.b16 %v1793
    %v2310 = vunpack.c.l.b16 %v1794
    %v2311 = vunpack.c.l.b16 %v1795
    %v2312 = vpack.c.b16 %v2305, %v2304
    %v2313 = vpack.c.b16 %v2307, %v2306
    %v2314 = vpack.c.b16 %v2309, %v2308
    %v2315 = vpack.c.b16 %v2311, %v2310
    %v2321 = vsel %vm521, %v2289, 0
    %2323 = vmatprep.subr.bf16.mxu0 0
    %2324 = vmatpush1.bf16.msra.mxu0 %v2312
    %2325 = vmatprep.subr.bf16.mxu0 0
    %2326 = vmatpush1.bf16.msra.mxu0 %v2313
    %2327 = vmatprep.subr.bf16.mxu0 0
    %2328 = vmatpush1.bf16.msra.mxu0 %v2314
    %2329 = vmatprep.subr.bf16.mxu0 0
    %2330 = vmatpush1.bf16.msra.mxu0 %v2315
    %2331 = vmatprep.subr.bf16.mxu0 0
    %2332 = vmatpush1.bf16.msra.mxu0 0
    %2333 = vmatprep.subr.bf16.mxu0 0
    %2334 = vmatpush1.bf16.msra.mxu0 0
    %2335 = vmatprep.subr.bf16.mxu0 0
    %2336 = vmatpush1.bf16.msra.mxu0 0
    %2337 = vmatprep.subr.bf16.mxu0 0
    %2338 = vmatpush1.bf16.msra.mxu0 0
    %2339 = vmatprep.subr.bf16.mxu0 0
    %2340 = vmatpush1.bf16.msra.mxu0 0
    %2341 = vmatprep.subr.bf16.mxu0 0
    %2342 = vmatpush1.bf16.msra.mxu0 0
    %2343 = vmatprep.subr.bf16.mxu0 0
    %2344 = vmatpush1.bf16.msra.mxu0 0
    %2345 = vmatprep.subr.bf16.mxu0 0
    %2346 = vmatpush1.bf16.msra.mxu0 0
    %2347 = vmatprep.subr.bf16.mxu0 0
    %2348 = vmatpush1.bf16.msra.mxu0 0
    %2349 = vmatprep.subr.bf16.mxu0 0
    %2350 = vmatpush1.bf16.msra.mxu0 0
    %2351 = vmatprep.subr.bf16.mxu0 0
    %2352 = vmatpush1.bf16.msra.mxu0 0
    %2353 = vmatprep.subr.bf16.mxu0 0
    %2354 = vmatpush1.bf16.msra.mxu0 0
    %2355 = vmatprep.mubr.bf16.mxu0 0
    %2356 = vmatmul.mubr.bf16.gmra.mrb[0].mxu0 %v2321
    %v2357 = vpop.f32.mrb[0].mxu0
    %v2358 = vadd.f32 %v2294, %v2357
    %v2359 = vpop.f32.mrb[0].mxu0
    %v2360 = vpop.f32.mrb[0].mxu0
    %v2361 = vadd.f32 %v2294, %v2360
    %v2362 = vpop.f32.mrb[0].mxu0
    %2363 = vdwg.mxu0
    %v2364 = vadd.f32 %v2222, %v2358
    %v2365 = vadd.f32 %v2223, %v2361
    %v2366 = vsel %vm323, %v2364, 0.0
    %2367 = vadd.xlane.f32.xlu0 %v2366
    %v2368 = vpop.xlane.xlu0 %2367
    %v2369 = vsel %vm323, %v2365, 0.0
    %2370 = vadd.xlane.f32.xlu0 %v2369
    %v2371 = vpop.xlane.xlu0 %2370
    %v2372 = vmul.f32 %v2368, %v751
    %v2373 = vmul.f32 %v2371, %v751
    %v2374 = vsub.f32 %v2364, %v2372
    %v2375 = vsub.f32 %v2365, %v2373
    %v2376 = vmul.f32 %v2374, %v2374
    %v2377 = vmul.f32 %v2375, %v2375
    %v2378 = vsel %vm323, %v2376, 0.0
    %2379 = vadd.xlane.f32.xlu0 %v2378
    %v2380 = vpop.xlane.xlu0 %2379
    %v2381 = vsel %vm323, %v2377, 0.0
    %2382 = vadd.xlane.f32.xlu0 %v2381
    %v2383 = vpop.xlane.xlu0 %2382
    %v2384 = vmul.f32 %v2380, %v751
    %v2385 = vmul.f32 %v2383, %v751
    %v2386 = vadd.f32 %v2384, 1e-05
    %v2387 = vadd.f32 %v2385, 1e-05
    %v2388 = vrsqrt.pop %v2386
    %v2389 = vrsqrt.pop %v2387
    %v2390 = vmul.f32 %v2374, %v2388
    %v2391 = vmul.f32 %v2375, %v2389
    %v2393 = vlaneseq
    %v2394 = vshrl.u32 %v2393, 7
    %v2395 = vsub.s32 0, %v2394
    %v2396 = vrot.slane %v1797, %v2395
    %v2398 = vmul.f32 %v2390, %v2396
    %v2399 = vmul.f32 %v2391, %v2396
    %v2401 = vlaneseq
    %v2402 = vshrl.u32 %v2401, 7
    %v2403 = vsub.s32 0, %v2402
    %v2404 = vrot.slane %v1798, %v2403
    %v2406 = vadd.f32 %v2398, %v2404
    %v2407 = vadd.f32 %v2399, %v2404
    %s2408 = scalar_lea.vmem %s45, 16
    %v2409 = vld [vmem:[%s2408] sm:$0xf]
    %v2410 = vld [vmem:[%s2408 + $0x4] sm:$0xf]
    %v2411 = vld [vmem:[%s2408 + $0x8] sm:$0xf]
    %v2412 = vld [vmem:[%s2408 + $0xc] sm:$0xf]
    %s2413 = scalar_lea.vmem %s47, 1
    %v2414 = vld [vmem:[%s2413] sm:$0x1]
    %s2415 = scalar_lea.vmem %s49, 16
    %v2416 = vld [vmem:[%s2415] sm:$0xf]
    %v2417 = vld [vmem:[%s2415 + $0x4] sm:$0xf]
    %v2418 = vld [vmem:[%s2415 + $0x8] sm:$0xf]
    %v2419 = vld [vmem:[%s2415 + $0xc] sm:$0xf]
    %s2420 = scalar_lea.vmem %s51, 1
    %v2421 = vld [vmem:[%s2420] sm:$0x1]
    %s2422 = scalar_lea.vmem %s53, 1
    %v2423 = vld [vmem:[%s2422] sm:$0x1]
    %s2424 = scalar_lea.vmem %s55, 1
    %v2425 = vld [vmem:[%s2424] sm:$0x1]
    %s2426 = scalar_lea.vmem %s57, 16
    %v2427 = vld [vmem:[%s2426] sm:$0xf]
    %v2428 = vld [vmem:[%s2426 + $0x4] sm:$0xf]
    %v2429 = vld [vmem:[%s2426 + $0x8] sm:$0xf]
    %v2430 = vld [vmem:[%s2426 + $0xc] sm:$0xf]
    %s2431 = scalar_lea.vmem %s59, 1
    %v2432 = vld [vmem:[%s2431] sm:$0x1]
    %s2433 = scalar_lea.vmem %s61, 32
    %v2434 = vld [vmem:[%s2433] sm:$0xf]
    %v2435 = vld [vmem:[%s2433 + $0x4] sm:$0xf]
    %v2436 = vld [vmem:[%s2433 + $0x8] sm:$0xf]
    %v2437 = vld [vmem:[%s2433 + $0xc] sm:$0xf]
    %v2438 = vld [vmem:[%s2433 + $0x10] sm:$0xf]
    %v2439 = vld [vmem:[%s2433 + $0x14] sm:$0xf]
    %v2440 = vld [vmem:[%s2433 + $0x18] sm:$0xf]
    %v2441 = vld [vmem:[%s2433 + $0x1c] sm:$0xf]
    %s2442 = scalar_lea.vmem %s63, 1
    %v2443 = vld [vmem:[%s2442] sm:$0x1]
    %s2444 = scalar_lea.vmem %s65, 1
    %v2445 = vld [vmem:[%s2444] sm:$0x1]
    %s2446 = scalar_lea.vmem %s67, 1
    %v2447 = vld [vmem:[%s2446] sm:$0x1]
    %v2448 = vpack.c.bf16 %v2407, %v2406
    %v2450 = vlaneseq
    %v2451 = vshrl.u32 %v2450, 7
    %v2452 = vsub.s32 0, %v2451
    %v2453 = vrot.slane %v2414, %v2452
    %v2459 = vunpack.c.l.b16 %v2409
    %v2460 = vunpack.c.l.b16 %v2410
    %v2461 = vunpack.c.l.b16 %v2411
    %v2462 = vunpack.c.l.b16 %v2412
    %v2463 = vpack.c.b16 %v2460, %v2459
    %v2464 = vpack.c.b16 %v2462, %v2461
    %v2468 = vsel %vm323, %v2448, 0
    %2470 = vmatprep.subr.bf16.mxu0 0
    %2471 = vmatpush1.bf16.msra.mxu0 %v2463
    %2472 = vmatprep.subr.bf16.mxu0 0
    %2473 = vmatpush1.bf16.msra.mxu0 %v2464
    %2474 = vmatprep.subr.bf16.mxu0 0
    %2475 = vmatpush1.bf16.msra.mxu0 0
    %2476 = vmatprep.subr.bf16.mxu0 0
    %2477 = vmatpush1.bf16.msra.mxu0 0
    %2478 = vmatprep.subr.bf16.mxu0 0
    %2479 = vmatpush1.bf16.msra.mxu0 0
    %2480 = vmatprep.subr.bf16.mxu0 0
    %2481 = vmatpush1.bf16.msra.mxu0 0
    %2482 = vmatprep.subr.bf16.mxu0 0
    %2483 = vmatpush1.bf16.msra.mxu0 0
    %2484 = vmatprep.subr.bf16.mxu0 0
    %2485 = vmatpush1.bf16.msra.mxu0 0
    %2486 = vmatprep.subr.bf16.mxu0 0
    %2487 = vmatpush1.bf16.msra.mxu0 0
    %2488 = vmatprep.subr.bf16.mxu0 0
    %2489 = vmatpush1.bf16.msra.mxu0 0
    %2490 = vmatprep.subr.bf16.mxu0 0
    %2491 = vmatpush1.bf16.msra.mxu0 0
    %2492 = vmatprep.subr.bf16.mxu0 0
    %2493 = vmatpush1.bf16.msra.mxu0 0
    %2494 = vmatprep.subr.bf16.mxu0 0
    %2495 = vmatpush1.bf16.msra.mxu0 0
    %2496 = vmatprep.subr.bf16.mxu0 0
    %2497 = vmatpush1.bf16.msra.mxu0 0
    %2498 = vmatprep.subr.bf16.mxu0 0
    %2499 = vmatpush1.bf16.msra.mxu0 0
    %2500 = vmatprep.subr.bf16.mxu0 0
    %2501 = vmatpush1.bf16.msra.mxu0 0
    %2502 = vmatprep.mubr.bf16.mxu0 0
    %2503 = vmatmul.mubr.bf16.gmra.mrb[0].mxu0 %v2468
    %v2504 = vpop.f32.mrb[0].mxu0
    %v2505 = vadd.f32 %v2453, %v2504
    %v2506 = vpop.f32.mrb[0].mxu0
    %v2507 = vpop.f32.mrb[0].mxu0
    %v2508 = vadd.f32 %v2453, %v2507
    %v2509 = vpop.f32.mrb[0].mxu0
    %2510 = vdwg.mxu0
    %v2511 = vmul.f32 %v2505, %v377
    %v2512 = vmul.f32 %v2508, %v379
    %v2513 = vmul.f32 %v2505, %v381
    %v2514 = vmul.f32 %v2508, %v383
    %v2515 = vmul.f32 %v2505, %v385
    %v2516 = vmul.f32 %v2508, %v387
    %v2517 = vmul.f32 %v2505, %v389
    %v2518 = vmul.f32 %v2508, %v391
    %v2519 = vpack.c.bf16 %v2512, %v2511
    %v2520 = vpack.c.bf16 %v2514, %v2513
    %v2521 = vpack.c.bf16 %v2516, %v2515
    %v2522 = vpack.c.bf16 %v2518, %v2517
    %v2523 = vmul.f32 %v2505, %v413
    %v2524 = vmul.f32 %v2508, %v415
    %v2525 = vmul.f32 %v2505, %v417
    %v2526 = vmul.f32 %v2508, %v419
    %v2527 = vmul.f32 %v2505, %v421
    %v2528 = vmul.f32 %v2508, %v423
    %v2529 = vmul.f32 %v2505, %v425
    %v2530 = vmul.f32 %v2508, %v427
    %v2531 = vpack.c.bf16 %v2524, %v2523
    %v2532 = vpack.c.bf16 %v2526, %v2525
    %v2533 = vpack.c.bf16 %v2528, %v2527
    %v2534 = vpack.c.bf16 %v2530, %v2529
    %v2535 = vpack.c.bf16 %v2508, %v2505
    %2540 = vrot.lane.b32.xlu0 %v2519, 96
    %v2541 = vpop.permute.xlu0 %2540
    %2542 = vrot.lane.b32.xlu0 %v2520, 96
    %v2543 = vpop.permute.xlu0 %2542
    %2544 = vrot.lane.b32.xlu0 %v2521, 96
    %v2545 = vpop.permute.xlu0 %2544
    %2546 = vrot.lane.b32.xlu0 %v2522, 96
    %v2547 = vpop.permute.xlu0 %2546
    %v2549 = vsel %vm323, %v2535, 0
    %v2552 = vsel %vm323, %v2541, 0
    %v2555 = vsel %vm323, %v2543, 0
    %v2558 = vsel %vm323, %v2545, 0
    %v2561 = vsel %vm323, %v2547, 0
    %2563 = vmatprep.subr.bf16.mxu0 0
    %2564 = vmatpush1.bf16.xpose.msra.mxu0 %v2552
    %2565 = vmatprep.subr.bf16.mxu0 0
    %2566 = vmatpush1.bf16.xpose.msra.mxu0 %v2555
    %2567 = vmatprep.subr.bf16.mxu0 0
    %2568 = vmatpush1.bf16.xpose.msra.mxu0 %v2558
    %2569 = vmatprep.subr.bf16.mxu0 0
    %2570 = vmatpush1.bf16.xpose.msra.mxu0 %v2561
    %2571 = vmatprep.subr.bf16.mxu0 0
    %2572 = vmatpush1.bf16.xpose.msra.mxu0 0
    %2573 = vmatprep.subr.bf16.mxu0 0
    %2574 = vmatpush1.bf16.xpose.msra.mxu0 0
    %2575 = vmatprep.subr.bf16.mxu0 0
    %2576 = vmatpush1.bf16.xpose.msra.mxu0 0
    %2577 = vmatprep.subr.bf16.mxu0 0
    %2578 = vmatpush1.bf16.xpose.msra.mxu0 0
    %2579 = vmatprep.subr.bf16.mxu0 0
    %2580 = vmatpush1.bf16.xpose.msra.mxu0 0
    %2581 = vmatprep.subr.bf16.mxu0 0
    %2582 = vmatpush1.bf16.xpose.msra.mxu0 0
    %2583 = vmatprep.subr.bf16.mxu0 0
    %2584 = vmatpush1.bf16.xpose.msra.mxu0 0
    %2585 = vmatprep.subr.bf16.mxu0 0
    %2586 = vmatpush1.bf16.xpose.msra.mxu0 0
    %2587 = vmatprep.subr.bf16.mxu0 0
    %2588 = vmatpush1.bf16.xpose.msra.mxu0 0
    %2589 = vmatprep.subr.bf16.mxu0 0
    %2590 = vmatpush1.bf16.xpose.msra.mxu0 0
    %2591 = vmatprep.subr.bf16.mxu0 0
    %2592 = vmatpush1.bf16.xpose.msra.mxu0 0
    %2593 = vmatprep.subr.bf16.mxu0 0
    %2594 = vmatpush1.bf16.xpose.msra.mxu0 0
    %2595 = vmatprep.mubr.bf16.mxu0 0
    %2596 = vmatmul.mubr.bf16.gmra.mrb[0].mxu0 %v2549
    %v2597 = vpop.f32.mrb[0].mxu0
    %v2598 = vadd.f32 0.0, %v2597
    %v2599 = vpop.f32.mrb[0].mxu0
    %v2600 = vpop.f32.mrb[0].mxu0
    %v2601 = vadd.f32 0.0, %v2600
    %v2602 = vpop.f32.mrb[0].mxu0
    %2603 = vdwg.mxu0
    %v2604 = vmul.f32 %v2598, 0.35355338
    %v2605 = vmul.f32 %v2601, 0.35355338
    %v2606 = vadd.f32 %v2604, %v154
    %v2607 = vadd.f32 %v2605, %v155
    %v2608 = vsel %vm521, %v2606, -inf
    %2609 = vmax.xlane.f32.xlu0 %v2608
    %v2610 = vpop.xlane.xlu0 %2609
    %v2611 = vsel %vm521, %v2607, -inf
    %2612 = vmax.xlane.f32.xlu0 %v2611
    %v2613 = vpop.xlane.xlu0 %2612
    %v2614 = vsub.f32 %v2606, %v2610
    %v2615 = vsub.f32 %v2607, %v2613
    %v2616 = vmul.f32 %v2614, 1.442695
    %v2617 = vpow.pop %v2616
    %v2618 = vmul.f32 %v2615, 1.442695
    %v2619 = vpow.pop %v2618
    %v2621 = vsel %vm521, %v2617, 0
    %v2624 = vsel %vm521, %v2619, 0
    %2626 = vmatprep.subr.mxu0 0.0
    %2627 = vmatpush1.msra.mxu0 %v164
    %2628 = vmatprep.subr.mxu0 0.0
    %2629 = vmatpush1.msra.mxu0 %v165
    %2630 = vmatprep.subr.mxu0 0.0
    %2631 = vmatpush1.msra.mxu0 %v166
    %2632 = vmatprep.subr.mxu0 0.0
    %2633 = vmatpush1.msra.mxu0 %v167
    %2634 = vmatprep.subr.mxu0 0.0
    %2635 = vmatpush1.msra.mxu0 %v168
    %2636 = vmatprep.subr.mxu0 0.0
    %2637 = vmatpush1.msra.mxu0 %v169
    %2638 = vmatprep.subr.mxu0 0.0
    %2639 = vmatpush1.msra.mxu0 %v170
    %2640 = vmatprep.subr.mxu0 0.0
    %2641 = vmatpush1.msra.mxu0 %v171
    %2642 = vmatprep.subr.mxu0 0.0
    %2643 = vmatpush1.msra.mxu0 0.0
    %2644 = vmatprep.subr.mxu0 0.0
    %2645 = vmatpush1.msra.mxu0 0.0
    %2646 = vmatprep.subr.mxu0 0.0
    %2647 = vmatpush1.msra.mxu0 0.0
    %2648 = vmatprep.subr.mxu0 0.0
    %2649 = vmatpush1.msra.mxu0 0.0
    %2650 = vmatprep.subr.mxu0 0.0
    %2651 = vmatpush1.msra.mxu0 0.0
    %2652 = vmatprep.subr.mxu0 0.0
    %2653 = vmatpush1.msra.mxu0 0.0
    %2654 = vmatprep.subr.mxu0 0.0
    %2655 = vmatpush1.msra.mxu0 0.0
    %2656 = vmatprep.subr.mxu0 0.0
    %2657 = vmatpush1.msra.mxu0 0.0
    %2658 = vmatprep.subr.mxu0 0.0
    %2659 = vmatpush1.msra.mxu0 0.0
    %2660 = vmatprep.subr.mxu0 0.0
    %2661 = vmatpush1.msra.mxu0 0.0
    %2662 = vmatprep.subr.mxu0 0.0
    %2663 = vmatpush1.msra.mxu0 0.0
    %2664 = vmatprep.subr.mxu0 0.0
    %2665 = vmatpush1.msra.mxu0 0.0
    %2666 = vmatprep.subr.mxu0 0.0
    %2667 = vmatpush1.msra.mxu0 0.0
    %2668 = vmatprep.subr.mxu0 0.0
    %2669 = vmatpush1.msra.mxu0 0.0
    %2670 = vmatprep.subr.mxu0 0.0
    %2671 = vmatpush1.msra.mxu0 0.0
    %2672 = vmatprep.subr.mxu0 0.0
    %2673 = vmatpush1.msra.mxu0 0.0
    %2674 = vmatprep.subr.mxu0 0.0
    %2675 = vmatpush1.msra.mxu0 0.0
    %2676 = vmatprep.subr.mxu0 0.0
    %2677 = vmatpush1.msra.mxu0 0.0
    %2678 = vmatprep.subr.mxu0 0.0
    %2679 = vmatpush1.msra.mxu0 0.0
    %2680 = vmatprep.subr.mxu0 0.0
    %2681 = vmatpush1.msra.mxu0 0.0
    %2682 = vmatprep.subr.mxu0 0.0
    %2683 = vmatpush1.msra.mxu0 0.0
    %2684 = vmatprep.subr.mxu0 0.0
    %2685 = vmatpush1.msra.mxu0 0.0
    %2686 = vmatprep.subr.mxu0 0.0
    %2687 = vmatpush1.msra.mxu0 0.0
    %2688 = vmatprep.subr.mxu0 0.0
    %2689 = vmatpush1.msra.mxu0 0.0
    %2690 = vmatprep.mubr.f32.mxu0 0.0
    %2691 = vmatmul.mubr.f32.gmra.mrb[0].mxu0 %v2621
    %v2692 = vpop.f32.mrb[0].mxu0
    %v2693 = vadd.f32 0.0, %v2692
    %v2694 = vpop.f32.mrb[0].mxu0
    %2695 = vmatprep.mubr.f32.mxu0 0.0
    %2696 = vmatmul.mubr.f32.gmra.mrb[0].mxu0 %v2624
    %v2697 = vpop.f32.mrb[0].mxu0
    %v2698 = vadd.f32 0.0, %v2697
    %v2699 = vpop.f32.mrb[0].mxu0
    %2700 = vdwg.mxu0
    %v2701 = vrcp.pop %v2693
    %v2702 = vrcp.pop %v2698
    %v2703 = vmul.f32 %v2617, %v2701
    %v2704 = vmul.f32 %v2619, %v2702
    %v2705 = vpack.c.bf16 %v2704, %v2703
    %2710 = vrot.lane.b32.xlu0 %v2531, 64
    %v2711 = vpop.permute.xlu0 %2710
    %2712 = vrot.lane.b32.xlu0 %v2532, 64
    %v2713 = vpop.permute.xlu0 %2712
    %2714 = vrot.lane.b32.xlu0 %v2533, 64
    %v2715 = vpop.permute.xlu0 %2714
    %2716 = vrot.lane.b32.xlu0 %v2534, 64
    %v2717 = vpop.permute.xlu0 %2716
    %v2723 = vsel %vm521, %v2705, 0
    %2725 = vmatprep.subr.bf16.mxu0 0
    %2726 = vmatpush1.bf16.msra.mxu0 %v2711
    %2727 = vmatprep.subr.bf16.mxu0 0
    %2728 = vmatpush1.bf16.msra.mxu0 %v2713
    %2729 = vmatprep.subr.bf16.mxu0 0
    %2730 = vmatpush1.bf16.msra.mxu0 %v2715
    %2731 = vmatprep.subr.bf16.mxu0 0
    %2732 = vmatpush1.bf16.msra.mxu0 %v2717
    %2733 = vmatprep.subr.bf16.mxu0 0
    %2734 = vmatpush1.bf16.msra.mxu0 0
    %2735 = vmatprep.subr.bf16.mxu0 0
    %2736 = vmatpush1.bf16.msra.mxu0 0
    %2737 = vmatprep.subr.bf16.mxu0 0
    %2738 = vmatpush1.bf16.msra.mxu0 0
    %2739 = vmatprep.subr.bf16.mxu0 0
    %2740 = vmatpush1.bf16.msra.mxu0 0
    %2741 = vmatprep.subr.bf16.mxu0 0
    %2742 = vmatpush1.bf16.msra.mxu0 0
    %2743 = vmatprep.subr.bf16.mxu0 0
    %2744 = vmatpush1.bf16.msra.mxu0 0
    %2745 = vmatprep.subr.bf16.mxu0 0
    %2746 = vmatpush1.bf16.msra.mxu0 0
    %2747 = vmatprep.subr.bf16.mxu0 0
    %2748 = vmatpush1.bf16.msra.mxu0 0
    %2749 = vmatprep.subr.bf16.mxu0 0
    %2750 = vmatpush1.bf16.msra.mxu0 0
    %2751 = vmatprep.subr.bf16.mxu0 0
    %2752 = vmatpush1.bf16.msra.mxu0 0
    %2753 = vmatprep.subr.bf16.mxu0 0
    %2754 = vmatpush1.bf16.msra.mxu0 0
    %2755 = vmatprep.subr.bf16.mxu0 0
    %2756 = vmatpush1.bf16.msra.mxu0 0
    %2757 = vmatprep.mubr.bf16.mxu0 0
    %2758 = vmatmul.mubr.bf16.gmra.mrb[0].mxu0 %v2723
    %v2759 = vpop.f32.mrb[0].mxu0
    %v2760 = vadd.f32 0.0, %v2759
    %v2761 = vpop.f32.mrb[0].mxu0
    %v2762 = vpop.f32.mrb[0].mxu0
    %v2763 = vadd.f32 0.0, %v2762
    %v2764 = vpop.f32.mrb[0].mxu0
    %2765 = vdwg.mxu0
    %v2766 = vpack.c.bf16 %v2763, %v2760
    %v2768 = vlaneseq
    %v2769 = vshrl.u32 %v2768, 7
    %v2770 = vsub.s32 0, %v2769
    %v2771 = vrot.slane %v2421, %v2770
    %v2777 = vunpack.c.l.b16 %v2416
    %v2778 = vunpack.c.l.b16 %v2417
    %v2779 = vunpack.c.l.b16 %v2418
    %v2780 = vunpack.c.l.b16 %v2419
    %v2781 = vpack.c.b16 %v2778, %v2777
    %v2782 = vpack.c.b16 %v2780, %v2779
    %v2786 = vsel %vm323, %v2766, 0
    %2788 = vmatprep.subr.bf16.mxu0 0
    %2789 = vmatpush1.bf16.msra.mxu0 %v2781
    %2790 = vmatprep.subr.bf16.mxu0 0
    %2791 = vmatpush1.bf16.msra.mxu0 %v2782
    %2792 = vmatprep.subr.bf16.mxu0 0
    %2793 = vmatpush1.bf16.msra.mxu0 0
    %2794 = vmatprep.subr.bf16.mxu0 0
    %2795 = vmatpush1.bf16.msra.mxu0 0
    %2796 = vmatprep.subr.bf16.mxu0 0
    %2797 = vmatpush1.bf16.msra.mxu0 0
    %2798 = vmatprep.subr.bf16.mxu0 0
    %2799 = vmatpush1.bf16.msra.mxu0 0
    %2800 = vmatprep.subr.bf16.mxu0 0
    %2801 = vmatpush1.bf16.msra.mxu0 0
    %2802 = vmatprep.subr.bf16.mxu0 0
    %2803 = vmatpush1.bf16.msra.mxu0 0
    %2804 = vmatprep.subr.bf16.mxu0 0
    %2805 = vmatpush1.bf16.msra.mxu0 0
    %2806 = vmatprep.subr.bf16.mxu0 0
    %2807 = vmatpush1.bf16.msra.mxu0 0
    %2808 = vmatprep.subr.bf16.mxu0 0
    %2809 = vmatpush1.bf16.msra.mxu0 0
    %2810 = vmatprep.subr.bf16.mxu0 0
    %2811 = vmatpush1.bf16.msra.mxu0 0
    %2812 = vmatprep.subr.bf16.mxu0 0
    %2813 = vmatpush1.bf16.msra.mxu0 0
    %2814 = vmatprep.subr.bf16.mxu0 0
    %2815 = vmatpush1.bf16.msra.mxu0 0
    %2816 = vmatprep.subr.bf16.mxu0 0
    %2817 = vmatpush1.bf16.msra.mxu0 0
    %2818 = vmatprep.subr.bf16.mxu0 0
    %2819 = vmatpush1.bf16.msra.mxu0 0
    %2820 = vmatprep.mubr.bf16.mxu0 0
    %2821 = vmatmul.mubr.bf16.gmra.mrb[0].mxu0 %v2786
    %v2822 = vpop.f32.mrb[0].mxu0
    %v2823 = vadd.f32 %v2771, %v2822
    %v2824 = vpop.f32.mrb[0].mxu0
    %v2825 = vpop.f32.mrb[0].mxu0
    %v2826 = vadd.f32 %v2771, %v2825
    %v2827 = vpop.f32.mrb[0].mxu0
    %2828 = vdwg.mxu0
    %v2829 = vadd.f32 %v2406, %v2823
    %v2830 = vadd.f32 %v2407, %v2826
    %v2831 = vsel %vm323, %v2829, 0.0
    %2832 = vadd.xlane.f32.xlu0 %v2831
    %v2833 = vpop.xlane.xlu0 %2832
    %v2834 = vsel %vm323, %v2830, 0.0
    %2835 = vadd.xlane.f32.xlu0 %v2834
    %v2836 = vpop.xlane.xlu0 %2835
    %v2837 = vmul.f32 %v2833, %v751
    %v2838 = vmul.f32 %v2836, %v751
    %v2839 = vsub.f32 %v2829, %v2837
    %v2840 = vsub.f32 %v2830, %v2838
    %v2841 = vmul.f32 %v2839, %v2839
    %v2842 = vmul.f32 %v2840, %v2840
    %v2843 = vsel %vm323, %v2841, 0.0
    %2844 = vadd.xlane.f32.xlu0 %v2843
    %v2845 = vpop.xlane.xlu0 %2844
    %v2846 = vsel %vm323, %v2842, 0.0
    %2847 = vadd.xlane.f32.xlu0 %v2846
    %v2848 = vpop.xlane.xlu0 %2847
    %v2849 = vmul.f32 %v2845, %v751
    %v2850 = vmul.f32 %v2848, %v751
    %v2851 = vadd.f32 %v2849, 1e-05
    %v2852 = vadd.f32 %v2850, 1e-05
    %v2853 = vrsqrt.pop %v2851
    %v2854 = vrsqrt.pop %v2852
    %v2855 = vmul.f32 %v2839, %v2853
    %v2856 = vmul.f32 %v2840, %v2854
    %v2858 = vlaneseq
    %v2859 = vshrl.u32 %v2858, 7
    %v2860 = vsub.s32 0, %v2859
    %v2861 = vrot.slane %v2423, %v2860
    %v2863 = vmul.f32 %v2855, %v2861
    %v2864 = vmul.f32 %v2856, %v2861
    %v2866 = vlaneseq
    %v2867 = vshrl.u32 %v2866, 7
    %v2868 = vsub.s32 0, %v2867
    %v2869 = vrot.slane %v2425, %v2868
    %v2871 = vadd.f32 %v2863, %v2869
    %v2872 = vadd.f32 %v2864, %v2869
    %v2873 = vpack.c.bf16 %v2872, %v2871
    %v2875 = vlaneseq
    %v2876 = vshrl.u32 %v2875, 7
    %v2877 = vsub.s32 0, %v2876
    %v2878 = vrot.slane %v2432, %v2877
    %v2884 = vunpack.c.l.b16 %v2427
    %v2885 = vunpack.c.l.b16 %v2428
    %v2886 = vunpack.c.l.b16 %v2429
    %v2887 = vunpack.c.l.b16 %v2430
    %v2888 = vpack.c.b16 %v2885, %v2884
    %v2889 = vpack.c.b16 %v2887, %v2886
    %v2893 = vsel %vm323, %v2873, 0
    %2895 = vmatprep.subr.bf16.mxu0 0
    %2896 = vmatpush1.bf16.msra.mxu0 %v2888
    %2897 = vmatprep.subr.bf16.mxu0 0
    %2898 = vmatpush1.bf16.msra.mxu0 %v2889
    %2899 = vmatprep.subr.bf16.mxu0 0
    %2900 = vmatpush1.bf16.msra.mxu0 0
    %2901 = vmatprep.subr.bf16.mxu0 0
    %2902 = vmatpush1.bf16.msra.mxu0 0
    %2903 = vmatprep.subr.bf16.mxu0 0
    %2904 = vmatpush1.bf16.msra.mxu0 0
    %2905 = vmatprep.subr.bf16.mxu0 0
    %2906 = vmatpush1.bf16.msra.mxu0 0
    %2907 = vmatprep.subr.bf16.mxu0 0
    %2908 = vmatpush1.bf16.msra.mxu0 0
    %2909 = vmatprep.subr.bf16.mxu0 0
    %2910 = vmatpush1.bf16.msra.mxu0 0
    %2911 = vmatprep.subr.bf16.mxu0 0
    %2912 = vmatpush1.bf16.msra.mxu0 0
    %2913 = vmatprep.subr.bf16.mxu0 0
    %2914 = vmatpush1.bf16.msra.mxu0 0
    %2915 = vmatprep.subr.bf16.mxu0 0
    %2916 = vmatpush1.bf16.msra.mxu0 0
    %2917 = vmatprep.subr.bf16.mxu0 0
    %2918 = vmatpush1.bf16.msra.mxu0 0
    %2919 = vmatprep.subr.bf16.mxu0 0
    %2920 = vmatpush1.bf16.msra.mxu0 0
    %2921 = vmatprep.subr.bf16.mxu0 0
    %2922 = vmatpush1.bf16.msra.mxu0 0
    %2923 = vmatprep.subr.bf16.mxu0 0
    %2924 = vmatpush1.bf16.msra.mxu0 0
    %2925 = vmatprep.subr.bf16.mxu0 0
    %2926 = vmatpush1.bf16.msra.mxu0 0
    %2927 = vmatprep.mubr.bf16.mxu0 0
    %2928 = vmatmul.mubr.bf16.gmra.mrb[0].mxu0 %v2893
    %v2929 = vpop.f32.mrb[0].mxu0
    %v2930 = vadd.f32 %v2878, %v2929
    %v2931 = vpop.f32.mrb[0].mxu0
    %v2932 = vpop.f32.mrb[0].mxu0
    %v2933 = vadd.f32 %v2878, %v2932
    %v2934 = vpop.f32.mrb[0].mxu0
    %2935 = vdwg.mxu0
    %v2936 = vmax.f32 %v2930, 0.0
    %v2937 = vmax.f32 %v2933, 0.0
    %v2938 = vpack.c.bf16 %v2937, %v2936
    %v2940 = vlaneseq
    %v2941 = vshrl.u32 %v2940, 7
    %v2942 = vsub.s32 0, %v2941
    %v2943 = vrot.slane %v2443, %v2942
    %v2953 = vunpack.c.l.b16 %v2434
    %v2954 = vunpack.c.l.b16 %v2435
    %v2955 = vunpack.c.l.b16 %v2436
    %v2956 = vunpack.c.l.b16 %v2437
    %v2957 = vunpack.c.l.b16 %v2438
    %v2958 = vunpack.c.l.b16 %v2439
    %v2959 = vunpack.c.l.b16 %v2440
    %v2960 = vunpack.c.l.b16 %v2441
    %v2961 = vpack.c.b16 %v2954, %v2953
    %v2962 = vpack.c.b16 %v2956, %v2955
    %v2963 = vpack.c.b16 %v2958, %v2957
    %v2964 = vpack.c.b16 %v2960, %v2959
    %v2970 = vsel %vm521, %v2938, 0
    %2972 = vmatprep.subr.bf16.mxu0 0
    %2973 = vmatpush1.bf16.msra.mxu0 %v2961
    %2974 = vmatprep.subr.bf16.mxu0 0
    %2975 = vmatpush1.bf16.msra.mxu0 %v2962
    %2976 = vmatprep.subr.bf16.mxu0 0
    %2977 = vmatpush1.bf16.msra.mxu0 %v2963
    %2978 = vmatprep.subr.bf16.mxu0 0
    %2979 = vmatpush1.bf16.msra.mxu0 %v2964
    %2980 = vmatprep.subr.bf16.mxu0 0
    %2981 = vmatpush1.bf16.msra.mxu0 0
    %2982 = vmatprep.subr.bf16.mxu0 0
    %2983 = vmatpush1.bf16.msra.mxu0 0
    %2984 = vmatprep.subr.bf16.mxu0 0
    %2985 = vmatpush1.bf16.msra.mxu0 0
    %2986 = vmatprep.subr.bf16.mxu0 0
    %2987 = vmatpush1.bf16.msra.mxu0 0
    %2988 = vmatprep.subr.bf16.mxu0 0
    %2989 = vmatpush1.bf16.msra.mxu0 0
    %2990 = vmatprep.subr.bf16.mxu0 0
    %2991 = vmatpush1.bf16.msra.mxu0 0
    %2992 = vmatprep.subr.bf16.mxu0 0
    %2993 = vmatpush1.bf16.msra.mxu0 0
    %2994 = vmatprep.subr.bf16.mxu0 0
    %2995 = vmatpush1.bf16.msra.mxu0 0
    %2996 = vmatprep.subr.bf16.mxu0 0
    %2997 = vmatpush1.bf16.msra.mxu0 0
    %2998 = vmatprep.subr.bf16.mxu0 0
    %2999 = vmatpush1.bf16.msra.mxu0 0
    %3000 = vmatprep.subr.bf16.mxu0 0
    %3001 = vmatpush1.bf16.msra.mxu0 0
    %3002 = vmatprep.subr.bf16.mxu0 0
    %3003 = vmatpush1.bf16.msra.mxu0 0
    %3004 = vmatprep.mubr.bf16.mxu0 0
    %3005 = vmatmul.mubr.bf16.gmra.mrb[0].mxu0 %v2970
    %v3006 = vpop.f32.mrb[0].mxu0
    %v3007 = vadd.f32 %v2943, %v3006
    %v3008 = vpop.f32.mrb[0].mxu0
    %v3009 = vpop.f32.mrb[0].mxu0
    %v3010 = vadd.f32 %v2943, %v3009
    %v3011 = vpop.f32.mrb[0].mxu0
    %3012 = vdwg.mxu0
    %v3013 = vadd.f32 %v2871, %v3007
    %v3014 = vadd.f32 %v2872, %v3010
    %v3015 = vsel %vm323, %v3013, 0.0
    %3016 = vadd.xlane.f32.xlu0 %v3015
    %v3017 = vpop.xlane.xlu0 %3016
    %v3018 = vsel %vm323, %v3014, 0.0
    %3019 = vadd.xlane.f32.xlu0 %v3018
    %v3020 = vpop.xlane.xlu0 %3019
    %v3021 = vmul.f32 %v3017, %v751
    %v3022 = vmul.f32 %v3020, %v751
    %v3023 = vsub.f32 %v3013, %v3021
    %v3024 = vsub.f32 %v3014, %v3022
    %v3025 = vmul.f32 %v3023, %v3023
    %v3026 = vmul.f32 %v3024, %v3024
    %v3027 = vsel %vm323, %v3025, 0.0
    %3028 = vadd.xlane.f32.xlu0 %v3027
    %v3029 = vpop.xlane.xlu0 %3028
    %v3030 = vsel %vm323, %v3026, 0.0
    %3031 = vadd.xlane.f32.xlu0 %v3030
    %v3032 = vpop.xlane.xlu0 %3031
    %v3033 = vmul.f32 %v3029, %v751
    %v3034 = vmul.f32 %v3032, %v751
    %v3035 = vadd.f32 %v3033, 1e-05
    %v3036 = vadd.f32 %v3034, 1e-05
    %v3037 = vrsqrt.pop %v3035
    %v3038 = vrsqrt.pop %v3036
    %v3039 = vmul.f32 %v3023, %v3037
    %v3040 = vmul.f32 %v3024, %v3038
    %v3042 = vlaneseq
    %v3043 = vshrl.u32 %v3042, 7
    %v3044 = vsub.s32 0, %v3043
    %v3045 = vrot.slane %v2445, %v3044
    %v3047 = vmul.f32 %v3039, %v3045
    %v3048 = vmul.f32 %v3040, %v3045
    %v3050 = vlaneseq
    %v3051 = vshrl.u32 %v3050, 7
    %v3052 = vsub.s32 0, %v3051
    %v3053 = vrot.slane %v2447, %v3052
    %v3055 = vadd.f32 %v3047, %v3053
    %v3056 = vadd.f32 %v3048, %v3053
    %v3057 = vpack.c.bf16 %v3056, %v3055
    %v3058 = vld [vmem:[%s69] sm:$0xf]
    %v3059 = vld [vmem:[%s69 + $0x4] sm:$0xf]
    %v3060 = vld [vmem:[%s69 + $0x8] sm:$0xf]
    %v3061 = vld [vmem:[%s69 + $0xc] sm:$0xf]
    %v3062 = vld [vmem:[%s71] sm:$0x1]
    %v3064 = vlaneseq
    %v3065 = vshrl.u32 %v3064, 7
    %v3066 = vsub.s32 0, %v3065
    %v3067 = vrot.slane %v3062, %v3066
    %v3073 = vunpack.c.l.b16 %v3058
    %v3074 = vunpack.c.l.b16 %v3059
    %v3075 = vunpack.c.l.b16 %v3060
    %v3076 = vunpack.c.l.b16 %v3061
    %v3077 = vpack.c.b16 %v3074, %v3073
    %v3078 = vpack.c.b16 %v3076, %v3075
    %v3082 = vsel %vm323, %v3057, 0
    %3084 = vmatprep.subr.bf16.mxu0 0
    %3085 = vmatpush1.bf16.msra.mxu0 %v3077
    %3086 = vmatprep.subr.bf16.mxu0 0
    %3087 = vmatpush1.bf16.msra.mxu0 %v3078
    %3088 = vmatprep.subr.bf16.mxu0 0
    %3089 = vmatpush1.bf16.msra.mxu0 0
    %3090 = vmatprep.subr.bf16.mxu0 0
    %3091 = vmatpush1.bf16.msra.mxu0 0
    %3092 = vmatprep.subr.bf16.mxu0 0
    %3093 = vmatpush1.bf16.msra.mxu0 0
    %3094 = vmatprep.subr.bf16.mxu0 0
    %3095 = vmatpush1.bf16.msra.mxu0 0
    %3096 = vmatprep.subr.bf16.mxu0 0
    %3097 = vmatpush1.bf16.msra.mxu0 0
    %3098 = vmatprep.subr.bf16.mxu0 0
    %3099 = vmatpush1.bf16.msra.mxu0 0
    %3100 = vmatprep.subr.bf16.mxu0 0
    %3101 = vmatpush1.bf16.msra.mxu0 0
    %3102 = vmatprep.subr.bf16.mxu0 0
    %3103 = vmatpush1.bf16.msra.mxu0 0
    %3104 = vmatprep.subr.bf16.mxu0 0
    %3105 = vmatpush1.bf16.msra.mxu0 0
    %3106 = vmatprep.subr.bf16.mxu0 0
    %3107 = vmatpush1.bf16.msra.mxu0 0
    %3108 = vmatprep.subr.bf16.mxu0 0
    %3109 = vmatpush1.bf16.msra.mxu0 0
    %3110 = vmatprep.subr.bf16.mxu0 0
    %3111 = vmatpush1.bf16.msra.mxu0 0
    %3112 = vmatprep.subr.bf16.mxu0 0
    %3113 = vmatpush1.bf16.msra.mxu0 0
    %3114 = vmatprep.subr.bf16.mxu0 0
    %3115 = vmatpush1.bf16.msra.mxu0 0
    %3116 = vmatprep.mubr.bf16.mxu0 0
    %3117 = vmatmul.mubr.bf16.gmra.mrb[0].mxu0 %v3082
    %v3118 = vpop.f32.mrb[0].mxu0
    %v3119 = vadd.f32 %v3067, %v3118
    %v3120 = vpop.f32.mrb[0].mxu0
    %v3121 = vpop.f32.mrb[0].mxu0
    %v3122 = vadd.f32 %v3067, %v3121
    %v3123 = vpop.f32.mrb[0].mxu0
    %3124 = vdwg.mxu0
    %3125 = vst.msk [vmem:[#allocation2] sm:$0xff] %vm190, %v3119
    %3126 = vst.msk [vmem:[#allocation2 + $0x8] sm:$0xff] %vm190, %v3122
    // Predicated region
    $region146: #{csi_autoencoder_forward.1} parent=1 // pred_check
      _
    $region147: #{csi_autoencoder_forward.1} parent=1 // pred_check_branch
      %3128 = sbr.rel (0) target = $region149
    $region148: #{csi_autoencoder_forward.1} parent=1 // pred_region
      %s3130 = ssub.s32 256, 256
      %3131 = vsyncadd [#allocation3], %s3130
      %s3132 = sshll.u32 [#allocation2], 4
      %s3133 = int_to_ptr.vmem [resolvable:$true] %s3132
      %3138 = dma.vmem_to_hbm [thread:$0]  %s3133, 256, %s73, [#allocation3], 128, 128, 8
    $region149: #{csi_autoencoder_forward.1} parent=1 // pred_fallthru
      _
    // Predicated region
    $region150: #{csi_autoencoder_forward.1} parent=1 // pred_check
      _
    $region151: #{csi_autoencoder_forward.1} parent=1 // pred_check_branch
      %3140 = sbr.rel (0) target = $region153
    $region152: #{csi_autoencoder_forward.1} parent=1 // pred_region
      %3141 = dma.done [#allocation3], 256
    $region153: #{csi_autoencoder_forward.1} parent=1 // pred_fallthru
      _
    %3142 = vsyncpa [#allocation3], 1

</llo_original>
